<compile_context>
chip_gen: v6e
topology: v6e:2x2x1
jax: 0.10.0
libtpu: 0.0.40
codegen_flags: <defaults>
</compile_context>

<pallas_src>
import functools
import math

import jax
import jax.numpy as jnp
from jax.experimental import pallas as pl
from jax.experimental.pallas import tpu as pltpu


UP_KSIZE = 16
UP_STRIDE = 8
UP_PAD = 4

_VMEM_LIMIT = 32 * 1024 * 1024  # safe on v5e/v6e and within v7x's 64 MiB


# ---------------------------------------------------------------------------
# Pallas kernels
# ---------------------------------------------------------------------------

def _heads_kernel(x_ref, w_ref, b_ref, o_ref, *, fa_start):
    """All 1x1-conv heads + Softmax2d on the field-activation head.

    x: (1, Cin, t_hw) f32 (bf16 cast done in-kernel -> single f32 HBM stream)
    w: (Ctot, Cin) bf16   b: (Ctot, 1) f32
    o: (1, Ctot, t_hw) bf16  (channels in sublanes, pixels lane-dense)
    """
    x = x_ref[0].astype(jnp.bfloat16)
    acc = jnp.dot(w_ref[...], x, preferred_element_type=jnp.float32)
    acc = acc + b_ref[...]
    # Softmax2d: per pixel (lane) over the field-activation channels (sublanes).
    row = jax.lax.broadcasted_iota(jnp.int32, acc.shape, 0)
    is_fa = row >= fa_start
    m = jnp.max(jnp.where(is_fa, acc, -jnp.inf), axis=0, keepdims=True)
    e = jnp.where(is_fa, jnp.exp(acc - m), 0.0)
    den = jnp.sum(e, axis=0, keepdims=True)
    inv = pl.reciprocal(den, approx=True)          # EUP slot, essentially free
    acc = jnp.where(is_fa, e * inv, acc)
    o_ref[0] = acc.astype(o_ref.dtype)


def _up_fused_kernel(s_ref, uh_ref, uwt_ref, y_ref, r_ref, seg_ref,
                     *, classes, fields):
    """Bilinear upsample + streaming argmax/gather + log-softmax + concat.

    s:   (1, Ctot*H, W) bf16  -- conv-head output, rows = (channel, input row)
    uh:  (t_ho, H) f32        -- H-upsampling rows for this output tile
    uwt: (W, Wout) bf16       -- transposed W-upsampling matrix
    y:   (1, classes+2, t_ho, Wout) f32
    r_ref:   VMEM scratch (Ctot, H, Wout) f32  -- W-contraction, cached per image
    seg_ref: VMEM scratch (classes, t_ho, Wout) f32 -- seg spill buffer
    """
    # (1) W-contraction for ALL channels / input rows: ONE MXU matmul, computed
    #     once per image (t axis is "arbitrary" so program_id(1)==0 first).
    @pl.when(pl.program_id(1) == 0)
    def _():
        r = jnp.dot(s_ref[0], uwt_ref[...], preferred_element_type=jnp.float32)
        r_ref[...] = r.reshape(r_ref.shape)

    uh = uh_ref[...]

    def up(c):  # (t_ho, H) @ (H, Wout), f32 accumulation, tiny K
        return jnp.dot(uh, r_ref[c], preferred_element_type=jnp.float32)

    xf0 = classes
    yf0 = classes + fields
    fa0 = classes + 2 * fields

    # (2) Streaming argmax over upsampled field activations, fused with the
    #     channel gather of the x/y fields: only 3 accumulators stay live.
    best = up(fa0)
    xsel = up(xf0)
    ysel = up(yf0)
    for c in range(1, fields):
        fa = up(fa0 + c)
        take = fa > best            # strict > keeps the first max (torch.argmax)
        best = jnp.where(take, fa, best)
        xsel = jnp.where(take, up(xf0 + c), xsel)
        ysel = jnp.where(take, up(yf0 + c), ysel)

    # (3) Online logsumexp over the seg channels; each seg map goes to the
    #     small VMEM scratch so only the running (m, den) remain live.
    u = up(0)
    seg_ref[0] = u
    m = u
    den = jnp.ones_like(u)
    for c in range(1, classes):
        u = up(c)
        seg_ref[c] = u
        m_new = jnp.maximum(m, u)
        den = den * jnp.exp(m - m_new) + jnp.exp(u - m_new)
        m = m_new
    lse = m + jnp.log(den)

    # (4) concat((logsoftmax(seg_up), y_field, x_field), channel dim)
    for c in range(classes):
        y_ref[0, c] = seg_ref[c] - lse
    y_ref[0, classes] = ysel
    y_ref[0, classes + 1] = xsel


# ---------------------------------------------------------------------------
# pallas_call wrapper (full forward)
# ---------------------------------------------------------------------------

def _largest_tile(total, target, quantum):
    """Largest multiple of `quantum` that divides `total` and is <= target.
    Falls back to the full extent (always a legal block).
    TODO(synk): for very large sizes with awkward factors, switch to cdiv-based
    partial tiling instead of the full-extent fallback."""
    cand = (min(total, target) // quantum) * quantum
    while cand >= quantum:
        if total % cand == 0:
            return cand
        cand -= quantum
    return total


def drn_multifield_max_forward(x, w_all, b_all, uh, uwt, *, classes, fields):
    """x: (N, out_dim, H, W) base feature map.  Returns (N, classes+2, 8H, 8W)."""
    n, cin, h, w = x.shape
    ctot = classes + 3 * fields
    hw = h * w
    hout, wout = uh.shape[0], uwt.shape[1]

    # ---- Kernel 1: fused 1x1-conv heads: seg | x_field | y_field | softmax(fa)
    x3 = x.reshape(n, cin, hw)                     # free reshape, stays f32 NCHW
    t_hw = _largest_tile(hw, 2048, 128)
    s = pl.pallas_call(
        functools.partial(_heads_kernel, fa_start=classes + 2 * fields),
        out_shape=jax.ShapeDtypeStruct((n, ctot, hw), jnp.bfloat16),
        grid=(n, hw // t_hw),
        in_specs=[
            pl.BlockSpec((1, cin, t_hw), lambda i, j: (i, 0, j)),
            pl.BlockSpec((ctot, cin), lambda i, j: (0, 0)),
            pl.BlockSpec((ctot, 1), lambda i, j: (0, 0)),
        ],
        out_specs=pl.BlockSpec((1, ctot, t_hw), lambda i, j: (i, 0, j)),
        compiler_params=pltpu.CompilerParams(
            dimension_semantics=("parallel", "parallel"),
            vmem_limit_bytes=_VMEM_LIMIT),
    )(x3, w_all.astype(jnp.bfloat16), b_all.reshape(ctot, 1).astype(jnp.float32))

    # ---- Kernel 2: depthwise bilinear upsample + argmax/gather + logsoftmax + cat
    s_rows = s.reshape(n, ctot * h, w)             # free dim-merge, no transpose
    t_ho = _largest_tile(hout, 128, 8)
    y = pl.pallas_call(
        functools.partial(_up_fused_kernel, classes=classes, fields=fields),
        out_shape=jax.ShapeDtypeStruct((n, classes + 2, hout, wout), jnp.float32),
        grid=(n, hout // t_ho),
        in_specs=[
            pl.BlockSpec((1, ctot * h, w), lambda i, t: (i, 0, 0)),
            pl.BlockSpec((t_ho, h), lambda i, t: (t, 0)),
            pl.BlockSpec((w, wout), lambda i, t: (0, 0)),
        ],
        out_specs=pl.BlockSpec((1, classes + 2, t_ho, wout),
                               lambda i, t: (i, 0, t, 0)),
        scratch_shapes=[
            pltpu.VMEM((ctot, h, wout), jnp.float32),        # cached r per image
            pltpu.VMEM((classes, t_ho, wout), jnp.float32),  # seg spill buffer
        ],
        compiler_params=pltpu.CompilerParams(
            # t axis must be "arbitrary" for the per-image cached-r scratch;
            # batch stays "parallel" so both v7x TensorCores get work.
            dimension_semantics=("parallel", "arbitrary"),
            vmem_limit_bytes=_VMEM_LIMIT),
    )(s_rows, uh.astype(jnp.float32), uwt.astype(jnp.bfloat16))
    return y


# ---------------------------------------------------------------------------
# Parameter / constant construction (matches DRNMultifieldMax.__init__)
# ---------------------------------------------------------------------------

def bilinear_1d():
    # fill_up_weights: separable bilinear kernel, w[i, j] = w1d[i] * w1d[j].
    f = math.ceil(UP_KSIZE / 2)
    c = (2 * f - 1 - f % 2) / (2.0 * f)
    return jnp.array([1.0 - abs(i / f - c) for i in range(UP_KSIZE)], jnp.float32)


def make_up_matrix(w1d, size_in):
    # ConvTranspose2d: out[o] += in[i] * k[o + pad - stride*i]  (if in range)
    size_out = (size_in - 1) * UP_STRIDE - 2 * UP_PAD + UP_KSIZE
    o = jnp.arange(size_out)[:, None]
    i = jnp.arange(size_in)[None, :]
    k = o + UP_PAD - UP_STRIDE * i
    valid = (k >= 0) & (k < UP_KSIZE)
    return jnp.where(valid, w1d[jnp.clip(k, 0, UP_KSIZE - 1)], 0.0).astype(jnp.float32)


def make_seg_params(key, cin, classes):
    # m.weight.data.normal_(0, sqrt(2 / (kH*kW*out_channels))), bias zeroed.
    std = math.sqrt(2.0 / (1 * 1 * classes))
    w = jax.random.normal(key, (classes, cin), jnp.float32) * std
    b = jnp.zeros((classes,), jnp.float32)
    return w, b


def make_head_params(key, cin, cout):
    # Deterministic stand-in for PyTorch's default Conv2d init.
    kw, kb = jax.random.split(key)
    bound = 1.0 / math.sqrt(cin)
    w = jax.random.uniform(kw, (cout, cin), jnp.float32, minval=-bound, maxval=bound)
    b = jax.random.uniform(kb, (cout,), jnp.float32, minval=-bound, maxval=bound)
    return w, b


# ---------------------------------------------------------------------------
# main
# ---------------------------------------------------------------------------

if __name__ == "__main__":
    key = jax.random.PRNGKey(0)
    kx, ks, kxf, kyf, kfa = jax.random.split(key, 5)

    N, OUT_DIM, H, W = 2, 32, 16, 16   # small stand-in for model.out_dim features
    CLASSES, FIELDS = 4, 4

    # `self.base` treated as identity: x is the backbone feature map.
    x = jax.random.normal(kx, (N, OUT_DIM, H, W), jnp.float32)

    seg_w, seg_b = make_seg_params(ks, OUT_DIM, CLASSES)
    xf_w, xf_b = make_head_params(kxf, OUT_DIM, FIELDS)
    yf_w, yf_b = make_head_params(kyf, OUT_DIM, FIELDS)
    fa_w, fa_b = make_head_params(kfa, OUT_DIM, FIELDS)

    # Stack every 1x1-conv head: [seg | x_field | y_field | field_activation]
    w_all = jnp.concatenate([seg_w, xf_w, yf_w, fa_w], axis=0)   # (Ctot, Cin)
    b_all = jnp.concatenate([seg_b, xf_b, yf_b, fa_b], axis=0)   # (Ctot,)

    w1d = bilinear_1d()
    uh = make_up_matrix(w1d, H)          # (8H, H)
    uwt = make_up_matrix(w1d, W).T       # (W, 8W)

    fwd = jax.jit(drn_multifield_max_forward, static_argnames=("classes", "fields"))
    y = fwd(x, w_all, b_all, uh, uwt, classes=CLASSES, fields=FIELDS)
    y = jax.block_until_ready(y)

    HOUT, WOUT = 8 * H, 8 * W
    assert y.shape == (N, CLASSES + 2, HOUT, WOUT)
    assert bool(jnp.isfinite(y).all())
    # sanity: the log-softmax channels sum to 1 in probability space
    probsum = jnp.exp(y[:, :CLASSES]).sum(axis=1)
    assert jnp.allclose(probsum, 1.0, atol=1e-3), "log-softmax check failed"

    print("KERNEL_OK")
</pallas_src>

<mosaic_0001>
module attributes {stable_mosaic.version = 11 : i64} {
  func.func @_heads_kernel(%arg0: i32, %arg1: i32, %arg2: memref<1x32x256xf32, #tpu.memory_space<vmem>>, %arg3: memref<16x32xbf16, #tpu.memory_space<vmem>>, %arg4: memref<16x1xf32, #tpu.memory_space<vmem>>, %arg5: memref<1x16x256xbf16, #tpu.memory_space<vmem>>) attributes {dimension_semantics = [#tpu.dimension_semantics<parallel>, #tpu.dimension_semantics<parallel>], iteration_bounds = array<i64: 2, 1>, scalar_prefetch = 0 : i64, scratch_operands = 0 : i64, tpu.core_type = #tpu.core_type<tc>, window_params = [{transform_indices = @transform_0, window_bounds = array<i64: 1, 32, 256>}, {pipeline_mode = #tpu.pipeline_mode<synchronous>, transform_indices = @transform_1, window_bounds = array<i64: 16, 32>}, {pipeline_mode = #tpu.pipeline_mode<synchronous>, transform_indices = @transform_2, window_bounds = array<i64: 16, 1>}, {transform_indices = @transform_3, window_bounds = array<i64: 1, 16, 256>}]} {
    %c0 = arith.constant 0 : index
    %c0_0 = arith.constant 0 : index
    %c0_1 = arith.constant 0 : index
    %0 = vector.load %arg2[%c0, %c0_0, %c0_1] : memref<1x32x256xf32, #tpu.memory_space<vmem>>, vector<1x32x256xf32>
    %1 = vector.shape_cast %0 : vector<1x32x256xf32> to vector<32x256xf32>
    %2 = arith.truncf %1 : vector<32x256xf32> to vector<32x256xbf16>
    %c0_2 = arith.constant 0 : index
    %c0_3 = arith.constant 0 : index
    %3 = vector.load %arg3[%c0_2, %c0_3] : memref<16x32xbf16, #tpu.memory_space<vmem>>, vector<16x32xbf16>
    %cst = arith.constant dense<0.000000e+00> : vector<16x256xf32>
    %4 = tpu.matmul %3, %2, %cst {dimension_numbers = #tpu.dot_dimension_numbers<[1], [0], [0], [1], [0, 0, 1, 1], [], []>} : vector<16x32xbf16>, vector<32x256xbf16>, vector<16x256xf32> -> vector<16x256xf32>
    %c0_4 = arith.constant 0 : index
    %c0_5 = arith.constant 0 : index
    %5 = vector.load %arg4[%c0_4, %c0_5] : memref<16x1xf32, #tpu.memory_space<vmem>>, vector<16x1xf32>
    %6 = vector.broadcast %5 : vector<16x1xf32> to vector<16x256xf32>
    %7 = arith.addf %4, %6 : vector<16x256xf32>
    %8 = tpu.iota {dimensions = array<i32: 0>} : vector<16x256xi32>
    %c12_i32 = arith.constant 12 : i32
    %9 = vector.broadcast %c12_i32 : i32 to vector<16x256xi32>
    %10 = arith.cmpi sge, %8, %9 : vector<16x256xi32>
    %cst_6 = arith.constant 0xFF800000 : f32
    %11 = vector.broadcast %cst_6 : f32 to vector<16x256xf32>
    %12 = arith.select %10, %7, %11 : vector<16x256xi1>, vector<16x256xf32>
    %cst_7 = arith.constant dense<0xFF800000> : vector<256xf32>
    %13 = vector.multi_reduction <maximumf>, %12, %cst_7 [0] : vector<16x256xf32> to vector<256xf32>
    %14 = vector.shape_cast %13 : vector<256xf32> to vector<1x256xf32>
    %15 = vector.broadcast %14 : vector<1x256xf32> to vector<16x256xf32>
    %16 = arith.subf %7, %15 : vector<16x256xf32>
    %17 = math.exp %16 : vector<16x256xf32>
    %cst_8 = arith.constant 0.000000e+00 : f32
    %18 = vector.broadcast %cst_8 : f32 to vector<16x256xf32>
    %19 = arith.select %10, %17, %18 : vector<16x256xi1>, vector<16x256xf32>
    %cst_9 = arith.constant dense<0.000000e+00> : vector<256xf32>
    %20 = vector.multi_reduction <add>, %19, %cst_9 [0] : vector<16x256xf32> to vector<256xf32>
    %21 = vector.shape_cast %20 : vector<256xf32> to vector<1x256xf32>
    %22 = tpu.reciprocal %21 {approx = true} : vector<1x256xf32> -> vector<1x256xf32>
    %23 = vector.broadcast %22 : vector<1x256xf32> to vector<16x256xf32>
    %24 = arith.mulf %19, %23 : vector<16x256xf32>
    %25 = arith.select %10, %24, %7 : vector<16x256xi1>, vector<16x256xf32>
    %26 = arith.truncf %25 : vector<16x256xf32> to vector<16x256xbf16>
    %c0_10 = arith.constant 0 : index
    %c0_11 = arith.constant 0 : index
    %c0_12 = arith.constant 0 : index
    %27 = vector.load %arg5[%c0_10, %c0_11, %c0_12] : memref<1x16x256xbf16, #tpu.memory_space<vmem>>, vector<1x16x256xbf16>
    %28 = vector.shape_cast %27 : vector<1x16x256xbf16> to vector<16x256xbf16>
    %29 = vector.shape_cast %26 : vector<16x256xbf16> to vector<1x16x256xbf16>
    tpu.vector_store %arg5[%c0_10, %c0_11, %c0_12], %29 {strides = array<i32>} : memref<1x16x256xbf16, #tpu.memory_space<vmem>>, vector<1x16x256xbf16>,
    return
  }
  func.func @transform_0(%arg0: i32, %arg1: i32) -> (i32, i32, i32) {
    %c0_i32 = arith.constant 0 : i32
    %c0_i32_0 = arith.constant 0 : i32
    return %arg0, %c0_i32, %arg1 : i32, i32, i32
  }
  func.func @transform_1(%arg0: i32, %arg1: i32) -> (i32, i32) {
    %c0_i32 = arith.constant 0 : i32
    %c0_i32_0 = arith.constant 0 : i32
    %c0_i32_1 = arith.constant 0 : i32
    return %c0_i32, %c0_i32_0 : i32, i32
  }
  func.func @transform_2(%arg0: i32, %arg1: i32) -> (i32, i32) {
    %c0_i32 = arith.constant 0 : i32
    %c0_i32_0 = arith.constant 0 : i32
    %c0_i32_1 = arith.constant 0 : i32
    return %c0_i32, %c0_i32_0 : i32, i32
  }
  func.func @transform_3(%arg0: i32, %arg1: i32) -> (i32, i32, i32) {
    %c0_i32 = arith.constant 0 : i32
    %c0_i32_0 = arith.constant 0 : i32
    return %arg0, %c0_i32, %arg1 : i32, i32, i32
  }
}

module attributes {stable_mosaic.version = 11 : i64} {
  func.func @_up_fused_kernel(%arg0: i32, %arg1: i32, %arg2: memref<1x256x16xbf16, #tpu.memory_space<vmem>>, %arg3: memref<128x16xf32, #tpu.memory_space<vmem>>, %arg4: memref<16x128xbf16, #tpu.memory_space<vmem>>, %arg5: memref<1x6x128x128xf32, #tpu.memory_space<vmem>>, %arg6: memref<16x16x128xf32, #tpu.memory_space<vmem>>, %arg7: memref<4x128x128xf32, #tpu.memory_space<vmem>>) attributes {dimension_semantics = [#tpu.dimension_semantics<parallel>, #tpu.dimension_semantics<arbitrary>], iteration_bounds = array<i64: 2, 1>, scalar_prefetch = 0 : i64, scratch_operands = 2 : i64, tpu.core_type = #tpu.core_type<tc>, window_params = [{transform_indices = @transform_0, window_bounds = array<i64: 1, 256, 16>}, {transform_indices = @transform_1, window_bounds = array<i64: 128, 16>}, {pipeline_mode = #tpu.pipeline_mode<synchronous>, transform_indices = @transform_2, window_bounds = array<i64: 16, 128>}, {transform_indices = @transform_3, window_bounds = array<i64: 1, 6, 128, 128>}]} {
    %c0_i32 = arith.constant 0 : i32
    %0 = arith.cmpi eq, %arg1, %c0_i32 : i32
    %1 = arith.extui %0 : i1 to i32
    %c0_i32_0 = arith.constant 0 : i32
    %2 = arith.cmpi ne, %1, %c0_i32_0 : i32
    scf.if %2 {
      %c0_99 = arith.constant 0 : index
      %c0_100 = arith.constant 0 : index
      %c0_101 = arith.constant 0 : index
      %129 = vector.load %arg2[%c0_99, %c0_100, %c0_101] : memref<1x256x16xbf16, #tpu.memory_space<vmem>>, vector<1x256x16xbf16>
      %130 = vector.shape_cast %129 : vector<1x256x16xbf16> to vector<256x16xbf16>
      %c0_102 = arith.constant 0 : index
      %c0_103 = arith.constant 0 : index
      %131 = vector.load %arg4[%c0_102, %c0_103] : memref<16x128xbf16, #tpu.memory_space<vmem>>, vector<16x128xbf16>
      %cst_104 = arith.constant dense<0.000000e+00> : vector<256x128xf32>
      %132 = tpu.matmul %130, %131, %cst_104 {dimension_numbers = #tpu.dot_dimension_numbers<[1], [0], [0], [1], [0, 0, 1, 1], [], []>} : vector<256x16xbf16>, vector<16x128xbf16>, vector<256x128xf32> -> vector<256x128xf32>
      %133 = vector.shape_cast %132 : vector<256x128xf32> to vector<16x16x128xf32>
      %c0_105 = arith.constant 0 : index
      %c0_106 = arith.constant 0 : index
      %c0_107 = arith.constant 0 : index
      %134 = vector.load %arg6[%c0_105, %c0_106, %c0_107] : memref<16x16x128xf32, #tpu.memory_space<vmem>>, vector<16x16x128xf32>
      tpu.vector_store %arg6[%c0_105, %c0_106, %c0_107], %133 {strides = array<i32>} : memref<16x16x128xf32, #tpu.memory_space<vmem>>, vector<16x16x128xf32>,
    } else {
    }
    %c0 = arith.constant 0 : index
    %c0_1 = arith.constant 0 : index
    %3 = vector.load %arg3[%c0, %c0_1] : memref<128x16xf32, #tpu.memory_space<vmem>>, vector<128x16xf32>
    %c12 = arith.constant 12 : index
    %c0_2 = arith.constant 0 : index
    %c0_3 = arith.constant 0 : index
    %4 = vector.load %arg6[%c12, %c0_2, %c0_3] : memref<16x16x128xf32, #tpu.memory_space<vmem>>, vector<1x16x128xf32>
    %5 = vector.shape_cast %4 : vector<1x16x128xf32> to vector<16x128xf32>
    %cst = arith.constant dense<0.000000e+00> : vector<128x128xf32>
    %6 = tpu.matmul %3, %5, %cst {dimension_numbers = #tpu.dot_dimension_numbers<[1], [0], [0], [1], [0, 0, 1, 1], [], []>} : vector<128x16xf32>, vector<16x128xf32>, vector<128x128xf32> -> vector<128x128xf32>
    %c4 = arith.constant 4 : index
    %c0_4 = arith.constant 0 : index
    %c0_5 = arith.constant 0 : index
    %7 = vector.load %arg6[%c4, %c0_4, %c0_5] : memref<16x16x128xf32, #tpu.memory_space<vmem>>, vector<1x16x128xf32>
    %8 = vector.shape_cast %7 : vector<1x16x128xf32> to vector<16x128xf32>
    %cst_6 = arith.constant dense<0.000000e+00> : vector<128x128xf32>
    %9 = tpu.matmul %3, %8, %cst_6 {dimension_numbers = #tpu.dot_dimension_numbers<[1], [0], [0], [1], [0, 0, 1, 1], [], []>} : vector<128x16xf32>, vector<16x128xf32>, vector<128x128xf32> -> vector<128x128xf32>
    %c8 = arith.constant 8 : index
    %c0_7 = arith.constant 0 : index
    %c0_8 = arith.constant 0 : index
    %10 = vector.load %arg6[%c8, %c0_7, %c0_8] : memref<16x16x128xf32, #tpu.memory_space<vmem>>, vector<1x16x128xf32>
    %11 = vector.shape_cast %10 : vector<1x16x128xf32> to vector<16x128xf32>
    %cst_9 = arith.constant dense<0.000000e+00> : vector<128x128xf32>
    %12 = tpu.matmul %3, %11, %cst_9 {dimension_numbers = #tpu.dot_dimension_numbers<[1], [0], [0], [1], [0, 0, 1, 1], [], []>} : vector<128x16xf32>, vector<16x128xf32>, vector<128x128xf32> -> vector<128x128xf32>
    %c13 = arith.constant 13 : index
    %c0_10 = arith.constant 0 : index
    %c0_11 = arith.constant 0 : index
    %13 = vector.load %arg6[%c13, %c0_10, %c0_11] : memref<16x16x128xf32, #tpu.memory_space<vmem>>, vector<1x16x128xf32>
    %14 = vector.shape_cast %13 : vector<1x16x128xf32> to vector<16x128xf32>
    %cst_12 = arith.constant dense<0.000000e+00> : vector<128x128xf32>
    %15 = tpu.matmul %3, %14, %cst_12 {dimension_numbers = #tpu.dot_dimension_numbers<[1], [0], [0], [1], [0, 0, 1, 1], [], []>} : vector<128x16xf32>, vector<16x128xf32>, vector<128x128xf32> -> vector<128x128xf32>
    %16 = arith.cmpf ogt, %15, %6 : vector<128x128xf32>
    %17 = arith.select %16, %15, %6 : vector<128x128xi1>, vector<128x128xf32>
    %c5 = arith.constant 5 : index
    %c0_13 = arith.constant 0 : index
    %c0_14 = arith.constant 0 : index
    %18 = vector.load %arg6[%c5, %c0_13, %c0_14] : memref<16x16x128xf32, #tpu.memory_space<vmem>>, vector<1x16x128xf32>
    %19 = vector.shape_cast %18 : vector<1x16x128xf32> to vector<16x128xf32>
    %cst_15 = arith.constant dense<0.000000e+00> : vector<128x128xf32>
    %20 = tpu.matmul %3, %19, %cst_15 {dimension_numbers = #tpu.dot_dimension_numbers<[1], [0], [0], [1], [0, 0, 1, 1], [], []>} : vector<128x16xf32>, vector<16x128xf32>, vector<128x128xf32> -> vector<128x128xf32>
    %21 = arith.select %16, %20, %9 : vector<128x128xi1>, vector<128x128xf32>
    %c9 = arith.constant 9 : index
    %c0_16 = arith.constant 0 : index
    %c0_17 = arith.constant 0 : index
    %22 = vector.load %arg6[%c9, %c0_16, %c0_17] : memref<16x16x128xf32, #tpu.memory_space<vmem>>, vector<1x16x128xf32>
    %23 = vector.shape_cast %22 : vector<1x16x128xf32> to vector<16x128xf32>
    %cst_18 = arith.constant dense<0.000000e+00> : vector<128x128xf32>
    %24 = tpu.matmul %3, %23, %cst_18 {dimension_numbers = #tpu.dot_dimension_numbers<[1], [0], [0], [1], [0, 0, 1, 1], [], []>} : vector<128x16xf32>, vector<16x128xf32>, vector<128x128xf32> -> vector<128x128xf32>
    %25 = arith.select %16, %24, %12 : vector<128x128xi1>, vector<128x128xf32>
    %c14 = arith.constant 14 : index
    %c0_19 = arith.constant 0 : index
    %c0_20 = arith.constant 0 : index
    %26 = vector.load %arg6[%c14, %c0_19, %c0_20] : memref<16x16x128xf32, #tpu.memory_space<vmem>>, vector<1x16x128xf32>
    %27 = vector.shape_cast %26 : vector<1x16x128xf32> to vector<16x128xf32>
    %cst_21 = arith.constant dense<0.000000e+00> : vector<128x128xf32>
    %28 = tpu.matmul %3, %27, %cst_21 {dimension_numbers = #tpu.dot_dimension_numbers<[1], [0], [0], [1], [0, 0, 1, 1], [], []>} : vector<128x16xf32>, vector<16x128xf32>, vector<128x128xf32> -> vector<128x128xf32>
    %29 = arith.cmpf ogt, %28, %17 : vector<128x128xf32>
    %30 = arith.select %29, %28, %17 : vector<128x128xi1>, vector<128x128xf32>
    %c6 = arith.constant 6 : index
    %c0_22 = arith.constant 0 : index
    %c0_23 = arith.constant 0 : index
    %31 = vector.load %arg6[%c6, %c0_22, %c0_23] : memref<16x16x128xf32, #tpu.memory_space<vmem>>, vector<1x16x128xf32>
    %32 = vector.shape_cast %31 : vector<1x16x128xf32> to vector<16x128xf32>
    %cst_24 = arith.constant dense<0.000000e+00> : vector<128x128xf32>
    %33 = tpu.matmul %3, %32, %cst_24 {dimension_numbers = #tpu.dot_dimension_numbers<[1], [0], [0], [1], [0, 0, 1, 1], [], []>} : vector<128x16xf32>, vector<16x128xf32>, vector<128x128xf32> -> vector<128x128xf32>
    %34 = arith.select %29, %33, %21 : vector<128x128xi1>, vector<128x128xf32>
    %c10 = arith.constant 10 : index
    %c0_25 = arith.constant 0 : index
    %c0_26 = arith.constant 0 : index
    %35 = vector.load %arg6[%c10, %c0_25, %c0_26] : memref<16x16x128xf32, #tpu.memory_space<vmem>>, vector<1x16x128xf32>
    %36 = vector.shape_cast %35 : vector<1x16x128xf32> to vector<16x128xf32>
    %cst_27 = arith.constant dense<0.000000e+00> : vector<128x128xf32>
    %37 = tpu.matmul %3, %36, %cst_27 {dimension_numbers = #tpu.dot_dimension_numbers<[1], [0], [0], [1], [0, 0, 1, 1], [], []>} : vector<128x16xf32>, vector<16x128xf32>, vector<128x128xf32> -> vector<128x128xf32>
    %38 = arith.select %29, %37, %25 : vector<128x128xi1>, vector<128x128xf32>
    %c15 = arith.constant 15 : index
    %c0_28 = arith.constant 0 : index
    %c0_29 = arith.constant 0 : index
    %39 = vector.load %arg6[%c15, %c0_28, %c0_29] : memref<16x16x128xf32, #tpu.memory_space<vmem>>, vector<1x16x128xf32>
    %40 = vector.shape_cast %39 : vector<1x16x128xf32> to vector<16x128xf32>
    %cst_30 = arith.constant dense<0.000000e+00> : vector<128x128xf32>
    %41 = tpu.matmul %3, %40, %cst_30 {dimension_numbers = #tpu.dot_dimension_numbers<[1], [0], [0], [1], [0, 0, 1, 1], [], []>} : vector<128x16xf32>, vector<16x128xf32>, vector<128x128xf32> -> vector<128x128xf32>
    %42 = arith.cmpf ogt, %41, %30 : vector<128x128xf32>
    %c7 = arith.constant 7 : index
    %c0_31 = arith.constant 0 : index
    %c0_32 = arith.constant 0 : index
    %43 = vector.load %arg6[%c7, %c0_31, %c0_32] : memref<16x16x128xf32, #tpu.memory_space<vmem>>, vector<1x16x128xf32>
    %44 = vector.shape_cast %43 : vector<1x16x128xf32> to vector<16x128xf32>
    %cst_33 = arith.constant dense<0.000000e+00> : vector<128x128xf32>
    %45 = tpu.matmul %3, %44, %cst_33 {dimension_numbers = #tpu.dot_dimension_numbers<[1], [0], [0], [1], [0, 0, 1, 1], [], []>} : vector<128x16xf32>, vector<16x128xf32>, vector<128x128xf32> -> vector<128x128xf32>
    %46 = arith.select %42, %45, %34 : vector<128x128xi1>, vector<128x128xf32>
    %c11 = arith.constant 11 : index
    %c0_34 = arith.constant 0 : index
    %c0_35 = arith.constant 0 : index
    %47 = vector.load %arg6[%c11, %c0_34, %c0_35] : memref<16x16x128xf32, #tpu.memory_space<vmem>>, vector<1x16x128xf32>
    %48 = vector.shape_cast %47 : vector<1x16x128xf32> to vector<16x128xf32>
    %cst_36 = arith.constant dense<0.000000e+00> : vector<128x128xf32>
    %49 = tpu.matmul %3, %48, %cst_36 {dimension_numbers = #tpu.dot_dimension_numbers<[1], [0], [0], [1], [0, 0, 1, 1], [], []>} : vector<128x16xf32>, vector<16x128xf32>, vector<128x128xf32> -> vector<128x128xf32>
    %50 = arith.select %42, %49, %38 : vector<128x128xi1>, vector<128x128xf32>
    %c0_37 = arith.constant 0 : index
    %c0_38 = arith.constant 0 : index
    %c0_39 = arith.constant 0 : index
    %51 = vector.load %arg6[%c0_37, %c0_38, %c0_39] : memref<16x16x128xf32, #tpu.memory_space<vmem>>, vector<1x16x128xf32>
    %52 = vector.shape_cast %51 : vector<1x16x128xf32> to vector<16x128xf32>
    %cst_40 = arith.constant dense<0.000000e+00> : vector<128x128xf32>
    %53 = tpu.matmul %3, %52, %cst_40 {dimension_numbers = #tpu.dot_dimension_numbers<[1], [0], [0], [1], [0, 0, 1, 1], [], []>} : vector<128x16xf32>, vector<16x128xf32>, vector<128x128xf32> -> vector<128x128xf32>
    %c0_41 = arith.constant 0 : index
    %c0_42 = arith.constant 0 : index
    %c0_43 = arith.constant 0 : index
    %54 = vector.load %arg7[%c0_41, %c0_42, %c0_43] : memref<4x128x128xf32, #tpu.memory_space<vmem>>, vector<1x128x128xf32>
    %55 = vector.shape_cast %54 : vector<1x128x128xf32> to vector<128x128xf32>
    %56 = vector.shape_cast %53 : vector<128x128xf32> to vector<1x128x128xf32>
    tpu.vector_store %arg7[%c0_41, %c0_42, %c0_43], %56 {strides = array<i32>} : memref<4x128x128xf32, #tpu.memory_space<vmem>>, vector<1x128x128xf32>,
    %cst_44 = arith.constant 1.000000e+00 : f32
    %57 = vector.broadcast %cst_44 : f32 to vector<128x128xf32>
    %c1 = arith.constant 1 : index
    %c0_45 = arith.constant 0 : index
    %c0_46 = arith.constant 0 : index
    %58 = vector.load %arg6[%c1, %c0_45, %c0_46] : memref<16x16x128xf32, #tpu.memory_space<vmem>>, vector<1x16x128xf32>
    %59 = vector.shape_cast %58 : vector<1x16x128xf32> to vector<16x128xf32>
    %cst_47 = arith.constant dense<0.000000e+00> : vector<128x128xf32>
    %60 = tpu.matmul %3, %59, %cst_47 {dimension_numbers = #tpu.dot_dimension_numbers<[1], [0], [0], [1], [0, 0, 1, 1], [], []>} : vector<128x16xf32>, vector<16x128xf32>, vector<128x128xf32> -> vector<128x128xf32>
    %c1_48 = arith.constant 1 : index
    %c0_49 = arith.constant 0 : index
    %c0_50 = arith.constant 0 : index
    %61 = vector.load %arg7[%c1_48, %c0_49, %c0_50] : memref<4x128x128xf32, #tpu.memory_space<vmem>>, vector<1x128x128xf32>
    %62 = vector.shape_cast %61 : vector<1x128x128xf32> to vector<128x128xf32>
    %63 = vector.shape_cast %60 : vector<128x128xf32> to vector<1x128x128xf32>
    tpu.vector_store %arg7[%c1_48, %c0_49, %c0_50], %63 {strides = array<i32>} : memref<4x128x128xf32, #tpu.memory_space<vmem>>, vector<1x128x128xf32>,
    %64 = arith.maximumf %53, %60 : vector<128x128xf32>
    %65 = arith.subf %53, %64 : vector<128x128xf32>
    %66 = math.exp %65 : vector<128x128xf32>
    %67 = arith.mulf %57, %66 : vector<128x128xf32>
    %68 = arith.subf %60, %64 : vector<128x128xf32>
    %69 = math.exp %68 : vector<128x128xf32>
    %70 = arith.addf %67, %69 : vector<128x128xf32>
    %c2 = arith.constant 2 : index
    %c0_51 = arith.constant 0 : index
    %c0_52 = arith.constant 0 : index
    %71 = vector.load %arg6[%c2, %c0_51, %c0_52] : memref<16x16x128xf32, #tpu.memory_space<vmem>>, vector<1x16x128xf32>
    %72 = vector.shape_cast %71 : vector<1x16x128xf32> to vector<16x128xf32>
    %cst_53 = arith.constant dense<0.000000e+00> : vector<128x128xf32>
    %73 = tpu.matmul %3, %72, %cst_53 {dimension_numbers = #tpu.dot_dimension_numbers<[1], [0], [0], [1], [0, 0, 1, 1], [], []>} : vector<128x16xf32>, vector<16x128xf32>, vector<128x128xf32> -> vector<128x128xf32>
    %c2_54 = arith.constant 2 : index
    %c0_55 = arith.constant 0 : index
    %c0_56 = arith.constant 0 : index
    %74 = vector.load %arg7[%c2_54, %c0_55, %c0_56] : memref<4x128x128xf32, #tpu.memory_space<vmem>>, vector<1x128x128xf32>
    %75 = vector.shape_cast %74 : vector<1x128x128xf32> to vector<128x128xf32>
    %76 = vector.shape_cast %73 : vector<128x128xf32> to vector<1x128x128xf32>
    tpu.vector_store %arg7[%c2_54, %c0_55, %c0_56], %76 {strides = array<i32>} : memref<4x128x128xf32, #tpu.memory_space<vmem>>, vector<1x128x128xf32>,
    %77 = arith.maximumf %64, %73 : vector<128x128xf32>
    %78 = arith.subf %64, %77 : vector<128x128xf32>
    %79 = math.exp %78 : vector<128x128xf32>
    %80 = arith.mulf %70, %79 : vector<128x128xf32>
    %81 = arith.subf %73, %77 : vector<128x128xf32>
    %82 = math.exp %81 : vector<128x128xf32>
    %83 = arith.addf %80, %82 : vector<128x128xf32>
    %c3 = arith.constant 3 : index
    %c0_57 = arith.constant 0 : index
    %c0_58 = arith.constant 0 : index
    %84 = vector.load %arg6[%c3, %c0_57, %c0_58] : memref<16x16x128xf32, #tpu.memory_space<vmem>>, vector<1x16x128xf32>
    %85 = vector.shape_cast %84 : vector<1x16x128xf32> to vector<16x128xf32>
    %cst_59 = arith.constant dense<0.000000e+00> : vector<128x128xf32>
    %86 = tpu.matmul %3, %85, %cst_59 {dimension_numbers = #tpu.dot_dimension_numbers<[1], [0], [0], [1], [0, 0, 1, 1], [], []>} : vector<128x16xf32>, vector<16x128xf32>, vector<128x128xf32> -> vector<128x128xf32>
    %c3_60 = arith.constant 3 : index
    %c0_61 = arith.constant 0 : index
    %c0_62 = arith.constant 0 : index
    %87 = vector.load %arg7[%c3_60, %c0_61, %c0_62] : memref<4x128x128xf32, #tpu.memory_space<vmem>>, vector<1x128x128xf32>
    %88 = vector.shape_cast %87 : vector<1x128x128xf32> to vector<128x128xf32>
    %89 = vector.shape_cast %86 : vector<128x128xf32> to vector<1x128x128xf32>
    tpu.vector_store %arg7[%c3_60, %c0_61, %c0_62], %89 {strides = array<i32>} : memref<4x128x128xf32, #tpu.memory_space<vmem>>, vector<1x128x128xf32>,
    %90 = arith.maximumf %77, %86 : vector<128x128xf32>
    %91 = arith.subf %77, %90 : vector<128x128xf32>
    %92 = math.exp %91 : vector<128x128xf32>
    %93 = arith.mulf %83, %92 : vector<128x128xf32>
    %94 = arith.subf %86, %90 : vector<128x128xf32>
    %95 = math.exp %94 : vector<128x128xf32>
    %96 = arith.addf %93, %95 : vector<128x128xf32>
    %97 = math.log %96 : vector<128x128xf32>
    %98 = arith.addf %90, %97 : vector<128x128xf32>
    %c0_63 = arith.constant 0 : index
    %c0_64 = arith.constant 0 : index
    %c0_65 = arith.constant 0 : index
    %99 = vector.load %arg7[%c0_63, %c0_64, %c0_65] : memref<4x128x128xf32, #tpu.memory_space<vmem>>, vector<1x128x128xf32>
    %100 = vector.shape_cast %99 : vector<1x128x128xf32> to vector<128x128xf32>
    %101 = arith.subf %100, %98 : vector<128x128xf32>
    %c0_66 = arith.constant 0 : index
    %c0_67 = arith.constant 0 : index
    %c0_68 = arith.constant 0 : index
    %c0_69 = arith.constant 0 : index
    %102 = vector.load %arg5[%c0_66, %c0_67, %c0_68, %c0_69] : memref<1x6x128x128xf32, #tpu.memory_space<vmem>>, vector<1x1x128x128xf32>
    %103 = vector.shape_cast %102 : vector<1x1x128x128xf32> to vector<128x128xf32>
    %104 = vector.shape_cast %101 : vector<128x128xf32> to vector<1x1x128x128xf32>
    tpu.vector_store %arg5[%c0_66, %c0_67, %c0_68, %c0_69], %104 {strides = array<i32>} : memref<1x6x128x128xf32, #tpu.memory_space<vmem>>, vector<1x1x128x128xf32>,
    %c1_70 = arith.constant 1 : index
    %c0_71 = arith.constant 0 : index
    %c0_72 = arith.constant 0 : index
    %105 = vector.load %arg7[%c1_70, %c0_71, %c0_72] : memref<4x128x128xf32, #tpu.memory_space<vmem>>, vector<1x128x128xf32>
    %106 = vector.shape_cast %105 : vector<1x128x128xf32> to vector<128x128xf32>
    %107 = arith.subf %106, %98 : vector<128x128xf32>
    %c0_73 = arith.constant 0 : index
    %c1_74 = arith.constant 1 : index
    %c0_75 = arith.constant 0 : index
    %c0_76 = arith.constant 0 : index
    %108 = vector.load %arg5[%c0_73, %c1_74, %c0_75, %c0_76] : memref<1x6x128x128xf32, #tpu.memory_space<vmem>>, vector<1x1x128x128xf32>
    %109 = vector.shape_cast %108 : vector<1x1x128x128xf32> to vector<128x128xf32>
    %110 = vector.shape_cast %107 : vector<128x128xf32> to vector<1x1x128x128xf32>
    tpu.vector_store %arg5[%c0_73, %c1_74, %c0_75, %c0_76], %110 {strides = array<i32>} : memref<1x6x128x128xf32, #tpu.memory_space<vmem>>, vector<1x1x128x128xf32>,
    %c2_77 = arith.constant 2 : index
    %c0_78 = arith.constant 0 : index
    %c0_79 = arith.constant 0 : index
    %111 = vector.load %arg7[%c2_77, %c0_78, %c0_79] : memref<4x128x128xf32, #tpu.memory_space<vmem>>, vector<1x128x128xf32>
    %112 = vector.shape_cast %111 : vector<1x128x128xf32> to vector<128x128xf32>
    %113 = arith.subf %112, %98 : vector<128x128xf32>
    %c0_80 = arith.constant 0 : index
    %c2_81 = arith.constant 2 : index
    %c0_82 = arith.constant 0 : index
    %c0_83 = arith.constant 0 : index
    %114 = vector.load %arg5[%c0_80, %c2_81, %c0_82, %c0_83] : memref<1x6x128x128xf32, #tpu.memory_space<vmem>>, vector<1x1x128x128xf32>
    %115 = vector.shape_cast %114 : vector<1x1x128x128xf32> to vector<128x128xf32>
    %116 = vector.shape_cast %113 : vector<128x128xf32> to vector<1x1x128x128xf32>
    tpu.vector_store %arg5[%c0_80, %c2_81, %c0_82, %c0_83], %116 {strides = array<i32>} : memref<1x6x128x128xf32, #tpu.memory_space<vmem>>, vector<1x1x128x128xf32>,
    %c3_84 = arith.constant 3 : index
    %c0_85 = arith.constant 0 : index
    %c0_86 = arith.constant 0 : index
    %117 = vector.load %arg7[%c3_84, %c0_85, %c0_86] : memref<4x128x128xf32, #tpu.memory_space<vmem>>, vector<1x128x128xf32>
    %118 = vector.shape_cast %117 : vector<1x128x128xf32> to vector<128x128xf32>
    %119 = arith.subf %118, %98 : vector<128x128xf32>
    %c0_87 = arith.constant 0 : index
    %c3_88 = arith.constant 3 : index
    %c0_89 = arith.constant 0 : index
    %c0_90 = arith.constant 0 : index
    %120 = vector.load %arg5[%c0_87, %c3_88, %c0_89, %c0_90] : memref<1x6x128x128xf32, #tpu.memory_space<vmem>>, vector<1x1x128x128xf32>
    %121 = vector.shape_cast %120 : vector<1x1x128x128xf32> to vector<128x128xf32>
    %122 = vector.shape_cast %119 : vector<128x128xf32> to vector<1x1x128x128xf32>
    tpu.vector_store %arg5[%c0_87, %c3_88, %c0_89, %c0_90], %122 {strides = array<i32>} : memref<1x6x128x128xf32, #tpu.memory_space<vmem>>, vector<1x1x128x128xf32>,
    %c0_91 = arith.constant 0 : index
    %c4_92 = arith.constant 4 : index
    %c0_93 = arith.constant 0 : index
    %c0_94 = arith.constant 0 : index
    %123 = vector.load %arg5[%c0_91, %c4_92, %c0_93, %c0_94] : memref<1x6x128x128xf32, #tpu.memory_space<vmem>>, vector<1x1x128x128xf32>
    %124 = vector.shape_cast %123 : vector<1x1x128x128xf32> to vector<128x128xf32>
    %125 = vector.shape_cast %50 : vector<128x128xf32> to vector<1x1x128x128xf32>
    tpu.vector_store %arg5[%c0_91, %c4_92, %c0_93, %c0_94], %125 {strides = array<i32>} : memref<1x6x128x128xf32, #tpu.memory_space<vmem>>, vector<1x1x128x128xf32>,
    %c0_95 = arith.constant 0 : index
    %c5_96 = arith.constant 5 : index
    %c0_97 = arith.constant 0 : index
    %c0_98 = arith.constant 0 : index
    %126 = vector.load %arg5[%c0_95, %c5_96, %c0_97, %c0_98] : memref<1x6x128x128xf32, #tpu.memory_space<vmem>>, vector<1x1x128x128xf32>
    %127 = vector.shape_cast %126 : vector<1x1x128x128xf32> to vector<128x128xf32>
    %128 = vector.shape_cast %46 : vector<128x128xf32> to vector<1x1x128x128xf32>
    tpu.vector_store %arg5[%c0_95, %c5_96, %c0_97, %c0_98], %128 {strides = array<i32>} : memref<1x6x128x128xf32, #tpu.memory_space<vmem>>, vector<1x1x128x128xf32>,
    return
  }
  func.func @transform_0(%arg0: i32, %arg1: i32) -> (i32, i32, i32) {
    %c0_i32 = arith.constant 0 : i32
    %c0_i32_0 = arith.constant 0 : i32
    %c0_i32_1 = arith.constant 0 : i32
    return %arg0, %c0_i32, %c0_i32_0 : i32, i32, i32
  }
  func.func @transform_1(%arg0: i32, %arg1: i32) -> (i32, i32) {
    %c0_i32 = arith.constant 0 : i32
    %c0_i32_0 = arith.constant 0 : i32
    return %arg1, %c0_i32 : i32, i32
  }
  func.func @transform_2(%arg0: i32, %arg1: i32) -> (i32, i32) {
    %c0_i32 = arith.constant 0 : i32
    %c0_i32_0 = arith.constant 0 : i32
    %c0_i32_1 = arith.constant 0 : i32
    return %c0_i32, %c0_i32_0 : i32, i32
  }
  func.func @transform_3(%arg0: i32, %arg1: i32) -> (i32, i32, i32, i32) {
    %c0_i32 = arith.constant 0 : i32
    %c0_i32_0 = arith.constant 0 : i32
    %c0_i32_1 = arith.constant 0 : i32
    return %arg0, %c0_i32, %arg1, %c0_i32_0 : i32, i32, i32, i32
  }
}

</mosaic_0001>

<llo_original>
// kernel: drn_multifield_max_forward.2
$region0: #{drn_multifield_max_forward.2}
  #allocation0 [shape = 'u32[]', space=smem, size = 0x4, offset = 0x4, fixed_abs, tag = 'smem constant byte address 0x4 - core index']
  #allocation1 [shape = 'u32[144,128]{1,0:T(1,128)}', space=vmem, size = 0x12000, scoped, tag = 'internal scratch']
  %s0 = inlined_call_operand.vmem [shape: f32[2,32,256], index: 0, kind: input, shape index: {}]
  %s1 = inlined_call_operand.vmem [shape: bf16[16,32], index: 1, kind: input, shape index: {}]
  %s2 = inlined_call_operand.vmem [shape: f32[16,1], index: 2, kind: input, shape index: {}]
  %s3 = inlined_call_operand.vmem [shape: bf16[2,16,256], index: 3, kind: output, shape index: {}]
  %s4 = sld [smem:[#allocation0]]
  $region45: #{drn_multifield_max_forward.2} parent=0
    _
  %s6 = ssub.s32 1, %s4
  %s7 = scalar_select 0, %s6, %s4
  loop: start=0, step=1, limit=4
  $region2: #{drn_multifield_max_forward.2} parent=0 // loop_pre_header
    _
  $region3: #{drn_multifield_max_forward.2} parent=0 // loop_header
    %s9 = sphi 0, %s13
    %p10 = scmp.ge.s32.totalorder %s9, 4
    %s16 = sphi 0, %s28
    %s17 = sphi 0, %s24
    %s18 = sphi 0, %s16
    %s19 = sphi 0, %s17
    %s20 = sphi 0, %s18
    %s21 = sphi 0, %s19
    %s33 = sphi 0, %s35
    %s36 = sphi 0, %s33
    %s37 = sphi 0, %s36
    %s53 = sphi 0, %s37
    %s57 = sphi 0, %s57
    %s59 = sphi 0, %s57
    %s60 = sphi 0, %s59
    %s74 = sphi 0, %s60
    %s78 = sphi 0, %s78
    %s80 = sphi 0, %s78
    %s81 = sphi 0, %s80
    %s95 = sphi 0, %s81
    %s103 = sphi 0, %s105
    %s106 = sphi 0, %s103
    %s107 = sphi 0, %s106
    %s123 = sphi 0, %s107
  $region4: #{drn_multifield_max_forward.2} parent=0 // loop_header_branch
    %12 = sbr.rel (%p10) target = $region8
  $region5: #{drn_multifield_max_forward.2} parent=0 // loop_body
    %s14 = ssub.s32 %s9, 1
    %s15 = ssub.s32 %s9, 2
    %s22 = sadd.s32 1, %s17
    %p23 = scmp.ge.s32.totalorder %s22, 1
    %s24 = scalar_select %p23, 0, %s22
    %s25 = sadd.s32 1, %s16
    %s26 = scalar_select %p23, %s25, %s16
    %p27 = scmp.ge.s32.totalorder %s26, 2
    %s28 = scalar_select %p27, 0, %s26
    %s29 = ssub.s32 %s16, %s28
    %s30 = ssub.s32 %s17, %s24
    %s31 = sor.u32 %s29, %s30
    %p32 = scmp.eq.s32.totalorder %s31, 0
    %s34 = sadd.s32 %s33, 1
    %s35 = scalar_select %p32, %s33, %s34
    %p38 = pneg %p32
    %p39 = scmp.eq.s32.totalorder %s9, 1
    %p40 = por %p38, %p39
    %p41 = scmp.ne.s32.totalorder %s33, %s36
    %p42 = scmp.eq.s32.totalorder %s9, 0
    %p43 = por %p41, %p42
    %p44 = scmp.ne.s32.totalorder %s33, %s36
    %p45 = scmp.eq.s32.totalorder %s14, 1
    %p46 = por %p44, %p45
    %p47 = scmp.ne.s32.totalorder %s36, %s37
    %p48 = scmp.eq.s32.totalorder %s14, 0
    %p49 = por %p47, %p48
    %p50 = scmp.ne.s32.totalorder %s36, %s37
    %p51 = scmp.eq.s32.totalorder %s15, 1
    %p52 = por %p50, %p51
    %p54 = scmp.ne.s32.totalorder %s37, %s53
    %p55 = scmp.eq.s32.totalorder %s15, 0
    %p56 = por %p54, %p55
    %s58 = sadd.s32 %s57, 1
    %p61 = scmp.eq.s32.totalorder %s9, 1
    %p62 = scmp.ne.s32.totalorder %s57, %s59
    %p63 = scmp.eq.s32.totalorder %s9, 0
    %p64 = por %p62, %p63
    %p65 = scmp.ne.s32.totalorder %s57, %s59
    %p66 = scmp.eq.s32.totalorder %s14, 1
    %p67 = por %p65, %p66
    %p68 = scmp.ne.s32.totalorder %s59, %s60
    %p69 = scmp.eq.s32.totalorder %s14, 0
    %p70 = por %p68, %p69
    %p71 = scmp.ne.s32.totalorder %s59, %s60
    %p72 = scmp.eq.s32.totalorder %s15, 1
    %p73 = por %p71, %p72
    %p75 = scmp.ne.s32.totalorder %s60, %s74
    %p76 = scmp.eq.s32.totalorder %s15, 0
    %p77 = por %p75, %p76
    %s79 = sadd.s32 %s78, 1
    %p82 = scmp.eq.s32.totalorder %s9, 1
    %p83 = scmp.ne.s32.totalorder %s78, %s80
    %p84 = scmp.eq.s32.totalorder %s9, 0
    %p85 = por %p83, %p84
    %p86 = scmp.ne.s32.totalorder %s78, %s80
    %p87 = scmp.eq.s32.totalorder %s14, 1
    %p88 = por %p86, %p87
    %p89 = scmp.ne.s32.totalorder %s80, %s81
    %p90 = scmp.eq.s32.totalorder %s14, 0
    %p91 = por %p89, %p90
    %p92 = scmp.ne.s32.totalorder %s80, %s81
    %p93 = scmp.eq.s32.totalorder %s15, 1
    %p94 = por %p92, %p93
    %p96 = scmp.ne.s32.totalorder %s81, %s95
    %p97 = scmp.eq.s32.totalorder %s15, 0
    %p98 = por %p96, %p97
    %s99 = ssub.s32 %s16, %s28
    %s100 = ssub.s32 %s17, %s24
    %s101 = sor.u32 %s99, %s100
    %p102 = scmp.eq.s32.totalorder %s101, 0
    %s104 = sadd.s32 %s103, 1
    %s105 = scalar_select %p102, %s103, %s104
    %p108 = pneg %p102
    %p109 = scmp.eq.s32.totalorder %s9, 1
    %p110 = por %p108, %p109
    %p111 = scmp.ne.s32.totalorder %s103, %s106
    %p112 = scmp.eq.s32.totalorder %s9, 0
    %p113 = por %p111, %p112
    %p114 = scmp.ne.s32.totalorder %s103, %s106
    %p115 = scmp.eq.s32.totalorder %s14, 1
    %p116 = por %p114, %p115
    %p117 = scmp.ne.s32.totalorder %s106, %s107
    %p118 = scmp.eq.s32.totalorder %s14, 0
    %p119 = por %p117, %p118
    %p120 = scmp.ne.s32.totalorder %s106, %s107
    %p121 = scmp.eq.s32.totalorder %s15, 1
    %p122 = por %p120, %p121
    %p124 = scmp.ne.s32.totalorder %s107, %s123
    %p125 = scmp.eq.s32.totalorder %s15, 0
    %p126 = por %p124, %p125
    %p127 = scmp.le.s32.totalorder 1, %s9
    %p128 = scmp.lt.s32.totalorder %s9, 3
    %p129 = pnand %p127, %p128
    %p130 = pneg %p129
    // Predicated region
    $region9: #{drn_multifield_max_forward.2} parent=5 // pred_check
      _
    $region10: #{drn_multifield_max_forward.2} parent=5 // pred_check_branch
      %132 = sbr.rel (%p129) target = $region12
    $region11: #{drn_multifield_max_forward.2} parent=5 // pred_region
      %s133 = ssub.s32 %s9, 1
      // Predicated region
      $region13: #{drn_multifield_max_forward.2} parent=11 // pred_check
        %p134 = pneg %p70
      $region14: #{drn_multifield_max_forward.2} parent=11 // pred_check_branch
        %136 = sbr.rel (%p134) target = $region16
      $region15: #{drn_multifield_max_forward.2} parent=11 // pred_region
        _
      $region16: #{drn_multifield_max_forward.2} parent=11 // pred_fallthru
        _
      // Predicated region
      $region17: #{drn_multifield_max_forward.2} parent=11 // pred_check
        %p137 = pneg %p91
      $region18: #{drn_multifield_max_forward.2} parent=11 // pred_check_branch
        %139 = sbr.rel (%p137) target = $region20
      $region19: #{drn_multifield_max_forward.2} parent=11 // pred_region
        _
      $region20: #{drn_multifield_max_forward.2} parent=11 // pred_fallthru
        _
    $region12: #{drn_multifield_max_forward.2} parent=5 // pred_fallthru
      _
    %p140 = scmp.lt.s32.totalorder %s9, 2
    // Predicated region
    $region21: #{drn_multifield_max_forward.2} parent=5 // pred_check
      %p141 = pneg %p140
    $region22: #{drn_multifield_max_forward.2} parent=5 // pred_check_branch
      %143 = sbr.rel (%p141) target = $region24
    $region23: #{drn_multifield_max_forward.2} parent=5 // pred_region
      // Predicated region
      $region25: #{drn_multifield_max_forward.2} parent=23 // pred_check
        %p144 = pneg %p43
      $region26: #{drn_multifield_max_forward.2} parent=23 // pred_check_branch
        %146 = sbr.rel (%p144) target = $region28
      $region27: #{drn_multifield_max_forward.2} parent=23 // pred_region
        %s147 = smul.u32 2, %s17
        %p148 = scmp.lt.s32.totalorder %s16, 1
        %s149 = scalar_select %p148, %s16, 1
        %p150 = scmp.lt.s32.totalorder %s147, 1
        %s151 = scalar_select %p150, %s147, 1
        %s152 = smul.addr %s149, 8
        %s153 = sadd.s32 %s151, %s152
        %s154 = smul.addr %s153, 8
        %s155 = scalar_lea.vmem %s0, %s154
        %s156 = smul.u32 2, %s17
      $region28: #{drn_multifield_max_forward.2} parent=23 // pred_fallthru
        _
    $region24: #{drn_multifield_max_forward.2} parent=5 // pred_fallthru
      _
    %p157 = scmp.le.s32.totalorder 1, %s9
    %p158 = scmp.lt.s32.totalorder %s9, 3
    %p159 = pnand %p157, %p158
    %p160 = pneg %p159
    // Predicated region
    $region29: #{drn_multifield_max_forward.2} parent=5 // pred_check
      _
    $region30: #{drn_multifield_max_forward.2} parent=5 // pred_check_branch
      %162 = sbr.rel (%p159) target = $region32
    $region31: #{drn_multifield_max_forward.2} parent=5 // pred_region
      %s163 = ssub.s32 %s9, 1
      %s164 = smul.u32 2, %s19
      %p165 = scmp.lt.s32.totalorder %s18, 1
      %s166 = scalar_select %p165, %s18, 1
      %p167 = scmp.lt.s32.totalorder %s164, 1
      %s168 = scalar_select %p167, %s164, 1
      %s169 = smul.addr %s166, 8
      %s170 = sadd.s32 %s168, %s169
      %s171 = smul.addr %s170, 8
      %s172 = scalar_lea.vmem %s0, %s171
      %p173 = pneg %p49
      %p174 = pneg %p46
      %p175 = pneg %p70
      %p176 = pneg %p67
      %p177 = pneg %p91
      %p178 = pneg %p88
      %p179 = pneg %p119
      %p180 = pneg %p116
      %s181 = smul.u32 2, %s19
      %p182 = scmp.lt.s32.totalorder %s18, 1
      %s183 = scalar_select %p182, %s18, 1
      %p184 = scmp.lt.s32.totalorder %s181, 1
      %s185 = scalar_select %p184, %s181, 1
      %s186 = smul.addr %s183, 4
      %s187 = sadd.s32 %s185, %s186
      %s188 = smul.addr %s187, 4
      %s189 = scalar_lea.vmem %s3, %s188
      %s190 = smul.u32 2, %s19
      %p191 = scmp.lt.s32.totalorder %s18, 1
      %s192 = scalar_select %p191, %s18, 1
      %p193 = scmp.lt.s32.totalorder %s190, 1
      %s194 = scalar_select %p193, %s190, 1
      %s195 = smul.addr %s192, 8
      %s196 = sadd.s32 %s194, %s195
      %s197 = smul.addr %s196, 8
      %s198 = scalar_lea.vmem %s0, %s197
      %s199 = smul.u32 2, %s19
      %s200 = smul.u32 2, %s19
      %p201 = scmp.lt.s32.totalorder %s18, 1
      %s202 = scalar_select %p201, %s18, 1
      %p203 = scmp.lt.s32.totalorder %s200, 1
      %s204 = scalar_select %p203, %s200, 1
      %s205 = smul.addr %s202, 4
      %s206 = sadd.s32 %s204, %s205
      %s207 = smul.addr %s206, 4
      %s208 = scalar_lea.vmem %s3, %s207
      %s209 = smul.u32 2, %s19
      %v211 = vld [vmem:[%s198] sm:$0xff]
      %v212 = vld [vmem:[%s198 + $0x8] sm:$0xff]
      %v213 = vld [vmem:[%s198 + $0x10] sm:$0xff]
      %v214 = vld [vmem:[%s198 + $0x18] sm:$0xff]
      %v215 = vld [vmem:[%s198 + $0x20] sm:$0xff]
      %v216 = vld [vmem:[%s198 + $0x28] sm:$0xff]
      %v217 = vld [vmem:[%s198 + $0x30] sm:$0xff]
      %v218 = vld [vmem:[%s198 + $0x38] sm:$0xff]
      %v219 = vpack.c.bf16 %v213, %v211
      %v220 = vpack.c.bf16 %v214, %v212
      %v221 = vpack.c.bf16 %v217, %v215
      %v222 = vpack.c.bf16 %v218, %v216
      %v223 = vld [vmem:[%s1] sm:$0xf]
      %v224 = vld [vmem:[%s1 + $0x4] sm:$0xf]
      %v225 = vld [vmem:[%s2] sm:$0xff]
      %v226 = vld [vmem:[%s2 + $0x8] sm:$0xff]
      %228 = vset.pattern.permute.xlu0 0
      %229 = vperm.xlu0 %228, %v225
      %v230 = vpop.permute.xlu0 %229
      %233 = vset.pattern.permute.xlu0 0
      %234 = vperm.xlu0 %233, %v226
      %v235 = vpop.permute.xlu0 %234
      %v239 = vunpack.c.l.b16 %v223
      %v240 = vunpack.c.l.b16 %v224
      %v241 = vpack.c.b16 %v240, %v239
      %vm242 = vcmask 261120
      %v244 = vsel %vm242, %v241, 0
      %246 = vmatprep.subr.bf16.mxu0 0
      %247 = vmatpush1.bf16.msra.mxu0 0
      %248 = vmatprep.subr.bf16.mxu0 0
      %249 = vmatpush1.bf16.msra.mxu0 0
      %250 = vmatprep.subr.bf16.mxu0 0
      %251 = vmatpush1.bf16.msra.mxu0 0
      %252 = vmatprep.subr.bf16.mxu0 0
      %253 = vmatpush1.bf16.msra.mxu0 0
      %254 = vmatprep.subr.bf16.mxu0 0
      %255 = vmatpush1.bf16.msra.mxu0 0
      %256 = vmatprep.subr.bf16.mxu0 0
      %257 = vmatpush1.bf16.msra.mxu0 0
      %258 = vmatprep.subr.bf16.mxu0 %v222
      %259 = vmatpush1.bf16.msra.mxu0 %v221
      %260 = vmatprep.subr.bf16.mxu0 %v220
      %261 = vmatpush1.bf16.msra.mxu0 %v219
      %262 = vmatprep.subr.bf16.mxu0 0
      %263 = vmatpush2.bf16.msra.mxu0 0
      %264 = vmatprep.subr.bf16.mxu0 0
      %265 = vmatpush2.bf16.msra.mxu0 0
      %266 = vmatprep.subr.bf16.mxu0 0
      %267 = vmatpush2.bf16.msra.mxu0 0
      %268 = vmatprep.subr.bf16.mxu0 0
      %269 = vmatpush2.bf16.msra.mxu0 0
      %270 = vmatprep.subr.bf16.mxu0 0
      %271 = vmatpush2.bf16.msra.mxu0 0
      %272 = vmatprep.subr.bf16.mxu0 0
      %273 = vmatpush2.bf16.msra.mxu0 0
      %274 = vmatprep.subr.bf16.mxu0 0
      %275 = vmatpush2.bf16.msra.mxu0 0
      %276 = vmatprep.subr.bf16.mxu0 0
      %277 = vmatpush2.bf16.msra.mxu0 0
      %278 = vmatprep.mubr.bf16.mxu0 0
      %279 = vmatmul.mubr.bf16.gmra.mxu0 %v244
      %v280 = vpop.f32.mrf.mxu0
      %v281 = vadd.f32 %v230, %v280
      %v282 = vpop.f32.mrf.mxu0
      %v283 = vadd.f32 %v230, %v282
      %v284 = vpop.f32.mrf.mxu0
      %v285 = vadd.f32 %v235, %v284
      %v286 = vpop.f32.mrf.mxu0
      %v287 = vadd.f32 %v235, %v286
      %288 = vdwg.mxu0
      %v289 = vlaneseq
      %v290 = vshrl.u32 %v289, 7
      %v291 = vadd.s32 %v290, 8
      %vm292 = vcmp.ge.s32.totalorder %v290, 12
      %vm293 = vcmp.ge.s32.totalorder %v291, 12
      %v294 = vsel %vm292, %v281, -inf
      %v295 = vsel %vm292, %v283, -inf
      %v296 = vsel %vm293, %v285, -inf
      %v297 = vsel %vm293, %v287, -inf
      %v298 = vmax.f32 %v294, %v296
      %v299 = vrot.slane %v298, 4
      %v300 = vmax.f32 %v298, %v299
      %v301 = vrot.slane %v300, 2
      %v302 = vmax.f32 %v300, %v301
      %v303 = vrot.slane %v302, 1
      %v304 = vmax.f32 %v302, %v303
      %v305 = vmax.f32 %v295, %v297
      %v306 = vrot.slane %v305, 4
      %v307 = vmax.f32 %v305, %v306
      %v308 = vrot.slane %v307, 2
      %v309 = vmax.f32 %v307, %v308
      %v310 = vrot.slane %v309, 1
      %v311 = vmax.f32 %v309, %v310
      %v312 = vsub.f32 %v281, %v304
      %v313 = vsub.f32 %v283, %v311
      %v314 = vsub.f32 %v285, %v304
      %v315 = vsub.f32 %v287, %v311
      %v316 = vmul.f32 %v312, 1.442695
      %v317 = vpow.pop %v316
      %v318 = vmul.f32 %v313, 1.442695
      %v319 = vpow.pop %v318
      %v320 = vmul.f32 %v314, 1.442695
      %v321 = vpow.pop %v320
      %v322 = vmul.f32 %v315, 1.442695
      %v323 = vpow.pop %v322
      %v324 = vsel %vm292, %v317, 0.0
      %v325 = vsel %vm292, %v319, 0.0
      %v326 = vsel %vm293, %v321, 0.0
      %v327 = vsel %vm293, %v323, 0.0
      %v328 = vadd.f32 %v324, %v326
      %v329 = vrot.slane %v328, 4
      %v330 = vadd.f32 %v328, %v329
      %v331 = vrot.slane %v330, 2
      %v332 = vadd.f32 %v330, %v331
      %v333 = vrot.slane %v332, 1
      %v334 = vadd.f32 %v332, %v333
      %v335 = vadd.f32 %v325, %v327
      %v336 = vrot.slane %v335, 4
      %v337 = vadd.f32 %v335, %v336
      %v338 = vrot.slane %v337, 2
      %v339 = vadd.f32 %v337, %v338
      %v340 = vrot.slane %v339, 1
      %v341 = vadd.f32 %v339, %v340
      %v342 = vrcp.pop %v334
      %v343 = vrcp.pop %v341
      %v344 = vmul.f32 %v324, %v342
      %v345 = vmul.f32 %v325, %v343
      %v346 = vmul.f32 %v326, %v342
      %v347 = vmul.f32 %v327, %v343
      %v348 = vsel %vm292, %v344, %v281
      %v349 = vsel %vm292, %v345, %v283
      %v350 = vsel %vm293, %v346, %v285
      %v351 = vsel %vm293, %v347, %v287
      %v352 = vpack.c.bf16 %v350, %v348
      %v353 = vpack.c.bf16 %v351, %v349
      %v356 = vunpack.c.l.b16 %v352
      %v357 = vunpack.c.l.b16 %v353
      %v358 = vunpack.c.h.b16 %v352
      %v359 = vunpack.c.h.b16 %v353
      %v360 = vpack.c.b16 %v357, %v356
      %v361 = vpack.c.b16 %v359, %v358
      %364 = vst [vmem:[%s208] sm:$0xff] %v360
      %365 = vst [vmem:[%s208 + $0x8] sm:$0xff] %v361
      %s366 = smul.u32 2, %s19
      %p367 = scmp.lt.s32.totalorder %s18, 1
      %s368 = scalar_select %p367, %s18, 1
      %p369 = scmp.lt.s32.totalorder %s366, 1
      %s370 = scalar_select %p369, %s366, 1
      %s371 = smul.addr %s368, 4
      %s372 = sadd.s32 %s370, %s371
      %s373 = smul.addr %s372, 4
      %s374 = scalar_lea.vmem %s3, %s373
      // Predicated region
      $region33: #{drn_multifield_max_forward.2} parent=31 // pred_check
        %p375 = pneg %p116
      $region34: #{drn_multifield_max_forward.2} parent=31 // pred_check_branch
        %377 = sbr.rel (%p375) target = $region36
      $region35: #{drn_multifield_max_forward.2} parent=31 // pred_region
        %s378 = smul.u32 2, %s19
      $region36: #{drn_multifield_max_forward.2} parent=31 // pred_fallthru
        _
    $region32: #{drn_multifield_max_forward.2} parent=5 // pred_fallthru
      _
    %p379 = scmp.le.s32.totalorder 2, %s9
    // Predicated region
    $region37: #{drn_multifield_max_forward.2} parent=5 // pred_check
      %p380 = pneg %p379
    $region38: #{drn_multifield_max_forward.2} parent=5 // pred_check_branch
      %382 = sbr.rel (%p380) target = $region40
    $region39: #{drn_multifield_max_forward.2} parent=5 // pred_region
      %s383 = ssub.s32 %s9, 2
      // Predicated region
      $region41: #{drn_multifield_max_forward.2} parent=39 // pred_check
        %p384 = pneg %p122
      $region42: #{drn_multifield_max_forward.2} parent=39 // pred_check_branch
        %386 = sbr.rel (%p384) target = $region44
      $region43: #{drn_multifield_max_forward.2} parent=39 // pred_region
        %s387 = smul.u32 2, %s21
        %p388 = scmp.lt.s32.totalorder %s20, 1
        %s389 = scalar_select %p388, %s20, 1
        %p390 = scmp.lt.s32.totalorder %s387, 1
        %s391 = scalar_select %p390, %s387, 1
        %s392 = smul.addr %s389, 4
        %s393 = sadd.s32 %s391, %s392
        %s394 = smul.addr %s393, 4
        %s395 = scalar_lea.vmem %s3, %s394
      $region44: #{drn_multifield_max_forward.2} parent=39 // pred_fallthru
        _
    $region40: #{drn_multifield_max_forward.2} parent=5 // pred_fallthru
      _
  $region6: #{drn_multifield_max_forward.2} parent=0 // loop_footer
    %s13 = sadd.s32 1, %s9
  $region7: #{drn_multifield_max_forward.2} parent=0 // loop_footer_branch
    %8 = sbr.rel target = $region3
  $region8: #{drn_multifield_max_forward.2} parent=0 // loop_exit
    _

// kernel: drn_multifield_max_forward.3
$region0: #{drn_multifield_max_forward.3}
  #allocation0 [shape = 'u32[]', space=smem, size = 0x4, offset = 0x4, fixed_abs, tag = 'smem constant byte address 0x4 - core index']
  #allocation1 [shape = 'u32[144,128]{1,0:T(1,128)}', space=vmem, size = 0x12000, scoped, tag = 'internal scratch']
  #allocation2 [shape = 'f32[16,16,128]{2,1,0:T(8,128)}', space=vmem, size = 0x20000, scoped, tag = 'scratch operand']
  #allocation3 [shape = 'f32[4,128,128]{2,1,0:T(8,128)}', space=vmem, size = 0x40000, scoped, tag = 'scratch operand']
  %s0 = inlined_call_operand.vmem [shape: bf16[2,256,16], index: 0, kind: input, shape index: {}]
  %s1 = inlined_call_operand.vmem [shape: f32[128,16], index: 1, kind: input, shape index: {}]
  %s2 = inlined_call_operand.vmem [shape: bf16[16,128], index: 2, kind: input, shape index: {}]
  %s3 = inlined_call_operand.hbm [shape: f32[2,6,128,128], index: 3, kind: output, shape index: {}]
  %s4 = sld [smem:[#allocation0]]
  $region49: #{drn_multifield_max_forward.3} parent=0
    _
  %s6 = ssub.s32 1, %s4
  %s7 = scalar_select 0, %s6, %s4
  $region1: #{drn_multifield_max_forward.3} parent=0
    #allocation4 [shape = 'u8[786432]{0}', space=vmem, size = 0xc0000, scoped, tag = 'output window, operand 0']
    #allocation5 [shape = 's32[2]{0}', space=sflag, size = 0x8, scoped, tag = 'scoped memory for drn_multifield_max_forward.3']
    %8 = vsyncpa [#allocation5], 0
    %s9 = scalar_lea.sflag [#allocation5], 1
    %10 = vsyncpa %s9, 0
    loop: start=0, step=1, limit=4
    $region2: #{drn_multifield_max_forward.3} parent=1 // loop_pre_header
      _
    $region3: #{drn_multifield_max_forward.3} parent=1 // loop_header
      %s12 = sphi 0, %s16
      %p13 = scmp.ge.s32.totalorder %s12, 4
      %s19 = sphi 0, %s31
      %s20 = sphi 0, %s27
      %s21 = sphi 0, %s19
      %s22 = sphi 0, %s20
      %s23 = sphi 0, %s21
      %s24 = sphi 0, %s22
      %s34 = sphi 0, %s36
      %s37 = sphi 0, %s34
      %s38 = sphi 0, %s37
      %s54 = sphi 0, %s38
      %s60 = sphi 0, %s62
      %s63 = sphi 0, %s60
      %s64 = sphi 0, %s63
      %s80 = sphi 0, %s64
      %s84 = sphi 0, %s84
      %s86 = sphi 0, %s84
      %s87 = sphi 0, %s86
      %s101 = sphi 0, %s87
      %s109 = sphi 0, %s111
      %s112 = sphi 0, %s109
      %s113 = sphi 0, %s112
      %s129 = sphi 0, %s113
    $region4: #{drn_multifield_max_forward.3} parent=1 // loop_header_branch
      %15 = sbr.rel (%p13) target = $region8
    $region5: #{drn_multifield_max_forward.3} parent=1 // loop_body
      %s17 = ssub.s32 %s12, 1
      %s18 = ssub.s32 %s12, 2
      %s25 = sadd.s32 1, %s20
      %p26 = scmp.ge.s32.totalorder %s25, 1
      %s27 = scalar_select %p26, 0, %s25
      %s28 = sadd.s32 1, %s19
      %s29 = scalar_select %p26, %s28, %s19
      %p30 = scmp.ge.s32.totalorder %s29, 2
      %s31 = scalar_select %p30, 0, %s29
      %s32 = ssub.s32 %s19, %s31
      %p33 = scmp.eq.s32.totalorder %s32, 0
      %s35 = sadd.s32 %s34, 1
      %s36 = scalar_select %p33, %s34, %s35
      %p39 = pneg %p33
      %p40 = scmp.eq.s32.totalorder %s12, 1
      %p41 = por %p39, %p40
      %p42 = scmp.ne.s32.totalorder %s34, %s37
      %p43 = scmp.eq.s32.totalorder %s12, 0
      %p44 = por %p42, %p43
      %p45 = scmp.ne.s32.totalorder %s34, %s37
      %p46 = scmp.eq.s32.totalorder %s17, 1
      %p47 = por %p45, %p46
      %p48 = scmp.ne.s32.totalorder %s37, %s38
      %p49 = scmp.eq.s32.totalorder %s17, 0
      %p50 = por %p48, %p49
      %p51 = scmp.ne.s32.totalorder %s37, %s38
      %p52 = scmp.eq.s32.totalorder %s18, 1
      %p53 = por %p51, %p52
      %p55 = scmp.ne.s32.totalorder %s38, %s54
      %p56 = scmp.eq.s32.totalorder %s18, 0
      %p57 = por %p55, %p56
      %s58 = ssub.s32 %s20, %s27
      %p59 = scmp.eq.s32.totalorder %s58, 0
      %s61 = sadd.s32 %s60, 1
      %s62 = scalar_select %p59, %s60, %s61
      %p65 = pneg %p59
      %p66 = scmp.eq.s32.totalorder %s12, 1
      %p67 = por %p65, %p66
      %p68 = scmp.ne.s32.totalorder %s60, %s63
      %p69 = scmp.eq.s32.totalorder %s12, 0
      %p70 = por %p68, %p69
      %p71 = scmp.ne.s32.totalorder %s60, %s63
      %p72 = scmp.eq.s32.totalorder %s17, 1
      %p73 = por %p71, %p72
      %p74 = scmp.ne.s32.totalorder %s63, %s64
      %p75 = scmp.eq.s32.totalorder %s17, 0
      %p76 = por %p74, %p75
      %p77 = scmp.ne.s32.totalorder %s63, %s64
      %p78 = scmp.eq.s32.totalorder %s18, 1
      %p79 = por %p77, %p78
      %p81 = scmp.ne.s32.totalorder %s64, %s80
      %p82 = scmp.eq.s32.totalorder %s18, 0
      %p83 = por %p81, %p82
      %s85 = sadd.s32 %s84, 1
      %p88 = scmp.eq.s32.totalorder %s12, 1
      %p89 = scmp.ne.s32.totalorder %s84, %s86
      %p90 = scmp.eq.s32.totalorder %s12, 0
      %p91 = por %p89, %p90
      %p92 = scmp.ne.s32.totalorder %s84, %s86
      %p93 = scmp.eq.s32.totalorder %s17, 1
      %p94 = por %p92, %p93
      %p95 = scmp.ne.s32.totalorder %s86, %s87
      %p96 = scmp.eq.s32.totalorder %s17, 0
      %p97 = por %p95, %p96
      %p98 = scmp.ne.s32.totalorder %s86, %s87
      %p99 = scmp.eq.s32.totalorder %s18, 1
      %p100 = por %p98, %p99
      %p102 = scmp.ne.s32.totalorder %s87, %s101
      %p103 = scmp.eq.s32.totalorder %s18, 0
      %p104 = por %p102, %p103
      %s105 = ssub.s32 %s19, %s31
      %s106 = ssub.s32 %s20, %s27
      %s107 = sor.u32 %s105, %s106
      %p108 = scmp.eq.s32.totalorder %s107, 0
      %s110 = sadd.s32 %s109, 1
      %s111 = scalar_select %p108, %s109, %s110
      %p114 = pneg %p108
      %p115 = scmp.eq.s32.totalorder %s12, 1
      %p116 = por %p114, %p115
      %p117 = scmp.ne.s32.totalorder %s109, %s112
      %p118 = scmp.eq.s32.totalorder %s12, 0
      %p119 = por %p117, %p118
      %p120 = scmp.ne.s32.totalorder %s109, %s112
      %p121 = scmp.eq.s32.totalorder %s17, 1
      %p122 = por %p120, %p121
      %p123 = scmp.ne.s32.totalorder %s112, %s113
      %p124 = scmp.eq.s32.totalorder %s17, 0
      %p125 = por %p123, %p124
      %p126 = scmp.ne.s32.totalorder %s112, %s113
      %p127 = scmp.eq.s32.totalorder %s18, 1
      %p128 = por %p126, %p127
      %p130 = scmp.ne.s32.totalorder %s113, %s129
      %p131 = scmp.eq.s32.totalorder %s18, 0
      %p132 = por %p130, %p131
      %p133 = scmp.le.s32.totalorder 1, %s12
      %p134 = scmp.lt.s32.totalorder %s12, 3
      %p135 = pnand %p133, %p134
      %p136 = pneg %p135
      // Predicated region
      $region9: #{drn_multifield_max_forward.3} parent=5 // pred_check
        _
      $region10: #{drn_multifield_max_forward.3} parent=5 // pred_check_branch
        %138 = sbr.rel (%p135) target = $region12
      $region11: #{drn_multifield_max_forward.3} parent=5 // pred_region
        %s139 = ssub.s32 %s12, 1
        // Predicated region
        $region13: #{drn_multifield_max_forward.3} parent=11 // pred_check
          %p140 = pneg %p76
        $region14: #{drn_multifield_max_forward.3} parent=11 // pred_check_branch
          %142 = sbr.rel (%p140) target = $region16
        $region15: #{drn_multifield_max_forward.3} parent=11 // pred_region
          %s143 = smul.u32 16, %s22
          %p144 = scmp.lt.s32.totalorder %s143, 15
          %s145 = scalar_select %p144, %s143, 15
          %s146 = smul.addr %s145, 8
          %s147 = scalar_lea.vmem %s1, %s146
          %s148 = smul.u32 16, %s22
        $region16: #{drn_multifield_max_forward.3} parent=11 // pred_fallthru
          _
        // Predicated region
        $region17: #{drn_multifield_max_forward.3} parent=11 // pred_check
          %p149 = pneg %p97
        $region18: #{drn_multifield_max_forward.3} parent=11 // pred_check_branch
          %151 = sbr.rel (%p149) target = $region20
        $region19: #{drn_multifield_max_forward.3} parent=11 // pred_region
          _
        $region20: #{drn_multifield_max_forward.3} parent=11 // pred_fallthru
          _
      $region12: #{drn_multifield_max_forward.3} parent=5 // pred_fallthru
        _
      %p152 = scmp.lt.s32.totalorder %s12, 2
      // Predicated region
      $region21: #{drn_multifield_max_forward.3} parent=5 // pred_check
        %p153 = pneg %p152
      $region22: #{drn_multifield_max_forward.3} parent=5 // pred_check_branch
        %155 = sbr.rel (%p153) target = $region24
      $region23: #{drn_multifield_max_forward.3} parent=5 // pred_region
        // Predicated region
        $region25: #{drn_multifield_max_forward.3} parent=23 // pred_check
          %p156 = pneg %p44
        $region26: #{drn_multifield_max_forward.3} parent=23 // pred_check_branch
          %158 = sbr.rel (%p156) target = $region28
        $region27: #{drn_multifield_max_forward.3} parent=23 // pred_region
          %p159 = scmp.lt.s32.totalorder %s19, 1
          %s160 = scalar_select %p159, %s19, 1
          %s161 = smul.addr %s160, 32
          %s162 = smul.addr %s161, 4
          %s163 = scalar_lea.vmem %s0, %s162
        $region28: #{drn_multifield_max_forward.3} parent=23 // pred_fallthru
          _
      $region24: #{drn_multifield_max_forward.3} parent=5 // pred_fallthru
        _
      %p164 = scmp.le.s32.totalorder 1, %s12
      %p165 = scmp.lt.s32.totalorder %s12, 3
      %p166 = pnand %p164, %p165
      %p167 = pneg %p166
      // Predicated region
      $region29: #{drn_multifield_max_forward.3} parent=5 // pred_check
        _
      $region30: #{drn_multifield_max_forward.3} parent=5 // pred_check_branch
        %169 = sbr.rel (%p166) target = $region32
      $region31: #{drn_multifield_max_forward.3} parent=5 // pred_region
        %s170 = ssub.s32 %s12, 1
        %p171 = scmp.lt.s32.totalorder %s21, 1
        %s172 = scalar_select %p171, %s21, 1
        %s173 = smul.addr %s172, 32
        %s174 = smul.addr %s173, 4
        %s175 = scalar_lea.vmem %s0, %s174
        %p176 = pneg %p50
        %p177 = pneg %p47
        %s178 = smul.u32 16, %s22
        %p179 = scmp.lt.s32.totalorder %s178, 15
        %s180 = scalar_select %p179, %s178, 15
        %s181 = smul.addr %s180, 8
        %s182 = scalar_lea.vmem %s1, %s181
        %p183 = pneg %p76
        %p184 = pneg %p73
        %p185 = pneg %p97
        %p186 = pneg %p94
        %p187 = pneg %p125
        %p188 = pneg %p122
        %s189 = sand.u32 %s112, 1
        %s190 = scalar_lea.sflag [#allocation5], %s189
        %s191 = sand.u32 %s112, 1
        %s192 = smul.addr %s191, 768
        %s193 = scalar_lea.vmem [#allocation4], %s192
        %p194 = scmp.lt.s32.totalorder %s21, 1
        %s195 = scalar_select %p194, %s21, 1
        %s196 = smul.addr %s195, 32
        %s197 = smul.addr %s196, 4
        %s198 = scalar_lea.vmem %s0, %s197
        %s199 = smul.u32 16, %s22
        %p200 = scmp.lt.s32.totalorder %s199, 15
        %s201 = scalar_select %p200, %s199, 15
        %s202 = smul.addr %s201, 8
        %s203 = scalar_lea.vmem %s1, %s202
        %s204 = smul.u32 16, %s22
        %s205 = smul.u32 16, %s22
        %p207 = scmp.eq.s32.totalorder %s22, 0
        // Predicated region
        $region33: #{drn_multifield_max_forward.3} parent=31 // pred_check
          %p208 = pneg %p207
        $region34: #{drn_multifield_max_forward.3} parent=31 // pred_check_branch
          %210 = sbr.rel (%p208) target = $region36
        $region35: #{drn_multifield_max_forward.3} parent=31 // pred_region
          %v211 = vld [vmem:[%s198] sm:$0xf]
          %v212 = vld [vmem:[%s198 + $0x4] sm:$0xf]
          %v213 = vld [vmem:[%s198 + $0x8] sm:$0xf]
          %v214 = vld [vmem:[%s198 + $0xc] sm:$0xf]
          %v215 = vld [vmem:[%s198 + $0x10] sm:$0xf]
          %v216 = vld [vmem:[%s198 + $0x14] sm:$0xf]
          %v217 = vld [vmem:[%s198 + $0x18] sm:$0xf]
          %v218 = vld [vmem:[%s198 + $0x1c] sm:$0xf]
          %v219 = vld [vmem:[%s198 + $0x20] sm:$0xf]
          %v220 = vld [vmem:[%s198 + $0x24] sm:$0xf]
          %v221 = vld [vmem:[%s198 + $0x28] sm:$0xf]
          %v222 = vld [vmem:[%s198 + $0x2c] sm:$0xf]
          %v223 = vld [vmem:[%s198 + $0x30] sm:$0xf]
          %v224 = vld [vmem:[%s198 + $0x34] sm:$0xf]
          %v225 = vld [vmem:[%s198 + $0x38] sm:$0xf]
          %v226 = vld [vmem:[%s198 + $0x3c] sm:$0xf]
          %v227 = vld [vmem:[%s198 + $0x40] sm:$0xf]
          %v228 = vld [vmem:[%s198 + $0x44] sm:$0xf]
          %v229 = vld [vmem:[%s198 + $0x48] sm:$0xf]
          %v230 = vld [vmem:[%s198 + $0x4c] sm:$0xf]
          %v231 = vld [vmem:[%s198 + $0x50] sm:$0xf]
          %v232 = vld [vmem:[%s198 + $0x54] sm:$0xf]
          %v233 = vld [vmem:[%s198 + $0x58] sm:$0xf]
          %v234 = vld [vmem:[%s198 + $0x5c] sm:$0xf]
          %v235 = vld [vmem:[%s198 + $0x60] sm:$0xf]
          %v236 = vld [vmem:[%s198 + $0x64] sm:$0xf]
          %v237 = vld [vmem:[%s198 + $0x68] sm:$0xf]
          %v238 = vld [vmem:[%s198 + $0x6c] sm:$0xf]
          %v239 = vld [vmem:[%s198 + $0x70] sm:$0xf]
          %v240 = vld [vmem:[%s198 + $0x74] sm:$0xf]
          %v241 = vld [vmem:[%s198 + $0x78] sm:$0xf]
          %v242 = vld [vmem:[%s198 + $0x7c] sm:$0xf]
          %v243 = vld [vmem:[%s2] sm:$0xf]
          %v244 = vld [vmem:[%s2 + $0x4] sm:$0xf]
          %v277 = vunpack.c.l.b16 %v211
          %v278 = vunpack.c.l.b16 %v212
          %v279 = vunpack.c.l.b16 %v213
          %v280 = vunpack.c.l.b16 %v214
          %v281 = vunpack.c.l.b16 %v215
          %v282 = vunpack.c.l.b16 %v216
          %v283 = vunpack.c.l.b16 %v217
          %v284 = vunpack.c.l.b16 %v218
          %v285 = vunpack.c.l.b16 %v219
          %v286 = vunpack.c.l.b16 %v220
          %v287 = vunpack.c.l.b16 %v221
          %v288 = vunpack.c.l.b16 %v222
          %v289 = vunpack.c.l.b16 %v223
          %v290 = vunpack.c.l.b16 %v224
          %v291 = vunpack.c.l.b16 %v225
          %v292 = vunpack.c.l.b16 %v226
          %v293 = vunpack.c.l.b16 %v227
          %v294 = vunpack.c.l.b16 %v228
          %v295 = vunpack.c.l.b16 %v229
          %v296 = vunpack.c.l.b16 %v230
          %v297 = vunpack.c.l.b16 %v231
          %v298 = vunpack.c.l.b16 %v232
          %v299 = vunpack.c.l.b16 %v233
          %v300 = vunpack.c.l.b16 %v234
          %v301 = vunpack.c.l.b16 %v235
          %v302 = vunpack.c.l.b16 %v236
          %v303 = vunpack.c.l.b16 %v237
          %v304 = vunpack.c.l.b16 %v238
          %v305 = vunpack.c.l.b16 %v239
          %v306 = vunpack.c.l.b16 %v240
          %v307 = vunpack.c.l.b16 %v241
          %v308 = vunpack.c.l.b16 %v242
          %v309 = vpack.c.b16 %v278, %v277
          %v310 = vpack.c.b16 %v280, %v279
          %v311 = vpack.c.b16 %v282, %v281
          %v312 = vpack.c.b16 %v284, %v283
          %v313 = vpack.c.b16 %v286, %v285
          %v314 = vpack.c.b16 %v288, %v287
          %v315 = vpack.c.b16 %v290, %v289
          %v316 = vpack.c.b16 %v292, %v291
          %v317 = vpack.c.b16 %v294, %v293
          %v318 = vpack.c.b16 %v296, %v295
          %v319 = vpack.c.b16 %v298, %v297
          %v320 = vpack.c.b16 %v300, %v299
          %v321 = vpack.c.b16 %v302, %v301
          %v322 = vpack.c.b16 %v304, %v303
          %v323 = vpack.c.b16 %v306, %v305
          %v324 = vpack.c.b16 %v308, %v307
          %v327 = vunpack.c.l.b16 %v243
          %v328 = vunpack.c.l.b16 %v244
          %v329 = vpack.c.b16 %v328, %v327
          %vm331 = vcmask 130048
          %v333 = vsel %vm331, %v309, 0
          %v336 = vsel %vm331, %v310, 0
          %v339 = vsel %vm331, %v311, 0
          %v342 = vsel %vm331, %v312, 0
          %v345 = vsel %vm331, %v313, 0
          %v348 = vsel %vm331, %v314, 0
          %v351 = vsel %vm331, %v315, 0
          %v354 = vsel %vm331, %v316, 0
          %v357 = vsel %vm331, %v317, 0
          %v360 = vsel %vm331, %v318, 0
          %v363 = vsel %vm331, %v319, 0
          %v366 = vsel %vm331, %v320, 0
          %v369 = vsel %vm331, %v321, 0
          %v372 = vsel %vm331, %v322, 0
          %v375 = vsel %vm331, %v323, 0
          %v378 = vsel %vm331, %v324, 0
          %380 = vmatprep.subr.bf16.mxu0 0
          %381 = vmatpush1.bf16.msra.mxu0 0
          %382 = vmatprep.subr.bf16.mxu0 0
          %383 = vmatpush1.bf16.msra.mxu0 0
          %384 = vmatprep.subr.bf16.mxu0 0
          %385 = vmatpush1.bf16.msra.mxu0 0
          %386 = vmatprep.subr.bf16.mxu0 0
          %387 = vmatpush1.bf16.msra.mxu0 0
          %388 = vmatprep.subr.bf16.mxu0 0
          %389 = vmatpush1.bf16.msra.mxu0 0
          %390 = vmatprep.subr.bf16.mxu0 0
          %391 = vmatpush1.bf16.msra.mxu0 0
          %392 = vmatprep.subr.bf16.mxu0 0
          %393 = vmatpush1.bf16.msra.mxu0 0
          %394 = vmatprep.subr.bf16.mxu0 0
          %395 = vmatpush1.bf16.msra.mxu0 %v329
          %396 = vmatprep.subr.bf16.mxu0 0
          %397 = vmatpush2.bf16.msra.mxu0 0
          %398 = vmatprep.subr.bf16.mxu0 0
          %399 = vmatpush2.bf16.msra.mxu0 0
          %400 = vmatprep.subr.bf16.mxu0 0
          %401 = vmatpush2.bf16.msra.mxu0 0
          %402 = vmatprep.subr.bf16.mxu0 0
          %403 = vmatpush2.bf16.msra.mxu0 0
          %404 = vmatprep.subr.bf16.mxu0 0
          %405 = vmatpush2.bf16.msra.mxu0 0
          %406 = vmatprep.subr.bf16.mxu0 0
          %407 = vmatpush2.bf16.msra.mxu0 0
          %408 = vmatprep.subr.bf16.mxu0 0
          %409 = vmatpush2.bf16.msra.mxu0 0
          %410 = vmatprep.subr.bf16.mxu0 0
          %411 = vmatpush2.bf16.msra.mxu0 0
          %412 = vmatprep.mubr.bf16.mxu0 0
          %413 = vmatmul.mubr.bf16.gmra.mxu0 %v333
          %v414 = vpop.f32.mrf.mxu0
          %v415 = vadd.f32 0.0, %v414
          %v416 = vpop.f32.mrf.mxu0
          %v417 = vpop.f32.mrf.mxu0
          %v418 = vadd.f32 0.0, %v417
          %v419 = vpop.f32.mrf.mxu0
          %420 = vmatprep.mubr.bf16.mxu0 0
          %421 = vmatmul.mubr.bf16.gmra.mxu0 %v336
          %v422 = vpop.f32.mrf.mxu0
          %v423 = vadd.f32 0.0, %v422
          %v424 = vpop.f32.mrf.mxu0
          %v425 = vpop.f32.mrf.mxu0
          %v426 = vadd.f32 0.0, %v425
          %v427 = vpop.f32.mrf.mxu0
          %428 = vmatprep.mubr.bf16.mxu0 0
          %429 = vmatmul.mubr.bf16.gmra.mxu0 %v339
          %v430 = vpop.f32.mrf.mxu0
          %v431 = vadd.f32 0.0, %v430
          %v432 = vpop.f32.mrf.mxu0
          %v433 = vpop.f32.mrf.mxu0
          %v434 = vadd.f32 0.0, %v433
          %v435 = vpop.f32.mrf.mxu0
          %436 = vmatprep.mubr.bf16.mxu0 0
          %437 = vmatmul.mubr.bf16.gmra.mxu0 %v342
          %v438 = vpop.f32.mrf.mxu0
          %v439 = vadd.f32 0.0, %v438
          %v440 = vpop.f32.mrf.mxu0
          %v441 = vpop.f32.mrf.mxu0
          %v442 = vadd.f32 0.0, %v441
          %v443 = vpop.f32.mrf.mxu0
          %444 = vmatprep.mubr.bf16.mxu0 0
          %445 = vmatmul.mubr.bf16.gmra.mxu0 %v345
          %v446 = vpop.f32.mrf.mxu0
          %v447 = vadd.f32 0.0, %v446
          %v448 = vpop.f32.mrf.mxu0
          %v449 = vpop.f32.mrf.mxu0
          %v450 = vadd.f32 0.0, %v449
          %v451 = vpop.f32.mrf.mxu0
          %452 = vmatprep.mubr.bf16.mxu0 0
          %453 = vmatmul.mubr.bf16.gmra.mxu0 %v348
          %v454 = vpop.f32.mrf.mxu0
          %v455 = vadd.f32 0.0, %v454
          %v456 = vpop.f32.mrf.mxu0
          %v457 = vpop.f32.mrf.mxu0
          %v458 = vadd.f32 0.0, %v457
          %v459 = vpop.f32.mrf.mxu0
          %460 = vmatprep.mubr.bf16.mxu0 0
          %461 = vmatmul.mubr.bf16.gmra.mxu0 %v351
          %v462 = vpop.f32.mrf.mxu0
          %v463 = vadd.f32 0.0, %v462
          %v464 = vpop.f32.mrf.mxu0
          %v465 = vpop.f32.mrf.mxu0
          %v466 = vadd.f32 0.0, %v465
          %v467 = vpop.f32.mrf.mxu0
          %468 = vmatprep.mubr.bf16.mxu0 0
          %469 = vmatmul.mubr.bf16.gmra.mxu0 %v354
          %v470 = vpop.f32.mrf.mxu0
          %v471 = vadd.f32 0.0, %v470
          %v472 = vpop.f32.mrf.mxu0
          %v473 = vpop.f32.mrf.mxu0
          %v474 = vadd.f32 0.0, %v473
          %v475 = vpop.f32.mrf.mxu0
          %476 = vmatprep.mubr.bf16.mxu0 0
          %477 = vmatmul.mubr.bf16.gmra.mxu0 %v357
          %v478 = vpop.f32.mrf.mxu0
          %v479 = vadd.f32 0.0, %v478
          %v480 = vpop.f32.mrf.mxu0
          %v481 = vpop.f32.mrf.mxu0
          %v482 = vadd.f32 0.0, %v481
          %v483 = vpop.f32.mrf.mxu0
          %484 = vmatprep.mubr.bf16.mxu0 0
          %485 = vmatmul.mubr.bf16.gmra.mxu0 %v360
          %v486 = vpop.f32.mrf.mxu0
          %v487 = vadd.f32 0.0, %v486
          %v488 = vpop.f32.mrf.mxu0
          %v489 = vpop.f32.mrf.mxu0
          %v490 = vadd.f32 0.0, %v489
          %v491 = vpop.f32.mrf.mxu0
          %492 = vmatprep.mubr.bf16.mxu0 0
          %493 = vmatmul.mubr.bf16.gmra.mxu0 %v363
          %v494 = vpop.f32.mrf.mxu0
          %v495 = vadd.f32 0.0, %v494
          %v496 = vpop.f32.mrf.mxu0
          %v497 = vpop.f32.mrf.mxu0
          %v498 = vadd.f32 0.0, %v497
          %v499 = vpop.f32.mrf.mxu0
          %500 = vmatprep.mubr.bf16.mxu0 0
          %501 = vmatmul.mubr.bf16.gmra.mxu0 %v366
          %v502 = vpop.f32.mrf.mxu0
          %v503 = vadd.f32 0.0, %v502
          %v504 = vpop.f32.mrf.mxu0
          %v505 = vpop.f32.mrf.mxu0
          %v506 = vadd.f32 0.0, %v505
          %v507 = vpop.f32.mrf.mxu0
          %508 = vmatprep.mubr.bf16.mxu0 0
          %509 = vmatmul.mubr.bf16.gmra.mxu0 %v369
          %v510 = vpop.f32.mrf.mxu0
          %v511 = vadd.f32 0.0, %v510
          %v512 = vpop.f32.mrf.mxu0
          %v513 = vpop.f32.mrf.mxu0
          %v514 = vadd.f32 0.0, %v513
          %v515 = vpop.f32.mrf.mxu0
          %516 = vmatprep.mubr.bf16.mxu0 0
          %517 = vmatmul.mubr.bf16.gmra.mxu0 %v372
          %v518 = vpop.f32.mrf.mxu0
          %v519 = vadd.f32 0.0, %v518
          %v520 = vpop.f32.mrf.mxu0
          %v521 = vpop.f32.mrf.mxu0
          %v522 = vadd.f32 0.0, %v521
          %v523 = vpop.f32.mrf.mxu0
          %524 = vmatprep.mubr.bf16.mxu0 0
          %525 = vmatmul.mubr.bf16.gmra.mxu0 %v375
          %v526 = vpop.f32.mrf.mxu0
          %v527 = vadd.f32 0.0, %v526
          %v528 = vpop.f32.mrf.mxu0
          %v529 = vpop.f32.mrf.mxu0
          %v530 = vadd.f32 0.0, %v529
          %v531 = vpop.f32.mrf.mxu0
          %532 = vmatprep.mubr.bf16.mxu0 0
          %533 = vmatmul.mubr.bf16.gmra.mxu0 %v378
          %v534 = vpop.f32.mrf.mxu0
          %v535 = vadd.f32 0.0, %v534
          %v536 = vpop.f32.mrf.mxu0
          %v537 = vpop.f32.mrf.mxu0
          %v538 = vadd.f32 0.0, %v537
          %v539 = vpop.f32.mrf.mxu0
          %540 = vdwg.mxu0
          %541 = vst [vmem:[#allocation2] sm:$0xff] %v415
          %542 = vst [vmem:[#allocation2 + $0x8] sm:$0xff] %v418
          %543 = vst [vmem:[#allocation2 + $0x10] sm:$0xff] %v423
          %544 = vst [vmem:[#allocation2 + $0x18] sm:$0xff] %v426
          %545 = vst [vmem:[#allocation2 + $0x20] sm:$0xff] %v431
          %546 = vst [vmem:[#allocation2 + $0x28] sm:$0xff] %v434
          %547 = vst [vmem:[#allocation2 + $0x30] sm:$0xff] %v439
          %548 = vst [vmem:[#allocation2 + $0x38] sm:$0xff] %v442
          %549 = vst [vmem:[#allocation2 + $0x40] sm:$0xff] %v447
          %550 = vst [vmem:[#allocation2 + $0x48] sm:$0xff] %v450
          %551 = vst [vmem:[#allocation2 + $0x50] sm:$0xff] %v455
          %552 = vst [vmem:[#allocation2 + $0x58] sm:$0xff] %v458
          %553 = vst [vmem:[#allocation2 + $0x60] sm:$0xff] %v463
          %554 = vst [vmem:[#allocation2 + $0x68] sm:$0xff] %v466
          %555 = vst [vmem:[#allocation2 + $0x70] sm:$0xff] %v471
          %556 = vst [vmem:[#allocation2 + $0x78] sm:$0xff] %v474
          %557 = vst [vmem:[#allocation2 + $0x80] sm:$0xff] %v479
          %558 = vst [vmem:[#allocation2 + $0x88] sm:$0xff] %v482
          %559 = vst [vmem:[#allocation2 + $0x90] sm:$0xff] %v487
          %560 = vst [vmem:[#allocation2 + $0x98] sm:$0xff] %v490
          %561 = vst [vmem:[#allocation2 + $0xa0] sm:$0xff] %v495
          %562 = vst [vmem:[#allocation2 + $0xa8] sm:$0xff] %v498
          %563 = vst [vmem:[#allocation2 + $0xb0] sm:$0xff] %v503
          %564 = vst [vmem:[#allocation2 + $0xb8] sm:$0xff] %v506
          %565 = vst [vmem:[#allocation2 + $0xc0] sm:$0xff] %v511
          %566 = vst [vmem:[#allocation2 + $0xc8] sm:$0xff] %v514
          %567 = vst [vmem:[#allocation2 + $0xd0] sm:$0xff] %v519
          %568 = vst [vmem:[#allocation2 + $0xd8] sm:$0xff] %v522
          %569 = vst [vmem:[#allocation2 + $0xe0] sm:$0xff] %v527
          %570 = vst [vmem:[#allocation2 + $0xe8] sm:$0xff] %v530
          %571 = vst [vmem:[#allocation2 + $0xf0] sm:$0xff] %v535
          %572 = vst [vmem:[#allocation2 + $0xf8] sm:$0xff] %v538
        $region36: #{drn_multifield_max_forward.3} parent=31 // pred_fallthru
          _
        %v573 = vld [vmem:[%s203] sm:$0xff]
        %v574 = vld [vmem:[%s203 + $0x8] sm:$0xff]
        %v575 = vld [vmem:[%s203 + $0x10] sm:$0xff]
        %v576 = vld [vmem:[%s203 + $0x18] sm:$0xff]
        %v577 = vld [vmem:[%s203 + $0x20] sm:$0xff]
        %v578 = vld [vmem:[%s203 + $0x28] sm:$0xff]
        %v579 = vld [vmem:[%s203 + $0x30] sm:$0xff]
        %v580 = vld [vmem:[%s203 + $0x38] sm:$0xff]
        %v581 = vld [vmem:[%s203 + $0x40] sm:$0xff]
        %v582 = vld [vmem:[%s203 + $0x48] sm:$0xff]
        %v583 = vld [vmem:[%s203 + $0x50] sm:$0xff]
        %v584 = vld [vmem:[%s203 + $0x58] sm:$0xff]
        %v585 = vld [vmem:[%s203 + $0x60] sm:$0xff]
        %v586 = vld [vmem:[%s203 + $0x68] sm:$0xff]
        %v587 = vld [vmem:[%s203 + $0x70] sm:$0xff]
        %v588 = vld [vmem:[%s203 + $0x78] sm:$0xff]
        %s589 = scalar_lea.vmem [#allocation2], 192
        %v590 = vld [vmem:[%s589] sm:$0xff]
        %v591 = vld [vmem:[%s589 + $0x8] sm:$0xff]
        %vm592 = vcmask 130048
        %v594 = vsel %vm592, %v573, 0
        %v597 = vsel %vm592, %v574, 0
        %v600 = vsel %vm592, %v575, 0
        %v603 = vsel %vm592, %v576, 0
        %v606 = vsel %vm592, %v577, 0
        %v609 = vsel %vm592, %v578, 0
        %v612 = vsel %vm592, %v579, 0
        %v615 = vsel %vm592, %v580, 0
        %v618 = vsel %vm592, %v581, 0
        %v621 = vsel %vm592, %v582, 0
        %v624 = vsel %vm592, %v583, 0
        %v627 = vsel %vm592, %v584, 0
        %v630 = vsel %vm592, %v585, 0
        %v633 = vsel %vm592, %v586, 0
        %v636 = vsel %vm592, %v587, 0
        %v639 = vsel %vm592, %v588, 0
        %641 = vmatprep.subr.mxu0 0.0
        %642 = vmatpush1.msra.mxu0 0.0
        %643 = vmatprep.subr.mxu0 0.0
        %644 = vmatpush1.msra.mxu0 0.0
        %645 = vmatprep.subr.mxu0 0.0
        %646 = vmatpush1.msra.mxu0 0.0
        %647 = vmatprep.subr.mxu0 0.0
        %648 = vmatpush1.msra.mxu0 0.0
        %649 = vmatprep.subr.mxu0 0.0
        %650 = vmatpush1.msra.mxu0 0.0
        %651 = vmatprep.subr.mxu0 0.0
        %652 = vmatpush1.msra.mxu0 0.0
        %653 = vmatprep.subr.mxu0 0.0
        %654 = vmatpush1.msra.mxu0 0.0
        %655 = vmatprep.subr.mxu0 0.0
        %656 = vmatpush1.msra.mxu0 0.0
        %657 = vmatprep.subr.mxu0 0.0
        %658 = vmatpush1.msra.mxu0 0.0
        %659 = vmatprep.subr.mxu0 0.0
        %660 = vmatpush1.msra.mxu0 0.0
        %661 = vmatprep.subr.mxu0 0.0
        %662 = vmatpush1.msra.mxu0 0.0
        %663 = vmatprep.subr.mxu0 0.0
        %664 = vmatpush1.msra.mxu0 0.0
        %665 = vmatprep.subr.mxu0 0.0
        %666 = vmatpush1.msra.mxu0 0.0
        %667 = vmatprep.subr.mxu0 0.0
        %668 = vmatpush1.msra.mxu0 0.0
        %669 = vmatprep.subr.mxu0 0.0
        %670 = vmatpush1.msra.mxu0 %v591
        %671 = vmatprep.subr.mxu0 0.0
        %672 = vmatpush1.msra.mxu0 %v590
        %673 = vmatprep.subr.mxu0 0.0
        %674 = vmatpush2.msra.mxu0 0.0
        %675 = vmatprep.subr.mxu0 0.0
        %676 = vmatpush2.msra.mxu0 0.0
        %677 = vmatprep.subr.mxu0 0.0
        %678 = vmatpush2.msra.mxu0 0.0
        %679 = vmatprep.subr.mxu0 0.0
        %680 = vmatpush2.msra.mxu0 0.0
        %681 = vmatprep.subr.mxu0 0.0
        %682 = vmatpush2.msra.mxu0 0.0
        %683 = vmatprep.subr.mxu0 0.0
        %684 = vmatpush2.msra.mxu0 0.0
        %685 = vmatprep.subr.mxu0 0.0
        %686 = vmatpush2.msra.mxu0 0.0
        %687 = vmatprep.subr.mxu0 0.0
        %688 = vmatpush2.msra.mxu0 0.0
        %689 = vmatprep.subr.mxu0 0.0
        %690 = vmatpush2.msra.mxu0 0.0
        %691 = vmatprep.subr.mxu0 0.0
        %692 = vmatpush2.msra.mxu0 0.0
        %693 = vmatprep.subr.mxu0 0.0
        %694 = vmatpush2.msra.mxu0 0.0
        %695 = vmatprep.subr.mxu0 0.0
        %696 = vmatpush2.msra.mxu0 0.0
        %697 = vmatprep.subr.mxu0 0.0
        %698 = vmatpush2.msra.mxu0 0.0
        %699 = vmatprep.subr.mxu0 0.0
        %700 = vmatpush2.msra.mxu0 0.0
        %701 = vmatprep.subr.mxu0 0.0
        %702 = vmatpush2.msra.mxu0 0.0
        %703 = vmatprep.subr.mxu0 0.0
        %704 = vmatpush2.msra.mxu0 0.0
        %705 = vmatprep.mubr.f32.mxu0 0.0
        %706 = vmatmul.mubr.f32.gmra.mxu0 %v594
        %v707 = vpop.f32.mrf.mxu0
        %v708 = vadd.f32 0.0, %v707
        %v709 = vpop.f32.mrf.mxu0
        %710 = vmatprep.mubr.f32.mxu0 0.0
        %711 = vmatmul.mubr.f32.gmra.mxu0 %v597
        %v712 = vpop.f32.mrf.mxu0
        %v713 = vadd.f32 0.0, %v712
        %v714 = vpop.f32.mrf.mxu0
        %715 = vmatprep.mubr.f32.mxu0 0.0
        %716 = vmatmul.mubr.f32.gmra.mxu0 %v600
        %v717 = vpop.f32.mrf.mxu0
        %v718 = vadd.f32 0.0, %v717
        %v719 = vpop.f32.mrf.mxu0
        %720 = vmatprep.mubr.f32.mxu0 0.0
        %721 = vmatmul.mubr.f32.gmra.mxu0 %v603
        %v722 = vpop.f32.mrf.mxu0
        %v723 = vadd.f32 0.0, %v722
        %v724 = vpop.f32.mrf.mxu0
        %725 = vmatprep.mubr.f32.mxu0 0.0
        %726 = vmatmul.mubr.f32.gmra.mxu0 %v606
        %v727 = vpop.f32.mrf.mxu0
        %v728 = vadd.f32 0.0, %v727
        %v729 = vpop.f32.mrf.mxu0
        %730 = vmatprep.mubr.f32.mxu0 0.0
        %731 = vmatmul.mubr.f32.gmra.mxu0 %v609
        %v732 = vpop.f32.mrf.mxu0
        %v733 = vadd.f32 0.0, %v732
        %v734 = vpop.f32.mrf.mxu0
        %735 = vmatprep.mubr.f32.mxu0 0.0
        %736 = vmatmul.mubr.f32.gmra.mxu0 %v612
        %v737 = vpop.f32.mrf.mxu0
        %v738 = vadd.f32 0.0, %v737
        %v739 = vpop.f32.mrf.mxu0
        %740 = vmatprep.mubr.f32.mxu0 0.0
        %741 = vmatmul.mubr.f32.gmra.mxu0 %v615
        %v742 = vpop.f32.mrf.mxu0
        %v743 = vadd.f32 0.0, %v742
        %v744 = vpop.f32.mrf.mxu0
        %745 = vmatprep.mubr.f32.mxu0 0.0
        %746 = vmatmul.mubr.f32.gmra.mxu0 %v618
        %v747 = vpop.f32.mrf.mxu0
        %v748 = vadd.f32 0.0, %v747
        %v749 = vpop.f32.mrf.mxu0
        %750 = vmatprep.mubr.f32.mxu0 0.0
        %751 = vmatmul.mubr.f32.gmra.mxu0 %v621
        %v752 = vpop.f32.mrf.mxu0
        %v753 = vadd.f32 0.0, %v752
        %v754 = vpop.f32.mrf.mxu0
        %755 = vmatprep.mubr.f32.mxu0 0.0
        %756 = vmatmul.mubr.f32.gmra.mxu0 %v624
        %v757 = vpop.f32.mrf.mxu0
        %v758 = vadd.f32 0.0, %v757
        %v759 = vpop.f32.mrf.mxu0
        %760 = vmatprep.mubr.f32.mxu0 0.0
        %761 = vmatmul.mubr.f32.gmra.mxu0 %v627
        %v762 = vpop.f32.mrf.mxu0
        %v763 = vadd.f32 0.0, %v762
        %v764 = vpop.f32.mrf.mxu0
        %765 = vmatprep.mubr.f32.mxu0 0.0
        %766 = vmatmul.mubr.f32.gmra.mxu0 %v630
        %v767 = vpop.f32.mrf.mxu0
        %v768 = vadd.f32 0.0, %v767
        %v769 = vpop.f32.mrf.mxu0
        %770 = vmatprep.mubr.f32.mxu0 0.0
        %771 = vmatmul.mubr.f32.gmra.mxu0 %v633
        %v772 = vpop.f32.mrf.mxu0
        %v773 = vadd.f32 0.0, %v772
        %v774 = vpop.f32.mrf.mxu0
        %775 = vmatprep.mubr.f32.mxu0 0.0
        %776 = vmatmul.mubr.f32.gmra.mxu0 %v636
        %v777 = vpop.f32.mrf.mxu0
        %v778 = vadd.f32 0.0, %v777
        %v779 = vpop.f32.mrf.mxu0
        %780 = vmatprep.mubr.f32.mxu0 0.0
        %781 = vmatmul.mubr.f32.gmra.mxu0 %v639
        %v782 = vpop.f32.mrf.mxu0
        %v783 = vadd.f32 0.0, %v782
        %v784 = vpop.f32.mrf.mxu0
        %785 = vdwg.mxu0
        %s786 = scalar_lea.vmem [#allocation2], 64
        %v787 = vld [vmem:[%s786] sm:$0xff]
        %v788 = vld [vmem:[%s786 + $0x8] sm:$0xff]
        %789 = vmatprep.subr.mxu0 0.0
        %790 = vmatpush1.msra.mxu0 0.0
        %791 = vmatprep.subr.mxu0 0.0
        %792 = vmatpush1.msra.mxu0 0.0
        %793 = vmatprep.subr.mxu0 0.0
        %794 = vmatpush1.msra.mxu0 0.0
        %795 = vmatprep.subr.mxu0 0.0
        %796 = vmatpush1.msra.mxu0 0.0
        %797 = vmatprep.subr.mxu0 0.0
        %798 = vmatpush1.msra.mxu0 0.0
        %799 = vmatprep.subr.mxu0 0.0
        %800 = vmatpush1.msra.mxu0 0.0
        %801 = vmatprep.subr.mxu0 0.0
        %802 = vmatpush1.msra.mxu0 0.0
        %803 = vmatprep.subr.mxu0 0.0
        %804 = vmatpush1.msra.mxu0 0.0
        %805 = vmatprep.subr.mxu0 0.0
        %806 = vmatpush1.msra.mxu0 0.0
        %807 = vmatprep.subr.mxu0 0.0
        %808 = vmatpush1.msra.mxu0 0.0
        %809 = vmatprep.subr.mxu0 0.0
        %810 = vmatpush1.msra.mxu0 0.0
        %811 = vmatprep.subr.mxu0 0.0
        %812 = vmatpush1.msra.mxu0 0.0
        %813 = vmatprep.subr.mxu0 0.0
        %814 = vmatpush1.msra.mxu0 0.0
        %815 = vmatprep.subr.mxu0 0.0
        %816 = vmatpush1.msra.mxu0 0.0
        %817 = vmatprep.subr.mxu0 0.0
        %818 = vmatpush1.msra.mxu0 %v788
        %819 = vmatprep.subr.mxu0 0.0
        %820 = vmatpush1.msra.mxu0 %v787
        %821 = vmatprep.subr.mxu0 0.0
        %822 = vmatpush2.msra.mxu0 0.0
        %823 = vmatprep.subr.mxu0 0.0
        %824 = vmatpush2.msra.mxu0 0.0
        %825 = vmatprep.subr.mxu0 0.0
        %826 = vmatpush2.msra.mxu0 0.0
        %827 = vmatprep.subr.mxu0 0.0
        %828 = vmatpush2.msra.mxu0 0.0
        %829 = vmatprep.subr.mxu0 0.0
        %830 = vmatpush2.msra.mxu0 0.0
        %831 = vmatprep.subr.mxu0 0.0
        %832 = vmatpush2.msra.mxu0 0.0
        %833 = vmatprep.subr.mxu0 0.0
        %834 = vmatpush2.msra.mxu0 0.0
        %835 = vmatprep.subr.mxu0 0.0
        %836 = vmatpush2.msra.mxu0 0.0
        %837 = vmatprep.subr.mxu0 0.0
        %838 = vmatpush2.msra.mxu0 0.0
        %839 = vmatprep.subr.mxu0 0.0
        %840 = vmatpush2.msra.mxu0 0.0
        %841 = vmatprep.subr.mxu0 0.0
        %842 = vmatpush2.msra.mxu0 0.0
        %843 = vmatprep.subr.mxu0 0.0
        %844 = vmatpush2.msra.mxu0 0.0
        %845 = vmatprep.subr.mxu0 0.0
        %846 = vmatpush2.msra.mxu0 0.0
        %847 = vmatprep.subr.mxu0 0.0
        %848 = vmatpush2.msra.mxu0 0.0
        %849 = vmatprep.subr.mxu0 0.0
        %850 = vmatpush2.msra.mxu0 0.0
        %851 = vmatprep.subr.mxu0 0.0
        %852 = vmatpush2.msra.mxu0 0.0
        %853 = vmatprep.mubr.f32.mxu0 0.0
        %854 = vmatmul.mubr.f32.gmra.mxu0 %v594
        %v855 = vpop.f32.mrf.mxu0
        %v856 = vadd.f32 0.0, %v855
        %v857 = vpop.f32.mrf.mxu0
        %858 = vmatprep.mubr.f32.mxu0 0.0
        %859 = vmatmul.mubr.f32.gmra.mxu0 %v597
        %v860 = vpop.f32.mrf.mxu0
        %v861 = vadd.f32 0.0, %v860
        %v862 = vpop.f32.mrf.mxu0
        %863 = vmatprep.mubr.f32.mxu0 0.0
        %864 = vmatmul.mubr.f32.gmra.mxu0 %v600
        %v865 = vpop.f32.mrf.mxu0
        %v866 = vadd.f32 0.0, %v865
        %v867 = vpop.f32.mrf.mxu0
        %868 = vmatprep.mubr.f32.mxu0 0.0
        %869 = vmatmul.mubr.f32.gmra.mxu0 %v603
        %v870 = vpop.f32.mrf.mxu0
        %v871 = vadd.f32 0.0, %v870
        %v872 = vpop.f32.mrf.mxu0
        %873 = vmatprep.mubr.f32.mxu0 0.0
        %874 = vmatmul.mubr.f32.gmra.mxu0 %v606
        %v875 = vpop.f32.mrf.mxu0
        %v876 = vadd.f32 0.0, %v875
        %v877 = vpop.f32.mrf.mxu0
        %878 = vmatprep.mubr.f32.mxu0 0.0
        %879 = vmatmul.mubr.f32.gmra.mxu0 %v609
        %v880 = vpop.f32.mrf.mxu0
        %v881 = vadd.f32 0.0, %v880
        %v882 = vpop.f32.mrf.mxu0
        %883 = vmatprep.mubr.f32.mxu0 0.0
        %884 = vmatmul.mubr.f32.gmra.mxu0 %v612
        %v885 = vpop.f32.mrf.mxu0
        %v886 = vadd.f32 0.0, %v885
        %v887 = vpop.f32.mrf.mxu0
        %888 = vmatprep.mubr.f32.mxu0 0.0
        %889 = vmatmul.mubr.f32.gmra.mxu0 %v615
        %v890 = vpop.f32.mrf.mxu0
        %v891 = vadd.f32 0.0, %v890
        %v892 = vpop.f32.mrf.mxu0
        %893 = vmatprep.mubr.f32.mxu0 0.0
        %894 = vmatmul.mubr.f32.gmra.mxu0 %v618
        %v895 = vpop.f32.mrf.mxu0
        %v896 = vadd.f32 0.0, %v895
        %v897 = vpop.f32.mrf.mxu0
        %898 = vmatprep.mubr.f32.mxu0 0.0
        %899 = vmatmul.mubr.f32.gmra.mxu0 %v621
        %v900 = vpop.f32.mrf.mxu0
        %v901 = vadd.f32 0.0, %v900
        %v902 = vpop.f32.mrf.mxu0
        %903 = vmatprep.mubr.f32.mxu0 0.0
        %904 = vmatmul.mubr.f32.gmra.mxu0 %v624
        %v905 = vpop.f32.mrf.mxu0
        %v906 = vadd.f32 0.0, %v905
        %v907 = vpop.f32.mrf.mxu0
        %908 = vmatprep.mubr.f32.mxu0 0.0
        %909 = vmatmul.mubr.f32.gmra.mxu0 %v627
        %v910 = vpop.f32.mrf.mxu0
        %v911 = vadd.f32 0.0, %v910
        %v912 = vpop.f32.mrf.mxu0
        %913 = vmatprep.mubr.f32.mxu0 0.0
        %914 = vmatmul.mubr.f32.gmra.mxu0 %v630
        %v915 = vpop.f32.mrf.mxu0
        %v916 = vadd.f32 0.0, %v915
        %v917 = vpop.f32.mrf.mxu0
        %918 = vmatprep.mubr.f32.mxu0 0.0
        %919 = vmatmul.mubr.f32.gmra.mxu0 %v633
        %v920 = vpop.f32.mrf.mxu0
        %v921 = vadd.f32 0.0, %v920
        %v922 = vpop.f32.mrf.mxu0
        %923 = vmatprep.mubr.f32.mxu0 0.0
        %924 = vmatmul.mubr.f32.gmra.mxu0 %v636
        %v925 = vpop.f32.mrf.mxu0
        %v926 = vadd.f32 0.0, %v925
        %v927 = vpop.f32.mrf.mxu0
        %928 = vmatprep.mubr.f32.mxu0 0.0
        %929 = vmatmul.mubr.f32.gmra.mxu0 %v639
        %v930 = vpop.f32.mrf.mxu0
        %v931 = vadd.f32 0.0, %v930
        %v932 = vpop.f32.mrf.mxu0
        %933 = vdwg.mxu0
        %s934 = scalar_lea.vmem [#allocation2], 128
        %v935 = vld [vmem:[%s934] sm:$0xff]
        %v936 = vld [vmem:[%s934 + $0x8] sm:$0xff]
        %937 = vmatprep.subr.mxu0 0.0
        %938 = vmatpush1.msra.mxu0 0.0
        %939 = vmatprep.subr.mxu0 0.0
        %940 = vmatpush1.msra.mxu0 0.0
        %941 = vmatprep.subr.mxu0 0.0
        %942 = vmatpush1.msra.mxu0 0.0
        %943 = vmatprep.subr.mxu0 0.0
        %944 = vmatpush1.msra.mxu0 0.0
        %945 = vmatprep.subr.mxu0 0.0
        %946 = vmatpush1.msra.mxu0 0.0
        %947 = vmatprep.subr.mxu0 0.0
        %948 = vmatpush1.msra.mxu0 0.0
        %949 = vmatprep.subr.mxu0 0.0
        %950 = vmatpush1.msra.mxu0 0.0
        %951 = vmatprep.subr.mxu0 0.0
        %952 = vmatpush1.msra.mxu0 0.0
        %953 = vmatprep.subr.mxu0 0.0
        %954 = vmatpush1.msra.mxu0 0.0
        %955 = vmatprep.subr.mxu0 0.0
        %956 = vmatpush1.msra.mxu0 0.0
        %957 = vmatprep.subr.mxu0 0.0
        %958 = vmatpush1.msra.mxu0 0.0
        %959 = vmatprep.subr.mxu0 0.0
        %960 = vmatpush1.msra.mxu0 0.0
        %961 = vmatprep.subr.mxu0 0.0
        %962 = vmatpush1.msra.mxu0 0.0
        %963 = vmatprep.subr.mxu0 0.0
        %964 = vmatpush1.msra.mxu0 0.0
        %965 = vmatprep.subr.mxu0 0.0
        %966 = vmatpush1.msra.mxu0 %v936
        %967 = vmatprep.subr.mxu0 0.0
        %968 = vmatpush1.msra.mxu0 %v935
        %969 = vmatprep.subr.mxu0 0.0
        %970 = vmatpush2.msra.mxu0 0.0
        %971 = vmatprep.subr.mxu0 0.0
        %972 = vmatpush2.msra.mxu0 0.0
        %973 = vmatprep.subr.mxu0 0.0
        %974 = vmatpush2.msra.mxu0 0.0
        %975 = vmatprep.subr.mxu0 0.0
        %976 = vmatpush2.msra.mxu0 0.0
        %977 = vmatprep.subr.mxu0 0.0
        %978 = vmatpush2.msra.mxu0 0.0
        %979 = vmatprep.subr.mxu0 0.0
        %980 = vmatpush2.msra.mxu0 0.0
        %981 = vmatprep.subr.mxu0 0.0
        %982 = vmatpush2.msra.mxu0 0.0
        %983 = vmatprep.subr.mxu0 0.0
        %984 = vmatpush2.msra.mxu0 0.0
        %985 = vmatprep.subr.mxu0 0.0
        %986 = vmatpush2.msra.mxu0 0.0
        %987 = vmatprep.subr.mxu0 0.0
        %988 = vmatpush2.msra.mxu0 0.0
        %989 = vmatprep.subr.mxu0 0.0
        %990 = vmatpush2.msra.mxu0 0.0
        %991 = vmatprep.subr.mxu0 0.0
        %992 = vmatpush2.msra.mxu0 0.0
        %993 = vmatprep.subr.mxu0 0.0
        %994 = vmatpush2.msra.mxu0 0.0
        %995 = vmatprep.subr.mxu0 0.0
        %996 = vmatpush2.msra.mxu0 0.0
        %997 = vmatprep.subr.mxu0 0.0
        %998 = vmatpush2.msra.mxu0 0.0
        %999 = vmatprep.subr.mxu0 0.0
        %1000 = vmatpush2.msra.mxu0 0.0
        %1001 = vmatprep.mubr.f32.mxu0 0.0
        %1002 = vmatmul.mubr.f32.gmra.mxu0 %v594
        %v1003 = vpop.f32.mrf.mxu0
        %v1004 = vadd.f32 0.0, %v1003
        %v1005 = vpop.f32.mrf.mxu0
        %1006 = vmatprep.mubr.f32.mxu0 0.0
        %1007 = vmatmul.mubr.f32.gmra.mxu0 %v597
        %v1008 = vpop.f32.mrf.mxu0
        %v1009 = vadd.f32 0.0, %v1008
        %v1010 = vpop.f32.mrf.mxu0
        %1011 = vmatprep.mubr.f32.mxu0 0.0
        %1012 = vmatmul.mubr.f32.gmra.mxu0 %v600
        %v1013 = vpop.f32.mrf.mxu0
        %v1014 = vadd.f32 0.0, %v1013
        %v1015 = vpop.f32.mrf.mxu0
        %1016 = vmatprep.mubr.f32.mxu0 0.0
        %1017 = vmatmul.mubr.f32.gmra.mxu0 %v603
        %v1018 = vpop.f32.mrf.mxu0
        %v1019 = vadd.f32 0.0, %v1018
        %v1020 = vpop.f32.mrf.mxu0
        %1021 = vmatprep.mubr.f32.mxu0 0.0
        %1022 = vmatmul.mubr.f32.gmra.mxu0 %v606
        %v1023 = vpop.f32.mrf.mxu0
        %v1024 = vadd.f32 0.0, %v1023
        %v1025 = vpop.f32.mrf.mxu0
        %1026 = vmatprep.mubr.f32.mxu0 0.0
        %1027 = vmatmul.mubr.f32.gmra.mxu0 %v609
        %v1028 = vpop.f32.mrf.mxu0
        %v1029 = vadd.f32 0.0, %v1028
        %v1030 = vpop.f32.mrf.mxu0
        %1031 = vmatprep.mubr.f32.mxu0 0.0
        %1032 = vmatmul.mubr.f32.gmra.mxu0 %v612
        %v1033 = vpop.f32.mrf.mxu0
        %v1034 = vadd.f32 0.0, %v1033
        %v1035 = vpop.f32.mrf.mxu0
        %1036 = vmatprep.mubr.f32.mxu0 0.0
        %1037 = vmatmul.mubr.f32.gmra.mxu0 %v615
        %v1038 = vpop.f32.mrf.mxu0
        %v1039 = vadd.f32 0.0, %v1038
        %v1040 = vpop.f32.mrf.mxu0
        %1041 = vmatprep.mubr.f32.mxu0 0.0
        %1042 = vmatmul.mubr.f32.gmra.mxu0 %v618
        %v1043 = vpop.f32.mrf.mxu0
        %v1044 = vadd.f32 0.0, %v1043
        %v1045 = vpop.f32.mrf.mxu0
        %1046 = vmatprep.mubr.f32.mxu0 0.0
        %1047 = vmatmul.mubr.f32.gmra.mxu0 %v621
        %v1048 = vpop.f32.mrf.mxu0
        %v1049 = vadd.f32 0.0, %v1048
        %v1050 = vpop.f32.mrf.mxu0
        %1051 = vmatprep.mubr.f32.mxu0 0.0
        %1052 = vmatmul.mubr.f32.gmra.mxu0 %v624
        %v1053 = vpop.f32.mrf.mxu0
        %v1054 = vadd.f32 0.0, %v1053
        %v1055 = vpop.f32.mrf.mxu0
        %1056 = vmatprep.mubr.f32.mxu0 0.0
        %1057 = vmatmul.mubr.f32.gmra.mxu0 %v627
        %v1058 = vpop.f32.mrf.mxu0
        %v1059 = vadd.f32 0.0, %v1058
        %v1060 = vpop.f32.mrf.mxu0
        %1061 = vmatprep.mubr.f32.mxu0 0.0
        %1062 = vmatmul.mubr.f32.gmra.mxu0 %v630
        %v1063 = vpop.f32.mrf.mxu0
        %v1064 = vadd.f32 0.0, %v1063
        %v1065 = vpop.f32.mrf.mxu0
        %1066 = vmatprep.mubr.f32.mxu0 0.0
        %1067 = vmatmul.mubr.f32.gmra.mxu0 %v633
        %v1068 = vpop.f32.mrf.mxu0
        %v1069 = vadd.f32 0.0, %v1068
        %v1070 = vpop.f32.mrf.mxu0
        %1071 = vmatprep.mubr.f32.mxu0 0.0
        %1072 = vmatmul.mubr.f32.gmra.mxu0 %v636
        %v1073 = vpop.f32.mrf.mxu0
        %v1074 = vadd.f32 0.0, %v1073
        %v1075 = vpop.f32.mrf.mxu0
        %1076 = vmatprep.mubr.f32.mxu0 0.0
        %1077 = vmatmul.mubr.f32.gmra.mxu0 %v639
        %v1078 = vpop.f32.mrf.mxu0
        %v1079 = vadd.f32 0.0, %v1078
        %v1080 = vpop.f32.mrf.mxu0
        %1081 = vdwg.mxu0
        %s1082 = scalar_lea.vmem [#allocation2], 208
        %v1083 = vld [vmem:[%s1082] sm:$0xff]
        %v1084 = vld [vmem:[%s1082 + $0x8] sm:$0xff]
        %1085 = vmatprep.subr.mxu0 0.0
        %1086 = vmatpush1.msra.mxu0 0.0
        %1087 = vmatprep.subr.mxu0 0.0
        %1088 = vmatpush1.msra.mxu0 0.0
        %1089 = vmatprep.subr.mxu0 0.0
        %1090 = vmatpush1.msra.mxu0 0.0
        %1091 = vmatprep.subr.mxu0 0.0
        %1092 = vmatpush1.msra.mxu0 0.0
        %1093 = vmatprep.subr.mxu0 0.0
        %1094 = vmatpush1.msra.mxu0 0.0
        %1095 = vmatprep.subr.mxu0 0.0
        %1096 = vmatpush1.msra.mxu0 0.0
        %1097 = vmatprep.subr.mxu0 0.0
        %1098 = vmatpush1.msra.mxu0 0.0
        %1099 = vmatprep.subr.mxu0 0.0
        %1100 = vmatpush1.msra.mxu0 0.0
        %1101 = vmatprep.subr.mxu0 0.0
        %1102 = vmatpush1.msra.mxu0 0.0
        %1103 = vmatprep.subr.mxu0 0.0
        %1104 = vmatpush1.msra.mxu0 0.0
        %1105 = vmatprep.subr.mxu0 0.0
        %1106 = vmatpush1.msra.mxu0 0.0
        %1107 = vmatprep.subr.mxu0 0.0
        %1108 = vmatpush1.msra.mxu0 0.0
        %1109 = vmatprep.subr.mxu0 0.0
        %1110 = vmatpush1.msra.mxu0 0.0
        %1111 = vmatprep.subr.mxu0 0.0
        %1112 = vmatpush1.msra.mxu0 0.0
        %1113 = vmatprep.subr.mxu0 0.0
        %1114 = vmatpush1.msra.mxu0 %v1084
        %1115 = vmatprep.subr.mxu0 0.0
        %1116 = vmatpush1.msra.mxu0 %v1083
        %1117 = vmatprep.subr.mxu0 0.0
        %1118 = vmatpush2.msra.mxu0 0.0
        %1119 = vmatprep.subr.mxu0 0.0
        %1120 = vmatpush2.msra.mxu0 0.0
        %1121 = vmatprep.subr.mxu0 0.0
        %1122 = vmatpush2.msra.mxu0 0.0
        %1123 = vmatprep.subr.mxu0 0.0
        %1124 = vmatpush2.msra.mxu0 0.0
        %1125 = vmatprep.subr.mxu0 0.0
        %1126 = vmatpush2.msra.mxu0 0.0
        %1127 = vmatprep.subr.mxu0 0.0
        %1128 = vmatpush2.msra.mxu0 0.0
        %1129 = vmatprep.subr.mxu0 0.0
        %1130 = vmatpush2.msra.mxu0 0.0
        %1131 = vmatprep.subr.mxu0 0.0
        %1132 = vmatpush2.msra.mxu0 0.0
        %1133 = vmatprep.subr.mxu0 0.0
        %1134 = vmatpush2.msra.mxu0 0.0
        %1135 = vmatprep.subr.mxu0 0.0
        %1136 = vmatpush2.msra.mxu0 0.0
        %1137 = vmatprep.subr.mxu0 0.0
        %1138 = vmatpush2.msra.mxu0 0.0
        %1139 = vmatprep.subr.mxu0 0.0
        %1140 = vmatpush2.msra.mxu0 0.0
        %1141 = vmatprep.subr.mxu0 0.0
        %1142 = vmatpush2.msra.mxu0 0.0
        %1143 = vmatprep.subr.mxu0 0.0
        %1144 = vmatpush2.msra.mxu0 0.0
        %1145 = vmatprep.subr.mxu0 0.0
        %1146 = vmatpush2.msra.mxu0 0.0
        %1147 = vmatprep.subr.mxu0 0.0
        %1148 = vmatpush2.msra.mxu0 0.0
        %1149 = vmatprep.mubr.f32.mxu0 0.0
        %1150 = vmatmul.mubr.f32.gmra.mxu0 %v594
        %v1151 = vpop.f32.mrf.mxu0
        %v1152 = vadd.f32 0.0, %v1151
        %v1153 = vpop.f32.mrf.mxu0
        %1154 = vmatprep.mubr.f32.mxu0 0.0
        %1155 = vmatmul.mubr.f32.gmra.mxu0 %v597
        %v1156 = vpop.f32.mrf.mxu0
        %v1157 = vadd.f32 0.0, %v1156
        %v1158 = vpop.f32.mrf.mxu0
        %1159 = vmatprep.mubr.f32.mxu0 0.0
        %1160 = vmatmul.mubr.f32.gmra.mxu0 %v600
        %v1161 = vpop.f32.mrf.mxu0
        %v1162 = vadd.f32 0.0, %v1161
        %v1163 = vpop.f32.mrf.mxu0
        %1164 = vmatprep.mubr.f32.mxu0 0.0
        %1165 = vmatmul.mubr.f32.gmra.mxu0 %v603
        %v1166 = vpop.f32.mrf.mxu0
        %v1167 = vadd.f32 0.0, %v1166
        %v1168 = vpop.f32.mrf.mxu0
        %1169 = vmatprep.mubr.f32.mxu0 0.0
        %1170 = vmatmul.mubr.f32.gmra.mxu0 %v606
        %v1171 = vpop.f32.mrf.mxu0
        %v1172 = vadd.f32 0.0, %v1171
        %v1173 = vpop.f32.mrf.mxu0
        %1174 = vmatprep.mubr.f32.mxu0 0.0
        %1175 = vmatmul.mubr.f32.gmra.mxu0 %v609
        %v1176 = vpop.f32.mrf.mxu0
        %v1177 = vadd.f32 0.0, %v1176
        %v1178 = vpop.f32.mrf.mxu0
        %1179 = vmatprep.mubr.f32.mxu0 0.0
        %1180 = vmatmul.mubr.f32.gmra.mxu0 %v612
        %v1181 = vpop.f32.mrf.mxu0
        %v1182 = vadd.f32 0.0, %v1181
        %v1183 = vpop.f32.mrf.mxu0
        %1184 = vmatprep.mubr.f32.mxu0 0.0
        %1185 = vmatmul.mubr.f32.gmra.mxu0 %v615
        %v1186 = vpop.f32.mrf.mxu0
        %v1187 = vadd.f32 0.0, %v1186
        %v1188 = vpop.f32.mrf.mxu0
        %1189 = vmatprep.mubr.f32.mxu0 0.0
        %1190 = vmatmul.mubr.f32.gmra.mxu0 %v618
        %v1191 = vpop.f32.mrf.mxu0
        %v1192 = vadd.f32 0.0, %v1191
        %v1193 = vpop.f32.mrf.mxu0
        %1194 = vmatprep.mubr.f32.mxu0 0.0
        %1195 = vmatmul.mubr.f32.gmra.mxu0 %v621
        %v1196 = vpop.f32.mrf.mxu0
        %v1197 = vadd.f32 0.0, %v1196
        %v1198 = vpop.f32.mrf.mxu0
        %1199 = vmatprep.mubr.f32.mxu0 0.0
        %1200 = vmatmul.mubr.f32.gmra.mxu0 %v624
        %v1201 = vpop.f32.mrf.mxu0
        %v1202 = vadd.f32 0.0, %v1201
        %v1203 = vpop.f32.mrf.mxu0
        %1204 = vmatprep.mubr.f32.mxu0 0.0
        %1205 = vmatmul.mubr.f32.gmra.mxu0 %v627
        %v1206 = vpop.f32.mrf.mxu0
        %v1207 = vadd.f32 0.0, %v1206
        %v1208 = vpop.f32.mrf.mxu0
        %1209 = vmatprep.mubr.f32.mxu0 0.0
        %1210 = vmatmul.mubr.f32.gmra.mxu0 %v630
        %v1211 = vpop.f32.mrf.mxu0
        %v1212 = vadd.f32 0.0, %v1211
        %v1213 = vpop.f32.mrf.mxu0
        %1214 = vmatprep.mubr.f32.mxu0 0.0
        %1215 = vmatmul.mubr.f32.gmra.mxu0 %v633
        %v1216 = vpop.f32.mrf.mxu0
        %v1217 = vadd.f32 0.0, %v1216
        %v1218 = vpop.f32.mrf.mxu0
        %1219 = vmatprep.mubr.f32.mxu0 0.0
        %1220 = vmatmul.mubr.f32.gmra.mxu0 %v636
        %v1221 = vpop.f32.mrf.mxu0
        %v1222 = vadd.f32 0.0, %v1221
        %v1223 = vpop.f32.mrf.mxu0
        %1224 = vmatprep.mubr.f32.mxu0 0.0
        %1225 = vmatmul.mubr.f32.gmra.mxu0 %v639
        %v1226 = vpop.f32.mrf.mxu0
        %v1227 = vadd.f32 0.0, %v1226
        %v1228 = vpop.f32.mrf.mxu0
        %1229 = vdwg.mxu0
        %vm1230 = vcmp.gt.f32.partialorder %v1152, %v708
        %vm1231 = vcmp.gt.f32.partialorder %v1157, %v713
        %vm1232 = vcmp.gt.f32.partialorder %v1162, %v718
        %vm1233 = vcmp.gt.f32.partialorder %v1167, %v723
        %vm1234 = vcmp.gt.f32.partialorder %v1172, %v728
        %vm1235 = vcmp.gt.f32.partialorder %v1177, %v733
        %vm1236 = vcmp.gt.f32.partialorder %v1182, %v738
        %vm1237 = vcmp.gt.f32.partialorder %v1187, %v743
        %vm1238 = vcmp.gt.f32.partialorder %v1192, %v748
        %vm1239 = vcmp.gt.f32.partialorder %v1197, %v753
        %vm1240 = vcmp.gt.f32.partialorder %v1202, %v758
        %vm1241 = vcmp.gt.f32.partialorder %v1207, %v763
        %vm1242 = vcmp.gt.f32.partialorder %v1212, %v768
        %vm1243 = vcmp.gt.f32.partialorder %v1217, %v773
        %vm1244 = vcmp.gt.f32.partialorder %v1222, %v778
        %vm1245 = vcmp.gt.f32.partialorder %v1227, %v783
        %v1246 = vsel %vm1230, %v1152, %v708
        %v1247 = vsel %vm1231, %v1157, %v713
        %v1248 = vsel %vm1232, %v1162, %v718
        %v1249 = vsel %vm1233, %v1167, %v723
        %v1250 = vsel %vm1234, %v1172, %v728
        %v1251 = vsel %vm1235, %v1177, %v733
        %v1252 = vsel %vm1236, %v1182, %v738
        %v1253 = vsel %vm1237, %v1187, %v743
        %v1254 = vsel %vm1238, %v1192, %v748
        %v1255 = vsel %vm1239, %v1197, %v753
        %v1256 = vsel %vm1240, %v1202, %v758
        %v1257 = vsel %vm1241, %v1207, %v763
        %v1258 = vsel %vm1242, %v1212, %v768
        %v1259 = vsel %vm1243, %v1217, %v773
        %v1260 = vsel %vm1244, %v1222, %v778
        %v1261 = vsel %vm1245, %v1227, %v783
        %s1262 = scalar_lea.vmem [#allocation2], 80
        %v1263 = vld [vmem:[%s1262] sm:$0xff]
        %v1264 = vld [vmem:[%s1262 + $0x8] sm:$0xff]
        %1265 = vmatprep.subr.mxu0 0.0
        %1266 = vmatpush1.msra.mxu0 0.0
        %1267 = vmatprep.subr.mxu0 0.0
        %1268 = vmatpush1.msra.mxu0 0.0
        %1269 = vmatprep.subr.mxu0 0.0
        %1270 = vmatpush1.msra.mxu0 0.0
        %1271 = vmatprep.subr.mxu0 0.0
        %1272 = vmatpush1.msra.mxu0 0.0
        %1273 = vmatprep.subr.mxu0 0.0
        %1274 = vmatpush1.msra.mxu0 0.0
        %1275 = vmatprep.subr.mxu0 0.0
        %1276 = vmatpush1.msra.mxu0 0.0
        %1277 = vmatprep.subr.mxu0 0.0
        %1278 = vmatpush1.msra.mxu0 0.0
        %1279 = vmatprep.subr.mxu0 0.0
        %1280 = vmatpush1.msra.mxu0 0.0
        %1281 = vmatprep.subr.mxu0 0.0
        %1282 = vmatpush1.msra.mxu0 0.0
        %1283 = vmatprep.subr.mxu0 0.0
        %1284 = vmatpush1.msra.mxu0 0.0
        %1285 = vmatprep.subr.mxu0 0.0
        %1286 = vmatpush1.msra.mxu0 0.0
        %1287 = vmatprep.subr.mxu0 0.0
        %1288 = vmatpush1.msra.mxu0 0.0
        %1289 = vmatprep.subr.mxu0 0.0
        %1290 = vmatpush1.msra.mxu0 0.0
        %1291 = vmatprep.subr.mxu0 0.0
        %1292 = vmatpush1.msra.mxu0 0.0
        %1293 = vmatprep.subr.mxu0 0.0
        %1294 = vmatpush1.msra.mxu0 %v1264
        %1295 = vmatprep.subr.mxu0 0.0
        %1296 = vmatpush1.msra.mxu0 %v1263
        %1297 = vmatprep.subr.mxu0 0.0
        %1298 = vmatpush2.msra.mxu0 0.0
        %1299 = vmatprep.subr.mxu0 0.0
        %1300 = vmatpush2.msra.mxu0 0.0
        %1301 = vmatprep.subr.mxu0 0.0
        %1302 = vmatpush2.msra.mxu0 0.0
        %1303 = vmatprep.subr.mxu0 0.0
        %1304 = vmatpush2.msra.mxu0 0.0
        %1305 = vmatprep.subr.mxu0 0.0
        %1306 = vmatpush2.msra.mxu0 0.0
        %1307 = vmatprep.subr.mxu0 0.0
        %1308 = vmatpush2.msra.mxu0 0.0
        %1309 = vmatprep.subr.mxu0 0.0
        %1310 = vmatpush2.msra.mxu0 0.0
        %1311 = vmatprep.subr.mxu0 0.0
        %1312 = vmatpush2.msra.mxu0 0.0
        %1313 = vmatprep.subr.mxu0 0.0
        %1314 = vmatpush2.msra.mxu0 0.0
        %1315 = vmatprep.subr.mxu0 0.0
        %1316 = vmatpush2.msra.mxu0 0.0
        %1317 = vmatprep.subr.mxu0 0.0
        %1318 = vmatpush2.msra.mxu0 0.0
        %1319 = vmatprep.subr.mxu0 0.0
        %1320 = vmatpush2.msra.mxu0 0.0
        %1321 = vmatprep.subr.mxu0 0.0
        %1322 = vmatpush2.msra.mxu0 0.0
        %1323 = vmatprep.subr.mxu0 0.0
        %1324 = vmatpush2.msra.mxu0 0.0
        %1325 = vmatprep.subr.mxu0 0.0
        %1326 = vmatpush2.msra.mxu0 0.0
        %1327 = vmatprep.subr.mxu0 0.0
        %1328 = vmatpush2.msra.mxu0 0.0
        %1329 = vmatprep.mubr.f32.mxu0 0.0
        %1330 = vmatmul.mubr.f32.gmra.mxu0 %v594
        %v1331 = vpop.f32.mrf.mxu0
        %v1332 = vadd.f32 0.0, %v1331
        %v1333 = vpop.f32.mrf.mxu0
        %1334 = vmatprep.mubr.f32.mxu0 0.0
        %1335 = vmatmul.mubr.f32.gmra.mxu0 %v597
        %v1336 = vpop.f32.mrf.mxu0
        %v1337 = vadd.f32 0.0, %v1336
        %v1338 = vpop.f32.mrf.mxu0
        %1339 = vmatprep.mubr.f32.mxu0 0.0
        %1340 = vmatmul.mubr.f32.gmra.mxu0 %v600
        %v1341 = vpop.f32.mrf.mxu0
        %v1342 = vadd.f32 0.0, %v1341
        %v1343 = vpop.f32.mrf.mxu0
        %1344 = vmatprep.mubr.f32.mxu0 0.0
        %1345 = vmatmul.mubr.f32.gmra.mxu0 %v603
        %v1346 = vpop.f32.mrf.mxu0
        %v1347 = vadd.f32 0.0, %v1346
        %v1348 = vpop.f32.mrf.mxu0
        %1349 = vmatprep.mubr.f32.mxu0 0.0
        %1350 = vmatmul.mubr.f32.gmra.mxu0 %v606
        %v1351 = vpop.f32.mrf.mxu0
        %v1352 = vadd.f32 0.0, %v1351
        %v1353 = vpop.f32.mrf.mxu0
        %1354 = vmatprep.mubr.f32.mxu0 0.0
        %1355 = vmatmul.mubr.f32.gmra.mxu0 %v609
        %v1356 = vpop.f32.mrf.mxu0
        %v1357 = vadd.f32 0.0, %v1356
        %v1358 = vpop.f32.mrf.mxu0
        %1359 = vmatprep.mubr.f32.mxu0 0.0
        %1360 = vmatmul.mubr.f32.gmra.mxu0 %v612
        %v1361 = vpop.f32.mrf.mxu0
        %v1362 = vadd.f32 0.0, %v1361
        %v1363 = vpop.f32.mrf.mxu0
        %1364 = vmatprep.mubr.f32.mxu0 0.0
        %1365 = vmatmul.mubr.f32.gmra.mxu0 %v615
        %v1366 = vpop.f32.mrf.mxu0
        %v1367 = vadd.f32 0.0, %v1366
        %v1368 = vpop.f32.mrf.mxu0
        %1369 = vmatprep.mubr.f32.mxu0 0.0
        %1370 = vmatmul.mubr.f32.gmra.mxu0 %v618
        %v1371 = vpop.f32.mrf.mxu0
        %v1372 = vadd.f32 0.0, %v1371
        %v1373 = vpop.f32.mrf.mxu0
        %1374 = vmatprep.mubr.f32.mxu0 0.0
        %1375 = vmatmul.mubr.f32.gmra.mxu0 %v621
        %v1376 = vpop.f32.mrf.mxu0
        %v1377 = vadd.f32 0.0, %v1376
        %v1378 = vpop.f32.mrf.mxu0
        %1379 = vmatprep.mubr.f32.mxu0 0.0
        %1380 = vmatmul.mubr.f32.gmra.mxu0 %v624
        %v1381 = vpop.f32.mrf.mxu0
        %v1382 = vadd.f32 0.0, %v1381
        %v1383 = vpop.f32.mrf.mxu0
        %1384 = vmatprep.mubr.f32.mxu0 0.0
        %1385 = vmatmul.mubr.f32.gmra.mxu0 %v627
        %v1386 = vpop.f32.mrf.mxu0
        %v1387 = vadd.f32 0.0, %v1386
        %v1388 = vpop.f32.mrf.mxu0
        %1389 = vmatprep.mubr.f32.mxu0 0.0
        %1390 = vmatmul.mubr.f32.gmra.mxu0 %v630
        %v1391 = vpop.f32.mrf.mxu0
        %v1392 = vadd.f32 0.0, %v1391
        %v1393 = vpop.f32.mrf.mxu0
        %1394 = vmatprep.mubr.f32.mxu0 0.0
        %1395 = vmatmul.mubr.f32.gmra.mxu0 %v633
        %v1396 = vpop.f32.mrf.mxu0
        %v1397 = vadd.f32 0.0, %v1396
        %v1398 = vpop.f32.mrf.mxu0
        %1399 = vmatprep.mubr.f32.mxu0 0.0
        %1400 = vmatmul.mubr.f32.gmra.mxu0 %v636
        %v1401 = vpop.f32.mrf.mxu0
        %v1402 = vadd.f32 0.0, %v1401
        %v1403 = vpop.f32.mrf.mxu0
        %1404 = vmatprep.mubr.f32.mxu0 0.0
        %1405 = vmatmul.mubr.f32.gmra.mxu0 %v639
        %v1406 = vpop.f32.mrf.mxu0
        %v1407 = vadd.f32 0.0, %v1406
        %v1408 = vpop.f32.mrf.mxu0
        %1409 = vdwg.mxu0
        %v1410 = vsel %vm1230, %v1332, %v856
        %v1411 = vsel %vm1231, %v1337, %v861
        %v1412 = vsel %vm1232, %v1342, %v866
        %v1413 = vsel %vm1233, %v1347, %v871
        %v1414 = vsel %vm1234, %v1352, %v876
        %v1415 = vsel %vm1235, %v1357, %v881
        %v1416 = vsel %vm1236, %v1362, %v886
        %v1417 = vsel %vm1237, %v1367, %v891
        %v1418 = vsel %vm1238, %v1372, %v896
        %v1419 = vsel %vm1239, %v1377, %v901
        %v1420 = vsel %vm1240, %v1382, %v906
        %v1421 = vsel %vm1241, %v1387, %v911
        %v1422 = vsel %vm1242, %v1392, %v916
        %v1423 = vsel %vm1243, %v1397, %v921
        %v1424 = vsel %vm1244, %v1402, %v926
        %v1425 = vsel %vm1245, %v1407, %v931
        %s1426 = scalar_lea.vmem [#allocation2], 144
        %v1427 = vld [vmem:[%s1426] sm:$0xff]
        %v1428 = vld [vmem:[%s1426 + $0x8] sm:$0xff]
        %1429 = vmatprep.subr.mxu0 0.0
        %1430 = vmatpush1.msra.mxu0 0.0
        %1431 = vmatprep.subr.mxu0 0.0
        %1432 = vmatpush1.msra.mxu0 0.0
        %1433 = vmatprep.subr.mxu0 0.0
        %1434 = vmatpush1.msra.mxu0 0.0
        %1435 = vmatprep.subr.mxu0 0.0
        %1436 = vmatpush1.msra.mxu0 0.0
        %1437 = vmatprep.subr.mxu0 0.0
        %1438 = vmatpush1.msra.mxu0 0.0
        %1439 = vmatprep.subr.mxu0 0.0
        %1440 = vmatpush1.msra.mxu0 0.0
        %1441 = vmatprep.subr.mxu0 0.0
        %1442 = vmatpush1.msra.mxu0 0.0
        %1443 = vmatprep.subr.mxu0 0.0
        %1444 = vmatpush1.msra.mxu0 0.0
        %1445 = vmatprep.subr.mxu0 0.0
        %1446 = vmatpush1.msra.mxu0 0.0
        %1447 = vmatprep.subr.mxu0 0.0
        %1448 = vmatpush1.msra.mxu0 0.0
        %1449 = vmatprep.subr.mxu0 0.0
        %1450 = vmatpush1.msra.mxu0 0.0
        %1451 = vmatprep.subr.mxu0 0.0
        %1452 = vmatpush1.msra.mxu0 0.0
        %1453 = vmatprep.subr.mxu0 0.0
        %1454 = vmatpush1.msra.mxu0 0.0
        %1455 = vmatprep.subr.mxu0 0.0
        %1456 = vmatpush1.msra.mxu0 0.0
        %1457 = vmatprep.subr.mxu0 0.0
        %1458 = vmatpush1.msra.mxu0 %v1428
        %1459 = vmatprep.subr.mxu0 0.0
        %1460 = vmatpush1.msra.mxu0 %v1427
        %1461 = vmatprep.subr.mxu0 0.0
        %1462 = vmatpush2.msra.mxu0 0.0
        %1463 = vmatprep.subr.mxu0 0.0
        %1464 = vmatpush2.msra.mxu0 0.0
        %1465 = vmatprep.subr.mxu0 0.0
        %1466 = vmatpush2.msra.mxu0 0.0
        %1467 = vmatprep.subr.mxu0 0.0
        %1468 = vmatpush2.msra.mxu0 0.0
        %1469 = vmatprep.subr.mxu0 0.0
        %1470 = vmatpush2.msra.mxu0 0.0
        %1471 = vmatprep.subr.mxu0 0.0
        %1472 = vmatpush2.msra.mxu0 0.0
        %1473 = vmatprep.subr.mxu0 0.0
        %1474 = vmatpush2.msra.mxu0 0.0
        %1475 = vmatprep.subr.mxu0 0.0
        %1476 = vmatpush2.msra.mxu0 0.0
        %1477 = vmatprep.subr.mxu0 0.0
        %1478 = vmatpush2.msra.mxu0 0.0
        %1479 = vmatprep.subr.mxu0 0.0
        %1480 = vmatpush2.msra.mxu0 0.0
        %1481 = vmatprep.subr.mxu0 0.0
        %1482 = vmatpush2.msra.mxu0 0.0
        %1483 = vmatprep.subr.mxu0 0.0
        %1484 = vmatpush2.msra.mxu0 0.0
        %1485 = vmatprep.subr.mxu0 0.0
        %1486 = vmatpush2.msra.mxu0 0.0
        %1487 = vmatprep.subr.mxu0 0.0
        %1488 = vmatpush2.msra.mxu0 0.0
        %1489 = vmatprep.subr.mxu0 0.0
        %1490 = vmatpush2.msra.mxu0 0.0
        %1491 = vmatprep.subr.mxu0 0.0
        %1492 = vmatpush2.msra.mxu0 0.0
        %1493 = vmatprep.mubr.f32.mxu0 0.0
        %1494 = vmatmul.mubr.f32.gmra.mxu0 %v594
        %v1495 = vpop.f32.mrf.mxu0
        %v1496 = vadd.f32 0.0, %v1495
        %v1497 = vpop.f32.mrf.mxu0
        %1498 = vmatprep.mubr.f32.mxu0 0.0
        %1499 = vmatmul.mubr.f32.gmra.mxu0 %v597
        %v1500 = vpop.f32.mrf.mxu0
        %v1501 = vadd.f32 0.0, %v1500
        %v1502 = vpop.f32.mrf.mxu0
        %1503 = vmatprep.mubr.f32.mxu0 0.0
        %1504 = vmatmul.mubr.f32.gmra.mxu0 %v600
        %v1505 = vpop.f32.mrf.mxu0
        %v1506 = vadd.f32 0.0, %v1505
        %v1507 = vpop.f32.mrf.mxu0
        %1508 = vmatprep.mubr.f32.mxu0 0.0
        %1509 = vmatmul.mubr.f32.gmra.mxu0 %v603
        %v1510 = vpop.f32.mrf.mxu0
        %v1511 = vadd.f32 0.0, %v1510
        %v1512 = vpop.f32.mrf.mxu0
        %1513 = vmatprep.mubr.f32.mxu0 0.0
        %1514 = vmatmul.mubr.f32.gmra.mxu0 %v606
        %v1515 = vpop.f32.mrf.mxu0
        %v1516 = vadd.f32 0.0, %v1515
        %v1517 = vpop.f32.mrf.mxu0
        %1518 = vmatprep.mubr.f32.mxu0 0.0
        %1519 = vmatmul.mubr.f32.gmra.mxu0 %v609
        %v1520 = vpop.f32.mrf.mxu0
        %v1521 = vadd.f32 0.0, %v1520
        %v1522 = vpop.f32.mrf.mxu0
        %1523 = vmatprep.mubr.f32.mxu0 0.0
        %1524 = vmatmul.mubr.f32.gmra.mxu0 %v612
        %v1525 = vpop.f32.mrf.mxu0
        %v1526 = vadd.f32 0.0, %v1525
        %v1527 = vpop.f32.mrf.mxu0
        %1528 = vmatprep.mubr.f32.mxu0 0.0
        %1529 = vmatmul.mubr.f32.gmra.mxu0 %v615
        %v1530 = vpop.f32.mrf.mxu0
        %v1531 = vadd.f32 0.0, %v1530
        %v1532 = vpop.f32.mrf.mxu0
        %1533 = vmatprep.mubr.f32.mxu0 0.0
        %1534 = vmatmul.mubr.f32.gmra.mxu0 %v618
        %v1535 = vpop.f32.mrf.mxu0
        %v1536 = vadd.f32 0.0, %v1535
        %v1537 = vpop.f32.mrf.mxu0
        %1538 = vmatprep.mubr.f32.mxu0 0.0
        %1539 = vmatmul.mubr.f32.gmra.mxu0 %v621
        %v1540 = vpop.f32.mrf.mxu0
        %v1541 = vadd.f32 0.0, %v1540
        %v1542 = vpop.f32.mrf.mxu0
        %1543 = vmatprep.mubr.f32.mxu0 0.0
        %1544 = vmatmul.mubr.f32.gmra.mxu0 %v624
        %v1545 = vpop.f32.mrf.mxu0
        %v1546 = vadd.f32 0.0, %v1545
        %v1547 = vpop.f32.mrf.mxu0
        %1548 = vmatprep.mubr.f32.mxu0 0.0
        %1549 = vmatmul.mubr.f32.gmra.mxu0 %v627
        %v1550 = vpop.f32.mrf.mxu0
        %v1551 = vadd.f32 0.0, %v1550
        %v1552 = vpop.f32.mrf.mxu0
        %1553 = vmatprep.mubr.f32.mxu0 0.0
        %1554 = vmatmul.mubr.f32.gmra.mxu0 %v630
        %v1555 = vpop.f32.mrf.mxu0
        %v1556 = vadd.f32 0.0, %v1555
        %v1557 = vpop.f32.mrf.mxu0
        %1558 = vmatprep.mubr.f32.mxu0 0.0
        %1559 = vmatmul.mubr.f32.gmra.mxu0 %v633
        %v1560 = vpop.f32.mrf.mxu0
        %v1561 = vadd.f32 0.0, %v1560
        %v1562 = vpop.f32.mrf.mxu0
        %1563 = vmatprep.mubr.f32.mxu0 0.0
        %1564 = vmatmul.mubr.f32.gmra.mxu0 %v636
        %v1565 = vpop.f32.mrf.mxu0
        %v1566 = vadd.f32 0.0, %v1565
        %v1567 = vpop.f32.mrf.mxu0
        %1568 = vmatprep.mubr.f32.mxu0 0.0
        %1569 = vmatmul.mubr.f32.gmra.mxu0 %v639
        %v1570 = vpop.f32.mrf.mxu0
        %v1571 = vadd.f32 0.0, %v1570
        %v1572 = vpop.f32.mrf.mxu0
        %1573 = vdwg.mxu0
        %v1574 = vsel %vm1230, %v1496, %v1004
        %v1575 = vsel %vm1231, %v1501, %v1009
        %v1576 = vsel %vm1232, %v1506, %v1014
        %v1577 = vsel %vm1233, %v1511, %v1019
        %v1578 = vsel %vm1234, %v1516, %v1024
        %v1579 = vsel %vm1235, %v1521, %v1029
        %v1580 = vsel %vm1236, %v1526, %v1034
        %v1581 = vsel %vm1237, %v1531, %v1039
        %v1582 = vsel %vm1238, %v1536, %v1044
        %v1583 = vsel %vm1239, %v1541, %v1049
        %v1584 = vsel %vm1240, %v1546, %v1054
        %v1585 = vsel %vm1241, %v1551, %v1059
        %v1586 = vsel %vm1242, %v1556, %v1064
        %v1587 = vsel %vm1243, %v1561, %v1069
        %v1588 = vsel %vm1244, %v1566, %v1074
        %v1589 = vsel %vm1245, %v1571, %v1079
        %s1590 = scalar_lea.vmem [#allocation2], 224
        %v1591 = vld [vmem:[%s1590] sm:$0xff]
        %v1592 = vld [vmem:[%s1590 + $0x8] sm:$0xff]
        %1593 = vmatprep.subr.mxu0 0.0
        %1594 = vmatpush1.msra.mxu0 0.0
        %1595 = vmatprep.subr.mxu0 0.0
        %1596 = vmatpush1.msra.mxu0 0.0
        %1597 = vmatprep.subr.mxu0 0.0
        %1598 = vmatpush1.msra.mxu0 0.0
        %1599 = vmatprep.subr.mxu0 0.0
        %1600 = vmatpush1.msra.mxu0 0.0
        %1601 = vmatprep.subr.mxu0 0.0
        %1602 = vmatpush1.msra.mxu0 0.0
        %1603 = vmatprep.subr.mxu0 0.0
        %1604 = vmatpush1.msra.mxu0 0.0
        %1605 = vmatprep.subr.mxu0 0.0
        %1606 = vmatpush1.msra.mxu0 0.0
        %1607 = vmatprep.subr.mxu0 0.0
        %1608 = vmatpush1.msra.mxu0 0.0
        %1609 = vmatprep.subr.mxu0 0.0
        %1610 = vmatpush1.msra.mxu0 0.0
        %1611 = vmatprep.subr.mxu0 0.0
        %1612 = vmatpush1.msra.mxu0 0.0
        %1613 = vmatprep.subr.mxu0 0.0
        %1614 = vmatpush1.msra.mxu0 0.0
        %1615 = vmatprep.subr.mxu0 0.0
        %1616 = vmatpush1.msra.mxu0 0.0
        %1617 = vmatprep.subr.mxu0 0.0
        %1618 = vmatpush1.msra.mxu0 0.0
        %1619 = vmatprep.subr.mxu0 0.0
        %1620 = vmatpush1.msra.mxu0 0.0
        %1621 = vmatprep.subr.mxu0 0.0
        %1622 = vmatpush1.msra.mxu0 %v1592
        %1623 = vmatprep.subr.mxu0 0.0
        %1624 = vmatpush1.msra.mxu0 %v1591
        %1625 = vmatprep.subr.mxu0 0.0
        %1626 = vmatpush2.msra.mxu0 0.0
        %1627 = vmatprep.subr.mxu0 0.0
        %1628 = vmatpush2.msra.mxu0 0.0
        %1629 = vmatprep.subr.mxu0 0.0
        %1630 = vmatpush2.msra.mxu0 0.0
        %1631 = vmatprep.subr.mxu0 0.0
        %1632 = vmatpush2.msra.mxu0 0.0
        %1633 = vmatprep.subr.mxu0 0.0
        %1634 = vmatpush2.msra.mxu0 0.0
        %1635 = vmatprep.subr.mxu0 0.0
        %1636 = vmatpush2.msra.mxu0 0.0
        %1637 = vmatprep.subr.mxu0 0.0
        %1638 = vmatpush2.msra.mxu0 0.0
        %1639 = vmatprep.subr.mxu0 0.0
        %1640 = vmatpush2.msra.mxu0 0.0
        %1641 = vmatprep.subr.mxu0 0.0
        %1642 = vmatpush2.msra.mxu0 0.0
        %1643 = vmatprep.subr.mxu0 0.0
        %1644 = vmatpush2.msra.mxu0 0.0
        %1645 = vmatprep.subr.mxu0 0.0
        %1646 = vmatpush2.msra.mxu0 0.0
        %1647 = vmatprep.subr.mxu0 0.0
        %1648 = vmatpush2.msra.mxu0 0.0
        %1649 = vmatprep.subr.mxu0 0.0
        %1650 = vmatpush2.msra.mxu0 0.0
        %1651 = vmatprep.subr.mxu0 0.0
        %1652 = vmatpush2.msra.mxu0 0.0
        %1653 = vmatprep.subr.mxu0 0.0
        %1654 = vmatpush2.msra.mxu0 0.0
        %1655 = vmatprep.subr.mxu0 0.0
        %1656 = vmatpush2.msra.mxu0 0.0
        %1657 = vmatprep.mubr.f32.mxu0 0.0
        %1658 = vmatmul.mubr.f32.gmra.mxu0 %v594
        %v1659 = vpop.f32.mrf.mxu0
        %v1660 = vadd.f32 0.0, %v1659
        %v1661 = vpop.f32.mrf.mxu0
        %1662 = vmatprep.mubr.f32.mxu0 0.0
        %1663 = vmatmul.mubr.f32.gmra.mxu0 %v597
        %v1664 = vpop.f32.mrf.mxu0
        %v1665 = vadd.f32 0.0, %v1664
        %v1666 = vpop.f32.mrf.mxu0
        %1667 = vmatprep.mubr.f32.mxu0 0.0
        %1668 = vmatmul.mubr.f32.gmra.mxu0 %v600
        %v1669 = vpop.f32.mrf.mxu0
        %v1670 = vadd.f32 0.0, %v1669
        %v1671 = vpop.f32.mrf.mxu0
        %1672 = vmatprep.mubr.f32.mxu0 0.0
        %1673 = vmatmul.mubr.f32.gmra.mxu0 %v603
        %v1674 = vpop.f32.mrf.mxu0
        %v1675 = vadd.f32 0.0, %v1674
        %v1676 = vpop.f32.mrf.mxu0
        %1677 = vmatprep.mubr.f32.mxu0 0.0
        %1678 = vmatmul.mubr.f32.gmra.mxu0 %v606
        %v1679 = vpop.f32.mrf.mxu0
        %v1680 = vadd.f32 0.0, %v1679
        %v1681 = vpop.f32.mrf.mxu0
        %1682 = vmatprep.mubr.f32.mxu0 0.0
        %1683 = vmatmul.mubr.f32.gmra.mxu0 %v609
        %v1684 = vpop.f32.mrf.mxu0
        %v1685 = vadd.f32 0.0, %v1684
        %v1686 = vpop.f32.mrf.mxu0
        %1687 = vmatprep.mubr.f32.mxu0 0.0
        %1688 = vmatmul.mubr.f32.gmra.mxu0 %v612
        %v1689 = vpop.f32.mrf.mxu0
        %v1690 = vadd.f32 0.0, %v1689
        %v1691 = vpop.f32.mrf.mxu0
        %1692 = vmatprep.mubr.f32.mxu0 0.0
        %1693 = vmatmul.mubr.f32.gmra.mxu0 %v615
        %v1694 = vpop.f32.mrf.mxu0
        %v1695 = vadd.f32 0.0, %v1694
        %v1696 = vpop.f32.mrf.mxu0
        %1697 = vmatprep.mubr.f32.mxu0 0.0
        %1698 = vmatmul.mubr.f32.gmra.mxu0 %v618
        %v1699 = vpop.f32.mrf.mxu0
        %v1700 = vadd.f32 0.0, %v1699
        %v1701 = vpop.f32.mrf.mxu0
        %1702 = vmatprep.mubr.f32.mxu0 0.0
        %1703 = vmatmul.mubr.f32.gmra.mxu0 %v621
        %v1704 = vpop.f32.mrf.mxu0
        %v1705 = vadd.f32 0.0, %v1704
        %v1706 = vpop.f32.mrf.mxu0
        %1707 = vmatprep.mubr.f32.mxu0 0.0
        %1708 = vmatmul.mubr.f32.gmra.mxu0 %v624
        %v1709 = vpop.f32.mrf.mxu0
        %v1710 = vadd.f32 0.0, %v1709
        %v1711 = vpop.f32.mrf.mxu0
        %1712 = vmatprep.mubr.f32.mxu0 0.0
        %1713 = vmatmul.mubr.f32.gmra.mxu0 %v627
        %v1714 = vpop.f32.mrf.mxu0
        %v1715 = vadd.f32 0.0, %v1714
        %v1716 = vpop.f32.mrf.mxu0
        %1717 = vmatprep.mubr.f32.mxu0 0.0
        %1718 = vmatmul.mubr.f32.gmra.mxu0 %v630
        %v1719 = vpop.f32.mrf.mxu0
        %v1720 = vadd.f32 0.0, %v1719
        %v1721 = vpop.f32.mrf.mxu0
        %1722 = vmatprep.mubr.f32.mxu0 0.0
        %1723 = vmatmul.mubr.f32.gmra.mxu0 %v633
        %v1724 = vpop.f32.mrf.mxu0
        %v1725 = vadd.f32 0.0, %v1724
        %v1726 = vpop.f32.mrf.mxu0
        %1727 = vmatprep.mubr.f32.mxu0 0.0
        %1728 = vmatmul.mubr.f32.gmra.mxu0 %v636
        %v1729 = vpop.f32.mrf.mxu0
        %v1730 = vadd.f32 0.0, %v1729
        %v1731 = vpop.f32.mrf.mxu0
        %1732 = vmatprep.mubr.f32.mxu0 0.0
        %1733 = vmatmul.mubr.f32.gmra.mxu0 %v639
        %v1734 = vpop.f32.mrf.mxu0
        %v1735 = vadd.f32 0.0, %v1734
        %v1736 = vpop.f32.mrf.mxu0
        %1737 = vdwg.mxu0
        %vm1738 = vcmp.gt.f32.partialorder %v1660, %v1246
        %vm1739 = vcmp.gt.f32.partialorder %v1665, %v1247
        %vm1740 = vcmp.gt.f32.partialorder %v1670, %v1248
        %vm1741 = vcmp.gt.f32.partialorder %v1675, %v1249
        %vm1742 = vcmp.gt.f32.partialorder %v1680, %v1250
        %vm1743 = vcmp.gt.f32.partialorder %v1685, %v1251
        %vm1744 = vcmp.gt.f32.partialorder %v1690, %v1252
        %vm1745 = vcmp.gt.f32.partialorder %v1695, %v1253
        %vm1746 = vcmp.gt.f32.partialorder %v1700, %v1254
        %vm1747 = vcmp.gt.f32.partialorder %v1705, %v1255
        %vm1748 = vcmp.gt.f32.partialorder %v1710, %v1256
        %vm1749 = vcmp.gt.f32.partialorder %v1715, %v1257
        %vm1750 = vcmp.gt.f32.partialorder %v1720, %v1258
        %vm1751 = vcmp.gt.f32.partialorder %v1725, %v1259
        %vm1752 = vcmp.gt.f32.partialorder %v1730, %v1260
        %vm1753 = vcmp.gt.f32.partialorder %v1735, %v1261
        %v1754 = vsel %vm1738, %v1660, %v1246
        %v1755 = vsel %vm1739, %v1665, %v1247
        %v1756 = vsel %vm1740, %v1670, %v1248
        %v1757 = vsel %vm1741, %v1675, %v1249
        %v1758 = vsel %vm1742, %v1680, %v1250
        %v1759 = vsel %vm1743, %v1685, %v1251
        %v1760 = vsel %vm1744, %v1690, %v1252
        %v1761 = vsel %vm1745, %v1695, %v1253
        %v1762 = vsel %vm1746, %v1700, %v1254
        %v1763 = vsel %vm1747, %v1705, %v1255
        %v1764 = vsel %vm1748, %v1710, %v1256
        %v1765 = vsel %vm1749, %v1715, %v1257
        %v1766 = vsel %vm1750, %v1720, %v1258
        %v1767 = vsel %vm1751, %v1725, %v1259
        %v1768 = vsel %vm1752, %v1730, %v1260
        %v1769 = vsel %vm1753, %v1735, %v1261
        %s1770 = scalar_lea.vmem [#allocation2], 96
        %v1771 = vld [vmem:[%s1770] sm:$0xff]
        %v1772 = vld [vmem:[%s1770 + $0x8] sm:$0xff]
        %1773 = vmatprep.subr.mxu0 0.0
        %1774 = vmatpush1.msra.mxu0 0.0
        %1775 = vmatprep.subr.mxu0 0.0
        %1776 = vmatpush1.msra.mxu0 0.0
        %1777 = vmatprep.subr.mxu0 0.0
        %1778 = vmatpush1.msra.mxu0 0.0
        %1779 = vmatprep.subr.mxu0 0.0
        %1780 = vmatpush1.msra.mxu0 0.0
        %1781 = vmatprep.subr.mxu0 0.0
        %1782 = vmatpush1.msra.mxu0 0.0
        %1783 = vmatprep.subr.mxu0 0.0
        %1784 = vmatpush1.msra.mxu0 0.0
        %1785 = vmatprep.subr.mxu0 0.0
        %1786 = vmatpush1.msra.mxu0 0.0
        %1787 = vmatprep.subr.mxu0 0.0
        %1788 = vmatpush1.msra.mxu0 0.0
        %1789 = vmatprep.subr.mxu0 0.0
        %1790 = vmatpush1.msra.mxu0 0.0
        %1791 = vmatprep.subr.mxu0 0.0
        %1792 = vmatpush1.msra.mxu0 0.0
        %1793 = vmatprep.subr.mxu0 0.0
        %1794 = vmatpush1.msra.mxu0 0.0
        %1795 = vmatprep.subr.mxu0 0.0
        %1796 = vmatpush1.msra.mxu0 0.0
        %1797 = vmatprep.subr.mxu0 0.0
        %1798 = vmatpush1.msra.mxu0 0.0
        %1799 = vmatprep.subr.mxu0 0.0
        %1800 = vmatpush1.msra.mxu0 0.0
        %1801 = vmatprep.subr.mxu0 0.0
        %1802 = vmatpush1.msra.mxu0 %v1772
        %1803 = vmatprep.subr.mxu0 0.0
        %1804 = vmatpush1.msra.mxu0 %v1771
        %1805 = vmatprep.subr.mxu0 0.0
        %1806 = vmatpush2.msra.mxu0 0.0
        %1807 = vmatprep.subr.mxu0 0.0
        %1808 = vmatpush2.msra.mxu0 0.0
        %1809 = vmatprep.subr.mxu0 0.0
        %1810 = vmatpush2.msra.mxu0 0.0
        %1811 = vmatprep.subr.mxu0 0.0
        %1812 = vmatpush2.msra.mxu0 0.0
        %1813 = vmatprep.subr.mxu0 0.0
        %1814 = vmatpush2.msra.mxu0 0.0
        %1815 = vmatprep.subr.mxu0 0.0
        %1816 = vmatpush2.msra.mxu0 0.0
        %1817 = vmatprep.subr.mxu0 0.0
        %1818 = vmatpush2.msra.mxu0 0.0
        %1819 = vmatprep.subr.mxu0 0.0
        %1820 = vmatpush2.msra.mxu0 0.0
        %1821 = vmatprep.subr.mxu0 0.0
        %1822 = vmatpush2.msra.mxu0 0.0
        %1823 = vmatprep.subr.mxu0 0.0
        %1824 = vmatpush2.msra.mxu0 0.0
        %1825 = vmatprep.subr.mxu0 0.0
        %1826 = vmatpush2.msra.mxu0 0.0
        %1827 = vmatprep.subr.mxu0 0.0
        %1828 = vmatpush2.msra.mxu0 0.0
        %1829 = vmatprep.subr.mxu0 0.0
        %1830 = vmatpush2.msra.mxu0 0.0
        %1831 = vmatprep.subr.mxu0 0.0
        %1832 = vmatpush2.msra.mxu0 0.0
        %1833 = vmatprep.subr.mxu0 0.0
        %1834 = vmatpush2.msra.mxu0 0.0
        %1835 = vmatprep.subr.mxu0 0.0
        %1836 = vmatpush2.msra.mxu0 0.0
        %1837 = vmatprep.mubr.f32.mxu0 0.0
        %1838 = vmatmul.mubr.f32.gmra.mxu0 %v594
        %v1839 = vpop.f32.mrf.mxu0
        %v1840 = vadd.f32 0.0, %v1839
        %v1841 = vpop.f32.mrf.mxu0
        %1842 = vmatprep.mubr.f32.mxu0 0.0
        %1843 = vmatmul.mubr.f32.gmra.mxu0 %v597
        %v1844 = vpop.f32.mrf.mxu0
        %v1845 = vadd.f32 0.0, %v1844
        %v1846 = vpop.f32.mrf.mxu0
        %1847 = vmatprep.mubr.f32.mxu0 0.0
        %1848 = vmatmul.mubr.f32.gmra.mxu0 %v600
        %v1849 = vpop.f32.mrf.mxu0
        %v1850 = vadd.f32 0.0, %v1849
        %v1851 = vpop.f32.mrf.mxu0
        %1852 = vmatprep.mubr.f32.mxu0 0.0
        %1853 = vmatmul.mubr.f32.gmra.mxu0 %v603
        %v1854 = vpop.f32.mrf.mxu0
        %v1855 = vadd.f32 0.0, %v1854
        %v1856 = vpop.f32.mrf.mxu0
        %1857 = vmatprep.mubr.f32.mxu0 0.0
        %1858 = vmatmul.mubr.f32.gmra.mxu0 %v606
        %v1859 = vpop.f32.mrf.mxu0
        %v1860 = vadd.f32 0.0, %v1859
        %v1861 = vpop.f32.mrf.mxu0
        %1862 = vmatprep.mubr.f32.mxu0 0.0
        %1863 = vmatmul.mubr.f32.gmra.mxu0 %v609
        %v1864 = vpop.f32.mrf.mxu0
        %v1865 = vadd.f32 0.0, %v1864
        %v1866 = vpop.f32.mrf.mxu0
        %1867 = vmatprep.mubr.f32.mxu0 0.0
        %1868 = vmatmul.mubr.f32.gmra.mxu0 %v612
        %v1869 = vpop.f32.mrf.mxu0
        %v1870 = vadd.f32 0.0, %v1869
        %v1871 = vpop.f32.mrf.mxu0
        %1872 = vmatprep.mubr.f32.mxu0 0.0
        %1873 = vmatmul.mubr.f32.gmra.mxu0 %v615
        %v1874 = vpop.f32.mrf.mxu0
        %v1875 = vadd.f32 0.0, %v1874
        %v1876 = vpop.f32.mrf.mxu0
        %1877 = vmatprep.mubr.f32.mxu0 0.0
        %1878 = vmatmul.mubr.f32.gmra.mxu0 %v618
        %v1879 = vpop.f32.mrf.mxu0
        %v1880 = vadd.f32 0.0, %v1879
        %v1881 = vpop.f32.mrf.mxu0
        %1882 = vmatprep.mubr.f32.mxu0 0.0
        %1883 = vmatmul.mubr.f32.gmra.mxu0 %v621
        %v1884 = vpop.f32.mrf.mxu0
        %v1885 = vadd.f32 0.0, %v1884
        %v1886 = vpop.f32.mrf.mxu0
        %1887 = vmatprep.mubr.f32.mxu0 0.0
        %1888 = vmatmul.mubr.f32.gmra.mxu0 %v624
        %v1889 = vpop.f32.mrf.mxu0
        %v1890 = vadd.f32 0.0, %v1889
        %v1891 = vpop.f32.mrf.mxu0
        %1892 = vmatprep.mubr.f32.mxu0 0.0
        %1893 = vmatmul.mubr.f32.gmra.mxu0 %v627
        %v1894 = vpop.f32.mrf.mxu0
        %v1895 = vadd.f32 0.0, %v1894
        %v1896 = vpop.f32.mrf.mxu0
        %1897 = vmatprep.mubr.f32.mxu0 0.0
        %1898 = vmatmul.mubr.f32.gmra.mxu0 %v630
        %v1899 = vpop.f32.mrf.mxu0
        %v1900 = vadd.f32 0.0, %v1899
        %v1901 = vpop.f32.mrf.mxu0
        %1902 = vmatprep.mubr.f32.mxu0 0.0
        %1903 = vmatmul.mubr.f32.gmra.mxu0 %v633
        %v1904 = vpop.f32.mrf.mxu0
        %v1905 = vadd.f32 0.0, %v1904
        %v1906 = vpop.f32.mrf.mxu0
        %1907 = vmatprep.mubr.f32.mxu0 0.0
        %1908 = vmatmul.mubr.f32.gmra.mxu0 %v636
        %v1909 = vpop.f32.mrf.mxu0
        %v1910 = vadd.f32 0.0, %v1909
        %v1911 = vpop.f32.mrf.mxu0
        %1912 = vmatprep.mubr.f32.mxu0 0.0
        %1913 = vmatmul.mubr.f32.gmra.mxu0 %v639
        %v1914 = vpop.f32.mrf.mxu0
        %v1915 = vadd.f32 0.0, %v1914
        %v1916 = vpop.f32.mrf.mxu0
        %1917 = vdwg.mxu0
        %v1918 = vsel %vm1738, %v1840, %v1410
        %v1919 = vsel %vm1739, %v1845, %v1411
        %v1920 = vsel %vm1740, %v1850, %v1412
        %v1921 = vsel %vm1741, %v1855, %v1413
        %v1922 = vsel %vm1742, %v1860, %v1414
        %v1923 = vsel %vm1743, %v1865, %v1415
        %v1924 = vsel %vm1744, %v1870, %v1416
        %v1925 = vsel %vm1745, %v1875, %v1417
        %v1926 = vsel %vm1746, %v1880, %v1418
        %v1927 = vsel %vm1747, %v1885, %v1419
        %v1928 = vsel %vm1748, %v1890, %v1420
        %v1929 = vsel %vm1749, %v1895, %v1421
        %v1930 = vsel %vm1750, %v1900, %v1422
        %v1931 = vsel %vm1751, %v1905, %v1423
        %v1932 = vsel %vm1752, %v1910, %v1424
        %v1933 = vsel %vm1753, %v1915, %v1425
        %s1934 = scalar_lea.vmem [#allocation2], 160
        %v1935 = vld [vmem:[%s1934] sm:$0xff]
        %v1936 = vld [vmem:[%s1934 + $0x8] sm:$0xff]
        %1937 = vmatprep.subr.mxu0 0.0
        %1938 = vmatpush1.msra.mxu0 0.0
        %1939 = vmatprep.subr.mxu0 0.0
        %1940 = vmatpush1.msra.mxu0 0.0
        %1941 = vmatprep.subr.mxu0 0.0
        %1942 = vmatpush1.msra.mxu0 0.0
        %1943 = vmatprep.subr.mxu0 0.0
        %1944 = vmatpush1.msra.mxu0 0.0
        %1945 = vmatprep.subr.mxu0 0.0
        %1946 = vmatpush1.msra.mxu0 0.0
        %1947 = vmatprep.subr.mxu0 0.0
        %1948 = vmatpush1.msra.mxu0 0.0
        %1949 = vmatprep.subr.mxu0 0.0
        %1950 = vmatpush1.msra.mxu0 0.0
        %1951 = vmatprep.subr.mxu0 0.0
        %1952 = vmatpush1.msra.mxu0 0.0
        %1953 = vmatprep.subr.mxu0 0.0
        %1954 = vmatpush1.msra.mxu0 0.0
        %1955 = vmatprep.subr.mxu0 0.0
        %1956 = vmatpush1.msra.mxu0 0.0
        %1957 = vmatprep.subr.mxu0 0.0
        %1958 = vmatpush1.msra.mxu0 0.0
        %1959 = vmatprep.subr.mxu0 0.0
        %1960 = vmatpush1.msra.mxu0 0.0
        %1961 = vmatprep.subr.mxu0 0.0
        %1962 = vmatpush1.msra.mxu0 0.0
        %1963 = vmatprep.subr.mxu0 0.0
        %1964 = vmatpush1.msra.mxu0 0.0
        %1965 = vmatprep.subr.mxu0 0.0
        %1966 = vmatpush1.msra.mxu0 %v1936
        %1967 = vmatprep.subr.mxu0 0.0
        %1968 = vmatpush1.msra.mxu0 %v1935
        %1969 = vmatprep.subr.mxu0 0.0
        %1970 = vmatpush2.msra.mxu0 0.0
        %1971 = vmatprep.subr.mxu0 0.0
        %1972 = vmatpush2.msra.mxu0 0.0
        %1973 = vmatprep.subr.mxu0 0.0
        %1974 = vmatpush2.msra.mxu0 0.0
        %1975 = vmatprep.subr.mxu0 0.0
        %1976 = vmatpush2.msra.mxu0 0.0
        %1977 = vmatprep.subr.mxu0 0.0
        %1978 = vmatpush2.msra.mxu0 0.0
        %1979 = vmatprep.subr.mxu0 0.0
        %1980 = vmatpush2.msra.mxu0 0.0
        %1981 = vmatprep.subr.mxu0 0.0
        %1982 = vmatpush2.msra.mxu0 0.0
        %1983 = vmatprep.subr.mxu0 0.0
        %1984 = vmatpush2.msra.mxu0 0.0
        %1985 = vmatprep.subr.mxu0 0.0
        %1986 = vmatpush2.msra.mxu0 0.0
        %1987 = vmatprep.subr.mxu0 0.0
        %1988 = vmatpush2.msra.mxu0 0.0
        %1989 = vmatprep.subr.mxu0 0.0
        %1990 = vmatpush2.msra.mxu0 0.0
        %1991 = vmatprep.subr.mxu0 0.0
        %1992 = vmatpush2.msra.mxu0 0.0
        %1993 = vmatprep.subr.mxu0 0.0
        %1994 = vmatpush2.msra.mxu0 0.0
        %1995 = vmatprep.subr.mxu0 0.0
        %1996 = vmatpush2.msra.mxu0 0.0
        %1997 = vmatprep.subr.mxu0 0.0
        %1998 = vmatpush2.msra.mxu0 0.0
        %1999 = vmatprep.subr.mxu0 0.0
        %2000 = vmatpush2.msra.mxu0 0.0
        %2001 = vmatprep.mubr.f32.mxu0 0.0
        %2002 = vmatmul.mubr.f32.gmra.mxu0 %v594
        %v2003 = vpop.f32.mrf.mxu0
        %v2004 = vadd.f32 0.0, %v2003
        %v2005 = vpop.f32.mrf.mxu0
        %2006 = vmatprep.mubr.f32.mxu0 0.0
        %2007 = vmatmul.mubr.f32.gmra.mxu0 %v597
        %v2008 = vpop.f32.mrf.mxu0
        %v2009 = vadd.f32 0.0, %v2008
        %v2010 = vpop.f32.mrf.mxu0
        %2011 = vmatprep.mubr.f32.mxu0 0.0
        %2012 = vmatmul.mubr.f32.gmra.mxu0 %v600
        %v2013 = vpop.f32.mrf.mxu0
        %v2014 = vadd.f32 0.0, %v2013
        %v2015 = vpop.f32.mrf.mxu0
        %2016 = vmatprep.mubr.f32.mxu0 0.0
        %2017 = vmatmul.mubr.f32.gmra.mxu0 %v603
        %v2018 = vpop.f32.mrf.mxu0
        %v2019 = vadd.f32 0.0, %v2018
        %v2020 = vpop.f32.mrf.mxu0
        %2021 = vmatprep.mubr.f32.mxu0 0.0
        %2022 = vmatmul.mubr.f32.gmra.mxu0 %v606
        %v2023 = vpop.f32.mrf.mxu0
        %v2024 = vadd.f32 0.0, %v2023
        %v2025 = vpop.f32.mrf.mxu0
        %2026 = vmatprep.mubr.f32.mxu0 0.0
        %2027 = vmatmul.mubr.f32.gmra.mxu0 %v609
        %v2028 = vpop.f32.mrf.mxu0
        %v2029 = vadd.f32 0.0, %v2028
        %v2030 = vpop.f32.mrf.mxu0
        %2031 = vmatprep.mubr.f32.mxu0 0.0
        %2032 = vmatmul.mubr.f32.gmra.mxu0 %v612
        %v2033 = vpop.f32.mrf.mxu0
        %v2034 = vadd.f32 0.0, %v2033
        %v2035 = vpop.f32.mrf.mxu0
        %2036 = vmatprep.mubr.f32.mxu0 0.0
        %2037 = vmatmul.mubr.f32.gmra.mxu0 %v615
        %v2038 = vpop.f32.mrf.mxu0
        %v2039 = vadd.f32 0.0, %v2038
        %v2040 = vpop.f32.mrf.mxu0
        %2041 = vmatprep.mubr.f32.mxu0 0.0
        %2042 = vmatmul.mubr.f32.gmra.mxu0 %v618
        %v2043 = vpop.f32.mrf.mxu0
        %v2044 = vadd.f32 0.0, %v2043
        %v2045 = vpop.f32.mrf.mxu0
        %2046 = vmatprep.mubr.f32.mxu0 0.0
        %2047 = vmatmul.mubr.f32.gmra.mxu0 %v621
        %v2048 = vpop.f32.mrf.mxu0
        %v2049 = vadd.f32 0.0, %v2048
        %v2050 = vpop.f32.mrf.mxu0
        %2051 = vmatprep.mubr.f32.mxu0 0.0
        %2052 = vmatmul.mubr.f32.gmra.mxu0 %v624
        %v2053 = vpop.f32.mrf.mxu0
        %v2054 = vadd.f32 0.0, %v2053
        %v2055 = vpop.f32.mrf.mxu0
        %2056 = vmatprep.mubr.f32.mxu0 0.0
        %2057 = vmatmul.mubr.f32.gmra.mxu0 %v627
        %v2058 = vpop.f32.mrf.mxu0
        %v2059 = vadd.f32 0.0, %v2058
        %v2060 = vpop.f32.mrf.mxu0
        %2061 = vmatprep.mubr.f32.mxu0 0.0
        %2062 = vmatmul.mubr.f32.gmra.mxu0 %v630
        %v2063 = vpop.f32.mrf.mxu0
        %v2064 = vadd.f32 0.0, %v2063
        %v2065 = vpop.f32.mrf.mxu0
        %2066 = vmatprep.mubr.f32.mxu0 0.0
        %2067 = vmatmul.mubr.f32.gmra.mxu0 %v633
        %v2068 = vpop.f32.mrf.mxu0
        %v2069 = vadd.f32 0.0, %v2068
        %v2070 = vpop.f32.mrf.mxu0
        %2071 = vmatprep.mubr.f32.mxu0 0.0
        %2072 = vmatmul.mubr.f32.gmra.mxu0 %v636
        %v2073 = vpop.f32.mrf.mxu0
        %v2074 = vadd.f32 0.0, %v2073
        %v2075 = vpop.f32.mrf.mxu0
        %2076 = vmatprep.mubr.f32.mxu0 0.0
        %2077 = vmatmul.mubr.f32.gmra.mxu0 %v639
        %v2078 = vpop.f32.mrf.mxu0
        %v2079 = vadd.f32 0.0, %v2078
        %v2080 = vpop.f32.mrf.mxu0
        %2081 = vdwg.mxu0
        %v2082 = vsel %vm1738, %v2004, %v1574
        %v2083 = vsel %vm1739, %v2009, %v1575
        %v2084 = vsel %vm1740, %v2014, %v1576
        %v2085 = vsel %vm1741, %v2019, %v1577
        %v2086 = vsel %vm1742, %v2024, %v1578
        %v2087 = vsel %vm1743, %v2029, %v1579
        %v2088 = vsel %vm1744, %v2034, %v1580
        %v2089 = vsel %vm1745, %v2039, %v1581
        %v2090 = vsel %vm1746, %v2044, %v1582
        %v2091 = vsel %vm1747, %v2049, %v1583
        %v2092 = vsel %vm1748, %v2054, %v1584
        %v2093 = vsel %vm1749, %v2059, %v1585
        %v2094 = vsel %vm1750, %v2064, %v1586
        %v2095 = vsel %vm1751, %v2069, %v1587
        %v2096 = vsel %vm1752, %v2074, %v1588
        %v2097 = vsel %vm1753, %v2079, %v1589
        %s2098 = scalar_lea.vmem [#allocation2], 240
        %v2099 = vld [vmem:[%s2098] sm:$0xff]
        %v2100 = vld [vmem:[%s2098 + $0x8] sm:$0xff]
        %2101 = vmatprep.subr.mxu0 0.0
        %2102 = vmatpush1.msra.mxu0 0.0
        %2103 = vmatprep.subr.mxu0 0.0
        %2104 = vmatpush1.msra.mxu0 0.0
        %2105 = vmatprep.subr.mxu0 0.0
        %2106 = vmatpush1.msra.mxu0 0.0
        %2107 = vmatprep.subr.mxu0 0.0
        %2108 = vmatpush1.msra.mxu0 0.0
        %2109 = vmatprep.subr.mxu0 0.0
        %2110 = vmatpush1.msra.mxu0 0.0
        %2111 = vmatprep.subr.mxu0 0.0
        %2112 = vmatpush1.msra.mxu0 0.0
        %2113 = vmatprep.subr.mxu0 0.0
        %2114 = vmatpush1.msra.mxu0 0.0
        %2115 = vmatprep.subr.mxu0 0.0
        %2116 = vmatpush1.msra.mxu0 0.0
        %2117 = vmatprep.subr.mxu0 0.0
        %2118 = vmatpush1.msra.mxu0 0.0
        %2119 = vmatprep.subr.mxu0 0.0
        %2120 = vmatpush1.msra.mxu0 0.0
        %2121 = vmatprep.subr.mxu0 0.0
        %2122 = vmatpush1.msra.mxu0 0.0
        %2123 = vmatprep.subr.mxu0 0.0
        %2124 = vmatpush1.msra.mxu0 0.0
        %2125 = vmatprep.subr.mxu0 0.0
        %2126 = vmatpush1.msra.mxu0 0.0
        %2127 = vmatprep.subr.mxu0 0.0
        %2128 = vmatpush1.msra.mxu0 0.0
        %2129 = vmatprep.subr.mxu0 0.0
        %2130 = vmatpush1.msra.mxu0 %v2100
        %2131 = vmatprep.subr.mxu0 0.0
        %2132 = vmatpush1.msra.mxu0 %v2099
        %2133 = vmatprep.subr.mxu0 0.0
        %2134 = vmatpush2.msra.mxu0 0.0
        %2135 = vmatprep.subr.mxu0 0.0
        %2136 = vmatpush2.msra.mxu0 0.0
        %2137 = vmatprep.subr.mxu0 0.0
        %2138 = vmatpush2.msra.mxu0 0.0
        %2139 = vmatprep.subr.mxu0 0.0
        %2140 = vmatpush2.msra.mxu0 0.0
        %2141 = vmatprep.subr.mxu0 0.0
        %2142 = vmatpush2.msra.mxu0 0.0
        %2143 = vmatprep.subr.mxu0 0.0
        %2144 = vmatpush2.msra.mxu0 0.0
        %2145 = vmatprep.subr.mxu0 0.0
        %2146 = vmatpush2.msra.mxu0 0.0
        %2147 = vmatprep.subr.mxu0 0.0
        %2148 = vmatpush2.msra.mxu0 0.0
        %2149 = vmatprep.subr.mxu0 0.0
        %2150 = vmatpush2.msra.mxu0 0.0
        %2151 = vmatprep.subr.mxu0 0.0
        %2152 = vmatpush2.msra.mxu0 0.0
        %2153 = vmatprep.subr.mxu0 0.0
        %2154 = vmatpush2.msra.mxu0 0.0
        %2155 = vmatprep.subr.mxu0 0.0
        %2156 = vmatpush2.msra.mxu0 0.0
        %2157 = vmatprep.subr.mxu0 0.0
        %2158 = vmatpush2.msra.mxu0 0.0
        %2159 = vmatprep.subr.mxu0 0.0
        %2160 = vmatpush2.msra.mxu0 0.0
        %2161 = vmatprep.subr.mxu0 0.0
        %2162 = vmatpush2.msra.mxu0 0.0
        %2163 = vmatprep.subr.mxu0 0.0
        %2164 = vmatpush2.msra.mxu0 0.0
        %2165 = vmatprep.mubr.f32.mxu0 0.0
        %2166 = vmatmul.mubr.f32.gmra.mxu0 %v594
        %v2167 = vpop.f32.mrf.mxu0
        %v2168 = vadd.f32 0.0, %v2167
        %v2169 = vpop.f32.mrf.mxu0
        %2170 = vmatprep.mubr.f32.mxu0 0.0
        %2171 = vmatmul.mubr.f32.gmra.mxu0 %v597
        %v2172 = vpop.f32.mrf.mxu0
        %v2173 = vadd.f32 0.0, %v2172
        %v2174 = vpop.f32.mrf.mxu0
        %2175 = vmatprep.mubr.f32.mxu0 0.0
        %2176 = vmatmul.mubr.f32.gmra.mxu0 %v600
        %v2177 = vpop.f32.mrf.mxu0
        %v2178 = vadd.f32 0.0, %v2177
        %v2179 = vpop.f32.mrf.mxu0
        %2180 = vmatprep.mubr.f32.mxu0 0.0
        %2181 = vmatmul.mubr.f32.gmra.mxu0 %v603
        %v2182 = vpop.f32.mrf.mxu0
        %v2183 = vadd.f32 0.0, %v2182
        %v2184 = vpop.f32.mrf.mxu0
        %2185 = vmatprep.mubr.f32.mxu0 0.0
        %2186 = vmatmul.mubr.f32.gmra.mxu0 %v606
        %v2187 = vpop.f32.mrf.mxu0
        %v2188 = vadd.f32 0.0, %v2187
        %v2189 = vpop.f32.mrf.mxu0
        %2190 = vmatprep.mubr.f32.mxu0 0.0
        %2191 = vmatmul.mubr.f32.gmra.mxu0 %v609
        %v2192 = vpop.f32.mrf.mxu0
        %v2193 = vadd.f32 0.0, %v2192
        %v2194 = vpop.f32.mrf.mxu0
        %2195 = vmatprep.mubr.f32.mxu0 0.0
        %2196 = vmatmul.mubr.f32.gmra.mxu0 %v612
        %v2197 = vpop.f32.mrf.mxu0
        %v2198 = vadd.f32 0.0, %v2197
        %v2199 = vpop.f32.mrf.mxu0
        %2200 = vmatprep.mubr.f32.mxu0 0.0
        %2201 = vmatmul.mubr.f32.gmra.mxu0 %v615
        %v2202 = vpop.f32.mrf.mxu0
        %v2203 = vadd.f32 0.0, %v2202
        %v2204 = vpop.f32.mrf.mxu0
        %2205 = vmatprep.mubr.f32.mxu0 0.0
        %2206 = vmatmul.mubr.f32.gmra.mxu0 %v618
        %v2207 = vpop.f32.mrf.mxu0
        %v2208 = vadd.f32 0.0, %v2207
        %v2209 = vpop.f32.mrf.mxu0
        %2210 = vmatprep.mubr.f32.mxu0 0.0
        %2211 = vmatmul.mubr.f32.gmra.mxu0 %v621
        %v2212 = vpop.f32.mrf.mxu0
        %v2213 = vadd.f32 0.0, %v2212
        %v2214 = vpop.f32.mrf.mxu0
        %2215 = vmatprep.mubr.f32.mxu0 0.0
        %2216 = vmatmul.mubr.f32.gmra.mxu0 %v624
        %v2217 = vpop.f32.mrf.mxu0
        %v2218 = vadd.f32 0.0, %v2217
        %v2219 = vpop.f32.mrf.mxu0
        %2220 = vmatprep.mubr.f32.mxu0 0.0
        %2221 = vmatmul.mubr.f32.gmra.mxu0 %v627
        %v2222 = vpop.f32.mrf.mxu0
        %v2223 = vadd.f32 0.0, %v2222
        %v2224 = vpop.f32.mrf.mxu0
        %2225 = vmatprep.mubr.f32.mxu0 0.0
        %2226 = vmatmul.mubr.f32.gmra.mxu0 %v630
        %v2227 = vpop.f32.mrf.mxu0
        %v2228 = vadd.f32 0.0, %v2227
        %v2229 = vpop.f32.mrf.mxu0
        %2230 = vmatprep.mubr.f32.mxu0 0.0
        %2231 = vmatmul.mubr.f32.gmra.mxu0 %v633
        %v2232 = vpop.f32.mrf.mxu0
        %v2233 = vadd.f32 0.0, %v2232
        %v2234 = vpop.f32.mrf.mxu0
        %2235 = vmatprep.mubr.f32.mxu0 0.0
        %2236 = vmatmul.mubr.f32.gmra.mxu0 %v636
        %v2237 = vpop.f32.mrf.mxu0
        %v2238 = vadd.f32 0.0, %v2237
        %v2239 = vpop.f32.mrf.mxu0
        %2240 = vmatprep.mubr.f32.mxu0 0.0
        %2241 = vmatmul.mubr.f32.gmra.mxu0 %v639
        %v2242 = vpop.f32.mrf.mxu0
        %v2243 = vadd.f32 0.0, %v2242
        %v2244 = vpop.f32.mrf.mxu0
        %2245 = vdwg.mxu0
        %vm2246 = vcmp.gt.f32.partialorder %v2168, %v1754
        %vm2247 = vcmp.gt.f32.partialorder %v2173, %v1755
        %vm2248 = vcmp.gt.f32.partialorder %v2178, %v1756
        %vm2249 = vcmp.gt.f32.partialorder %v2183, %v1757
        %vm2250 = vcmp.gt.f32.partialorder %v2188, %v1758
        %vm2251 = vcmp.gt.f32.partialorder %v2193, %v1759
        %vm2252 = vcmp.gt.f32.partialorder %v2198, %v1760
        %vm2253 = vcmp.gt.f32.partialorder %v2203, %v1761
        %vm2254 = vcmp.gt.f32.partialorder %v2208, %v1762
        %vm2255 = vcmp.gt.f32.partialorder %v2213, %v1763
        %vm2256 = vcmp.gt.f32.partialorder %v2218, %v1764
        %vm2257 = vcmp.gt.f32.partialorder %v2223, %v1765
        %vm2258 = vcmp.gt.f32.partialorder %v2228, %v1766
        %vm2259 = vcmp.gt.f32.partialorder %v2233, %v1767
        %vm2260 = vcmp.gt.f32.partialorder %v2238, %v1768
        %vm2261 = vcmp.gt.f32.partialorder %v2243, %v1769
        %s2262 = scalar_lea.vmem [#allocation2], 112
        %v2263 = vld [vmem:[%s2262] sm:$0xff]
        %v2264 = vld [vmem:[%s2262 + $0x8] sm:$0xff]
        %2265 = vmatprep.subr.mxu0 0.0
        %2266 = vmatpush1.msra.mxu0 0.0
        %2267 = vmatprep.subr.mxu0 0.0
        %2268 = vmatpush1.msra.mxu0 0.0
        %2269 = vmatprep.subr.mxu0 0.0
        %2270 = vmatpush1.msra.mxu0 0.0
        %2271 = vmatprep.subr.mxu0 0.0
        %2272 = vmatpush1.msra.mxu0 0.0
        %2273 = vmatprep.subr.mxu0 0.0
        %2274 = vmatpush1.msra.mxu0 0.0
        %2275 = vmatprep.subr.mxu0 0.0
        %2276 = vmatpush1.msra.mxu0 0.0
        %2277 = vmatprep.subr.mxu0 0.0
        %2278 = vmatpush1.msra.mxu0 0.0
        %2279 = vmatprep.subr.mxu0 0.0
        %2280 = vmatpush1.msra.mxu0 0.0
        %2281 = vmatprep.subr.mxu0 0.0
        %2282 = vmatpush1.msra.mxu0 0.0
        %2283 = vmatprep.subr.mxu0 0.0
        %2284 = vmatpush1.msra.mxu0 0.0
        %2285 = vmatprep.subr.mxu0 0.0
        %2286 = vmatpush1.msra.mxu0 0.0
        %2287 = vmatprep.subr.mxu0 0.0
        %2288 = vmatpush1.msra.mxu0 0.0
        %2289 = vmatprep.subr.mxu0 0.0
        %2290 = vmatpush1.msra.mxu0 0.0
        %2291 = vmatprep.subr.mxu0 0.0
        %2292 = vmatpush1.msra.mxu0 0.0
        %2293 = vmatprep.subr.mxu0 0.0
        %2294 = vmatpush1.msra.mxu0 %v2264
        %2295 = vmatprep.subr.mxu0 0.0
        %2296 = vmatpush1.msra.mxu0 %v2263
        %2297 = vmatprep.subr.mxu0 0.0
        %2298 = vmatpush2.msra.mxu0 0.0
        %2299 = vmatprep.subr.mxu0 0.0
        %2300 = vmatpush2.msra.mxu0 0.0
        %2301 = vmatprep.subr.mxu0 0.0
        %2302 = vmatpush2.msra.mxu0 0.0
        %2303 = vmatprep.subr.mxu0 0.0
        %2304 = vmatpush2.msra.mxu0 0.0
        %2305 = vmatprep.subr.mxu0 0.0
        %2306 = vmatpush2.msra.mxu0 0.0
        %2307 = vmatprep.subr.mxu0 0.0
        %2308 = vmatpush2.msra.mxu0 0.0
        %2309 = vmatprep.subr.mxu0 0.0
        %2310 = vmatpush2.msra.mxu0 0.0
        %2311 = vmatprep.subr.mxu0 0.0
        %2312 = vmatpush2.msra.mxu0 0.0
        %2313 = vmatprep.subr.mxu0 0.0
        %2314 = vmatpush2.msra.mxu0 0.0
        %2315 = vmatprep.subr.mxu0 0.0
        %2316 = vmatpush2.msra.mxu0 0.0
        %2317 = vmatprep.subr.mxu0 0.0
        %2318 = vmatpush2.msra.mxu0 0.0
        %2319 = vmatprep.subr.mxu0 0.0
        %2320 = vmatpush2.msra.mxu0 0.0
        %2321 = vmatprep.subr.mxu0 0.0
        %2322 = vmatpush2.msra.mxu0 0.0
        %2323 = vmatprep.subr.mxu0 0.0
        %2324 = vmatpush2.msra.mxu0 0.0
        %2325 = vmatprep.subr.mxu0 0.0
        %2326 = vmatpush2.msra.mxu0 0.0
        %2327 = vmatprep.subr.mxu0 0.0
        %2328 = vmatpush2.msra.mxu0 0.0
        %2329 = vmatprep.mubr.f32.mxu0 0.0
        %2330 = vmatmul.mubr.f32.gmra.mxu0 %v594
        %v2331 = vpop.f32.mrf.mxu0
        %v2332 = vadd.f32 0.0, %v2331
        %v2333 = vpop.f32.mrf.mxu0
        %2334 = vmatprep.mubr.f32.mxu0 0.0
        %2335 = vmatmul.mubr.f32.gmra.mxu0 %v597
        %v2336 = vpop.f32.mrf.mxu0
        %v2337 = vadd.f32 0.0, %v2336
        %v2338 = vpop.f32.mrf.mxu0
        %2339 = vmatprep.mubr.f32.mxu0 0.0
        %2340 = vmatmul.mubr.f32.gmra.mxu0 %v600
        %v2341 = vpop.f32.mrf.mxu0
        %v2342 = vadd.f32 0.0, %v2341
        %v2343 = vpop.f32.mrf.mxu0
        %2344 = vmatprep.mubr.f32.mxu0 0.0
        %2345 = vmatmul.mubr.f32.gmra.mxu0 %v603
        %v2346 = vpop.f32.mrf.mxu0
        %v2347 = vadd.f32 0.0, %v2346
        %v2348 = vpop.f32.mrf.mxu0
        %2349 = vmatprep.mubr.f32.mxu0 0.0
        %2350 = vmatmul.mubr.f32.gmra.mxu0 %v606
        %v2351 = vpop.f32.mrf.mxu0
        %v2352 = vadd.f32 0.0, %v2351
        %v2353 = vpop.f32.mrf.mxu0
        %2354 = vmatprep.mubr.f32.mxu0 0.0
        %2355 = vmatmul.mubr.f32.gmra.mxu0 %v609
        %v2356 = vpop.f32.mrf.mxu0
        %v2357 = vadd.f32 0.0, %v2356
        %v2358 = vpop.f32.mrf.mxu0
        %2359 = vmatprep.mubr.f32.mxu0 0.0
        %2360 = vmatmul.mubr.f32.gmra.mxu0 %v612
        %v2361 = vpop.f32.mrf.mxu0
        %v2362 = vadd.f32 0.0, %v2361
        %v2363 = vpop.f32.mrf.mxu0
        %2364 = vmatprep.mubr.f32.mxu0 0.0
        %2365 = vmatmul.mubr.f32.gmra.mxu0 %v615
        %v2366 = vpop.f32.mrf.mxu0
        %v2367 = vadd.f32 0.0, %v2366
        %v2368 = vpop.f32.mrf.mxu0
        %2369 = vmatprep.mubr.f32.mxu0 0.0
        %2370 = vmatmul.mubr.f32.gmra.mxu0 %v618
        %v2371 = vpop.f32.mrf.mxu0
        %v2372 = vadd.f32 0.0, %v2371
        %v2373 = vpop.f32.mrf.mxu0
        %2374 = vmatprep.mubr.f32.mxu0 0.0
        %2375 = vmatmul.mubr.f32.gmra.mxu0 %v621
        %v2376 = vpop.f32.mrf.mxu0
        %v2377 = vadd.f32 0.0, %v2376
        %v2378 = vpop.f32.mrf.mxu0
        %2379 = vmatprep.mubr.f32.mxu0 0.0
        %2380 = vmatmul.mubr.f32.gmra.mxu0 %v624
        %v2381 = vpop.f32.mrf.mxu0
        %v2382 = vadd.f32 0.0, %v2381
        %v2383 = vpop.f32.mrf.mxu0
        %2384 = vmatprep.mubr.f32.mxu0 0.0
        %2385 = vmatmul.mubr.f32.gmra.mxu0 %v627
        %v2386 = vpop.f32.mrf.mxu0
        %v2387 = vadd.f32 0.0, %v2386
        %v2388 = vpop.f32.mrf.mxu0
        %2389 = vmatprep.mubr.f32.mxu0 0.0
        %2390 = vmatmul.mubr.f32.gmra.mxu0 %v630
        %v2391 = vpop.f32.mrf.mxu0
        %v2392 = vadd.f32 0.0, %v2391
        %v2393 = vpop.f32.mrf.mxu0
        %2394 = vmatprep.mubr.f32.mxu0 0.0
        %2395 = vmatmul.mubr.f32.gmra.mxu0 %v633
        %v2396 = vpop.f32.mrf.mxu0
        %v2397 = vadd.f32 0.0, %v2396
        %v2398 = vpop.f32.mrf.mxu0
        %2399 = vmatprep.mubr.f32.mxu0 0.0
        %2400 = vmatmul.mubr.f32.gmra.mxu0 %v636
        %v2401 = vpop.f32.mrf.mxu0
        %v2402 = vadd.f32 0.0, %v2401
        %v2403 = vpop.f32.mrf.mxu0
        %2404 = vmatprep.mubr.f32.mxu0 0.0
        %2405 = vmatmul.mubr.f32.gmra.mxu0 %v639
        %v2406 = vpop.f32.mrf.mxu0
        %v2407 = vadd.f32 0.0, %v2406
        %v2408 = vpop.f32.mrf.mxu0
        %2409 = vdwg.mxu0
        %v2410 = vsel %vm2246, %v2332, %v1918
        %v2411 = vsel %vm2247, %v2337, %v1919
        %v2412 = vsel %vm2248, %v2342, %v1920
        %v2413 = vsel %vm2249, %v2347, %v1921
        %v2414 = vsel %vm2250, %v2352, %v1922
        %v2415 = vsel %vm2251, %v2357, %v1923
        %v2416 = vsel %vm2252, %v2362, %v1924
        %v2417 = vsel %vm2253, %v2367, %v1925
        %v2418 = vsel %vm2254, %v2372, %v1926
        %v2419 = vsel %vm2255, %v2377, %v1927
        %v2420 = vsel %vm2256, %v2382, %v1928
        %v2421 = vsel %vm2257, %v2387, %v1929
        %v2422 = vsel %vm2258, %v2392, %v1930
        %v2423 = vsel %vm2259, %v2397, %v1931
        %v2424 = vsel %vm2260, %v2402, %v1932
        %v2425 = vsel %vm2261, %v2407, %v1933
        %s2426 = scalar_lea.vmem [#allocation2], 176
        %v2427 = vld [vmem:[%s2426] sm:$0xff]
        %v2428 = vld [vmem:[%s2426 + $0x8] sm:$0xff]
        %2429 = vmatprep.subr.mxu0 0.0
        %2430 = vmatpush1.msra.mxu0 0.0
        %2431 = vmatprep.subr.mxu0 0.0
        %2432 = vmatpush1.msra.mxu0 0.0
        %2433 = vmatprep.subr.mxu0 0.0
        %2434 = vmatpush1.msra.mxu0 0.0
        %2435 = vmatprep.subr.mxu0 0.0
        %2436 = vmatpush1.msra.mxu0 0.0
        %2437 = vmatprep.subr.mxu0 0.0
        %2438 = vmatpush1.msra.mxu0 0.0
        %2439 = vmatprep.subr.mxu0 0.0
        %2440 = vmatpush1.msra.mxu0 0.0
        %2441 = vmatprep.subr.mxu0 0.0
        %2442 = vmatpush1.msra.mxu0 0.0
        %2443 = vmatprep.subr.mxu0 0.0
        %2444 = vmatpush1.msra.mxu0 0.0
        %2445 = vmatprep.subr.mxu0 0.0
        %2446 = vmatpush1.msra.mxu0 0.0
        %2447 = vmatprep.subr.mxu0 0.0
        %2448 = vmatpush1.msra.mxu0 0.0
        %2449 = vmatprep.subr.mxu0 0.0
        %2450 = vmatpush1.msra.mxu0 0.0
        %2451 = vmatprep.subr.mxu0 0.0
        %2452 = vmatpush1.msra.mxu0 0.0
        %2453 = vmatprep.subr.mxu0 0.0
        %2454 = vmatpush1.msra.mxu0 0.0
        %2455 = vmatprep.subr.mxu0 0.0
        %2456 = vmatpush1.msra.mxu0 0.0
        %2457 = vmatprep.subr.mxu0 0.0
        %2458 = vmatpush1.msra.mxu0 %v2428
        %2459 = vmatprep.subr.mxu0 0.0
        %2460 = vmatpush1.msra.mxu0 %v2427
        %2461 = vmatprep.subr.mxu0 0.0
        %2462 = vmatpush2.msra.mxu0 0.0
        %2463 = vmatprep.subr.mxu0 0.0
        %2464 = vmatpush2.msra.mxu0 0.0
        %2465 = vmatprep.subr.mxu0 0.0
        %2466 = vmatpush2.msra.mxu0 0.0
        %2467 = vmatprep.subr.mxu0 0.0
        %2468 = vmatpush2.msra.mxu0 0.0
        %2469 = vmatprep.subr.mxu0 0.0
        %2470 = vmatpush2.msra.mxu0 0.0
        %2471 = vmatprep.subr.mxu0 0.0
        %2472 = vmatpush2.msra.mxu0 0.0
        %2473 = vmatprep.subr.mxu0 0.0
        %2474 = vmatpush2.msra.mxu0 0.0
        %2475 = vmatprep.subr.mxu0 0.0
        %2476 = vmatpush2.msra.mxu0 0.0
        %2477 = vmatprep.subr.mxu0 0.0
        %2478 = vmatpush2.msra.mxu0 0.0
        %2479 = vmatprep.subr.mxu0 0.0
        %2480 = vmatpush2.msra.mxu0 0.0
        %2481 = vmatprep.subr.mxu0 0.0
        %2482 = vmatpush2.msra.mxu0 0.0
        %2483 = vmatprep.subr.mxu0 0.0
        %2484 = vmatpush2.msra.mxu0 0.0
        %2485 = vmatprep.subr.mxu0 0.0
        %2486 = vmatpush2.msra.mxu0 0.0
        %2487 = vmatprep.subr.mxu0 0.0
        %2488 = vmatpush2.msra.mxu0 0.0
        %2489 = vmatprep.subr.mxu0 0.0
        %2490 = vmatpush2.msra.mxu0 0.0
        %2491 = vmatprep.subr.mxu0 0.0
        %2492 = vmatpush2.msra.mxu0 0.0
        %2493 = vmatprep.mubr.f32.mxu0 0.0
        %2494 = vmatmul.mubr.f32.gmra.mxu0 %v594
        %v2495 = vpop.f32.mrf.mxu0
        %v2496 = vadd.f32 0.0, %v2495
        %v2497 = vpop.f32.mrf.mxu0
        %2498 = vmatprep.mubr.f32.mxu0 0.0
        %2499 = vmatmul.mubr.f32.gmra.mxu0 %v597
        %v2500 = vpop.f32.mrf.mxu0
        %v2501 = vadd.f32 0.0, %v2500
        %v2502 = vpop.f32.mrf.mxu0
        %2503 = vmatprep.mubr.f32.mxu0 0.0
        %2504 = vmatmul.mubr.f32.gmra.mxu0 %v600
        %v2505 = vpop.f32.mrf.mxu0
        %v2506 = vadd.f32 0.0, %v2505
        %v2507 = vpop.f32.mrf.mxu0
        %2508 = vmatprep.mubr.f32.mxu0 0.0
        %2509 = vmatmul.mubr.f32.gmra.mxu0 %v603
        %v2510 = vpop.f32.mrf.mxu0
        %v2511 = vadd.f32 0.0, %v2510
        %v2512 = vpop.f32.mrf.mxu0
        %2513 = vmatprep.mubr.f32.mxu0 0.0
        %2514 = vmatmul.mubr.f32.gmra.mxu0 %v606
        %v2515 = vpop.f32.mrf.mxu0
        %v2516 = vadd.f32 0.0, %v2515
        %v2517 = vpop.f32.mrf.mxu0
        %2518 = vmatprep.mubr.f32.mxu0 0.0
        %2519 = vmatmul.mubr.f32.gmra.mxu0 %v609
        %v2520 = vpop.f32.mrf.mxu0
        %v2521 = vadd.f32 0.0, %v2520
        %v2522 = vpop.f32.mrf.mxu0
        %2523 = vmatprep.mubr.f32.mxu0 0.0
        %2524 = vmatmul.mubr.f32.gmra.mxu0 %v612
        %v2525 = vpop.f32.mrf.mxu0
        %v2526 = vadd.f32 0.0, %v2525
        %v2527 = vpop.f32.mrf.mxu0
        %2528 = vmatprep.mubr.f32.mxu0 0.0
        %2529 = vmatmul.mubr.f32.gmra.mxu0 %v615
        %v2530 = vpop.f32.mrf.mxu0
        %v2531 = vadd.f32 0.0, %v2530
        %v2532 = vpop.f32.mrf.mxu0
        %2533 = vmatprep.mubr.f32.mxu0 0.0
        %2534 = vmatmul.mubr.f32.gmra.mxu0 %v618
        %v2535 = vpop.f32.mrf.mxu0
        %v2536 = vadd.f32 0.0, %v2535
        %v2537 = vpop.f32.mrf.mxu0
        %2538 = vmatprep.mubr.f32.mxu0 0.0
        %2539 = vmatmul.mubr.f32.gmra.mxu0 %v621
        %v2540 = vpop.f32.mrf.mxu0
        %v2541 = vadd.f32 0.0, %v2540
        %v2542 = vpop.f32.mrf.mxu0
        %2543 = vmatprep.mubr.f32.mxu0 0.0
        %2544 = vmatmul.mubr.f32.gmra.mxu0 %v624
        %v2545 = vpop.f32.mrf.mxu0
        %v2546 = vadd.f32 0.0, %v2545
        %v2547 = vpop.f32.mrf.mxu0
        %2548 = vmatprep.mubr.f32.mxu0 0.0
        %2549 = vmatmul.mubr.f32.gmra.mxu0 %v627
        %v2550 = vpop.f32.mrf.mxu0
        %v2551 = vadd.f32 0.0, %v2550
        %v2552 = vpop.f32.mrf.mxu0
        %2553 = vmatprep.mubr.f32.mxu0 0.0
        %2554 = vmatmul.mubr.f32.gmra.mxu0 %v630
        %v2555 = vpop.f32.mrf.mxu0
        %v2556 = vadd.f32 0.0, %v2555
        %v2557 = vpop.f32.mrf.mxu0
        %2558 = vmatprep.mubr.f32.mxu0 0.0
        %2559 = vmatmul.mubr.f32.gmra.mxu0 %v633
        %v2560 = vpop.f32.mrf.mxu0
        %v2561 = vadd.f32 0.0, %v2560
        %v2562 = vpop.f32.mrf.mxu0
        %2563 = vmatprep.mubr.f32.mxu0 0.0
        %2564 = vmatmul.mubr.f32.gmra.mxu0 %v636
        %v2565 = vpop.f32.mrf.mxu0
        %v2566 = vadd.f32 0.0, %v2565
        %v2567 = vpop.f32.mrf.mxu0
        %2568 = vmatprep.mubr.f32.mxu0 0.0
        %2569 = vmatmul.mubr.f32.gmra.mxu0 %v639
        %v2570 = vpop.f32.mrf.mxu0
        %v2571 = vadd.f32 0.0, %v2570
        %v2572 = vpop.f32.mrf.mxu0
        %2573 = vdwg.mxu0
        %v2574 = vsel %vm2246, %v2496, %v2082
        %v2575 = vsel %vm2247, %v2501, %v2083
        %v2576 = vsel %vm2248, %v2506, %v2084
        %v2577 = vsel %vm2249, %v2511, %v2085
        %v2578 = vsel %vm2250, %v2516, %v2086
        %v2579 = vsel %vm2251, %v2521, %v2087
        %v2580 = vsel %vm2252, %v2526, %v2088
        %v2581 = vsel %vm2253, %v2531, %v2089
        %v2582 = vsel %vm2254, %v2536, %v2090
        %v2583 = vsel %vm2255, %v2541, %v2091
        %v2584 = vsel %vm2256, %v2546, %v2092
        %v2585 = vsel %vm2257, %v2551, %v2093
        %v2586 = vsel %vm2258, %v2556, %v2094
        %v2587 = vsel %vm2259, %v2561, %v2095
        %v2588 = vsel %vm2260, %v2566, %v2096
        %v2589 = vsel %vm2261, %v2571, %v2097
        %v2590 = vld [vmem:[#allocation2] sm:$0xff]
        %v2591 = vld [vmem:[#allocation2 + $0x8] sm:$0xff]
        %2592 = vmatprep.subr.mxu0 0.0
        %2593 = vmatpush1.msra.mxu0 0.0
        %2594 = vmatprep.subr.mxu0 0.0
        %2595 = vmatpush1.msra.mxu0 0.0
        %2596 = vmatprep.subr.mxu0 0.0
        %2597 = vmatpush1.msra.mxu0 0.0
        %2598 = vmatprep.subr.mxu0 0.0
        %2599 = vmatpush1.msra.mxu0 0.0
        %2600 = vmatprep.subr.mxu0 0.0
        %2601 = vmatpush1.msra.mxu0 0.0
        %2602 = vmatprep.subr.mxu0 0.0
        %2603 = vmatpush1.msra.mxu0 0.0
        %2604 = vmatprep.subr.mxu0 0.0
        %2605 = vmatpush1.msra.mxu0 0.0
        %2606 = vmatprep.subr.mxu0 0.0
        %2607 = vmatpush1.msra.mxu0 0.0
        %2608 = vmatprep.subr.mxu0 0.0
        %2609 = vmatpush1.msra.mxu0 0.0
        %2610 = vmatprep.subr.mxu0 0.0
        %2611 = vmatpush1.msra.mxu0 0.0
        %2612 = vmatprep.subr.mxu0 0.0
        %2613 = vmatpush1.msra.mxu0 0.0
        %2614 = vmatprep.subr.mxu0 0.0
        %2615 = vmatpush1.msra.mxu0 0.0
        %2616 = vmatprep.subr.mxu0 0.0
        %2617 = vmatpush1.msra.mxu0 0.0
        %2618 = vmatprep.subr.mxu0 0.0
        %2619 = vmatpush1.msra.mxu0 0.0
        %2620 = vmatprep.subr.mxu0 0.0
        %2621 = vmatpush1.msra.mxu0 %v2591
        %2622 = vmatprep.subr.mxu0 0.0
        %2623 = vmatpush1.msra.mxu0 %v2590
        %2624 = vmatprep.subr.mxu0 0.0
        %2625 = vmatpush2.msra.mxu0 0.0
        %2626 = vmatprep.subr.mxu0 0.0
        %2627 = vmatpush2.msra.mxu0 0.0
        %2628 = vmatprep.subr.mxu0 0.0
        %2629 = vmatpush2.msra.mxu0 0.0
        %2630 = vmatprep.subr.mxu0 0.0
        %2631 = vmatpush2.msra.mxu0 0.0
        %2632 = vmatprep.subr.mxu0 0.0
        %2633 = vmatpush2.msra.mxu0 0.0
        %2634 = vmatprep.subr.mxu0 0.0
        %2635 = vmatpush2.msra.mxu0 0.0
        %2636 = vmatprep.subr.mxu0 0.0
        %2637 = vmatpush2.msra.mxu0 0.0
        %2638 = vmatprep.subr.mxu0 0.0
        %2639 = vmatpush2.msra.mxu0 0.0
        %2640 = vmatprep.subr.mxu0 0.0
        %2641 = vmatpush2.msra.mxu0 0.0
        %2642 = vmatprep.subr.mxu0 0.0
        %2643 = vmatpush2.msra.mxu0 0.0
        %2644 = vmatprep.subr.mxu0 0.0
        %2645 = vmatpush2.msra.mxu0 0.0
        %2646 = vmatprep.subr.mxu0 0.0
        %2647 = vmatpush2.msra.mxu0 0.0
        %2648 = vmatprep.subr.mxu0 0.0
        %2649 = vmatpush2.msra.mxu0 0.0
        %2650 = vmatprep.subr.mxu0 0.0
        %2651 = vmatpush2.msra.mxu0 0.0
        %2652 = vmatprep.subr.mxu0 0.0
        %2653 = vmatpush2.msra.mxu0 0.0
        %2654 = vmatprep.subr.mxu0 0.0
        %2655 = vmatpush2.msra.mxu0 0.0
        %2656 = vmatprep.mubr.f32.mxu0 0.0
        %2657 = vmatmul.mubr.f32.gmra.mxu0 %v594
        %v2658 = vpop.f32.mrf.mxu0
        %v2659 = vadd.f32 0.0, %v2658
        %v2660 = vpop.f32.mrf.mxu0
        %2661 = vmatprep.mubr.f32.mxu0 0.0
        %2662 = vmatmul.mubr.f32.gmra.mxu0 %v597
        %v2663 = vpop.f32.mrf.mxu0
        %v2664 = vadd.f32 0.0, %v2663
        %v2665 = vpop.f32.mrf.mxu0
        %2666 = vmatprep.mubr.f32.mxu0 0.0
        %2667 = vmatmul.mubr.f32.gmra.mxu0 %v600
        %v2668 = vpop.f32.mrf.mxu0
        %v2669 = vadd.f32 0.0, %v2668
        %v2670 = vpop.f32.mrf.mxu0
        %2671 = vmatprep.mubr.f32.mxu0 0.0
        %2672 = vmatmul.mubr.f32.gmra.mxu0 %v603
        %v2673 = vpop.f32.mrf.mxu0
        %v2674 = vadd.f32 0.0, %v2673
        %v2675 = vpop.f32.mrf.mxu0
        %2676 = vmatprep.mubr.f32.mxu0 0.0
        %2677 = vmatmul.mubr.f32.gmra.mxu0 %v606
        %v2678 = vpop.f32.mrf.mxu0
        %v2679 = vadd.f32 0.0, %v2678
        %v2680 = vpop.f32.mrf.mxu0
        %2681 = vmatprep.mubr.f32.mxu0 0.0
        %2682 = vmatmul.mubr.f32.gmra.mxu0 %v609
        %v2683 = vpop.f32.mrf.mxu0
        %v2684 = vadd.f32 0.0, %v2683
        %v2685 = vpop.f32.mrf.mxu0
        %2686 = vmatprep.mubr.f32.mxu0 0.0
        %2687 = vmatmul.mubr.f32.gmra.mxu0 %v612
        %v2688 = vpop.f32.mrf.mxu0
        %v2689 = vadd.f32 0.0, %v2688
        %v2690 = vpop.f32.mrf.mxu0
        %2691 = vmatprep.mubr.f32.mxu0 0.0
        %2692 = vmatmul.mubr.f32.gmra.mxu0 %v615
        %v2693 = vpop.f32.mrf.mxu0
        %v2694 = vadd.f32 0.0, %v2693
        %v2695 = vpop.f32.mrf.mxu0
        %2696 = vmatprep.mubr.f32.mxu0 0.0
        %2697 = vmatmul.mubr.f32.gmra.mxu0 %v618
        %v2698 = vpop.f32.mrf.mxu0
        %v2699 = vadd.f32 0.0, %v2698
        %v2700 = vpop.f32.mrf.mxu0
        %2701 = vmatprep.mubr.f32.mxu0 0.0
        %2702 = vmatmul.mubr.f32.gmra.mxu0 %v621
        %v2703 = vpop.f32.mrf.mxu0
        %v2704 = vadd.f32 0.0, %v2703
        %v2705 = vpop.f32.mrf.mxu0
        %2706 = vmatprep.mubr.f32.mxu0 0.0
        %2707 = vmatmul.mubr.f32.gmra.mxu0 %v624
        %v2708 = vpop.f32.mrf.mxu0
        %v2709 = vadd.f32 0.0, %v2708
        %v2710 = vpop.f32.mrf.mxu0
        %2711 = vmatprep.mubr.f32.mxu0 0.0
        %2712 = vmatmul.mubr.f32.gmra.mxu0 %v627
        %v2713 = vpop.f32.mrf.mxu0
        %v2714 = vadd.f32 0.0, %v2713
        %v2715 = vpop.f32.mrf.mxu0
        %2716 = vmatprep.mubr.f32.mxu0 0.0
        %2717 = vmatmul.mubr.f32.gmra.mxu0 %v630
        %v2718 = vpop.f32.mrf.mxu0
        %v2719 = vadd.f32 0.0, %v2718
        %v2720 = vpop.f32.mrf.mxu0
        %2721 = vmatprep.mubr.f32.mxu0 0.0
        %2722 = vmatmul.mubr.f32.gmra.mxu0 %v633
        %v2723 = vpop.f32.mrf.mxu0
        %v2724 = vadd.f32 0.0, %v2723
        %v2725 = vpop.f32.mrf.mxu0
        %2726 = vmatprep.mubr.f32.mxu0 0.0
        %2727 = vmatmul.mubr.f32.gmra.mxu0 %v636
        %v2728 = vpop.f32.mrf.mxu0
        %v2729 = vadd.f32 0.0, %v2728
        %v2730 = vpop.f32.mrf.mxu0
        %2731 = vmatprep.mubr.f32.mxu0 0.0
        %2732 = vmatmul.mubr.f32.gmra.mxu0 %v639
        %v2733 = vpop.f32.mrf.mxu0
        %v2734 = vadd.f32 0.0, %v2733
        %v2735 = vpop.f32.mrf.mxu0
        %2736 = vdwg.mxu0
        %2737 = vst [vmem:[#allocation3] sm:$0xff] %v2659
        %2738 = vst [vmem:[#allocation3 + $0x8] sm:$0xff] %v2664
        %2739 = vst [vmem:[#allocation3 + $0x10] sm:$0xff] %v2669
        %2740 = vst [vmem:[#allocation3 + $0x18] sm:$0xff] %v2674
        %2741 = vst [vmem:[#allocation3 + $0x20] sm:$0xff] %v2679
        %2742 = vst [vmem:[#allocation3 + $0x28] sm:$0xff] %v2684
        %2743 = vst [vmem:[#allocation3 + $0x30] sm:$0xff] %v2689
        %2744 = vst [vmem:[#allocation3 + $0x38] sm:$0xff] %v2694
        %2745 = vst [vmem:[#allocation3 + $0x40] sm:$0xff] %v2699
        %2746 = vst [vmem:[#allocation3 + $0x48] sm:$0xff] %v2704
        %2747 = vst [vmem:[#allocation3 + $0x50] sm:$0xff] %v2709
        %2748 = vst [vmem:[#allocation3 + $0x58] sm:$0xff] %v2714
        %2749 = vst [vmem:[#allocation3 + $0x60] sm:$0xff] %v2719
        %2750 = vst [vmem:[#allocation3 + $0x68] sm:$0xff] %v2724
        %2751 = vst [vmem:[#allocation3 + $0x70] sm:$0xff] %v2729
        %2752 = vst [vmem:[#allocation3 + $0x78] sm:$0xff] %v2734
        %s2753 = scalar_lea.vmem [#allocation2], 16
        %v2754 = vld [vmem:[%s2753] sm:$0xff]
        %v2755 = vld [vmem:[%s2753 + $0x8] sm:$0xff]
        %2756 = vmatprep.subr.mxu0 0.0
        %2757 = vmatpush1.msra.mxu0 0.0
        %2758 = vmatprep.subr.mxu0 0.0
        %2759 = vmatpush1.msra.mxu0 0.0
        %2760 = vmatprep.subr.mxu0 0.0
        %2761 = vmatpush1.msra.mxu0 0.0
        %2762 = vmatprep.subr.mxu0 0.0
        %2763 = vmatpush1.msra.mxu0 0.0
        %2764 = vmatprep.subr.mxu0 0.0
        %2765 = vmatpush1.msra.mxu0 0.0
        %2766 = vmatprep.subr.mxu0 0.0
        %2767 = vmatpush1.msra.mxu0 0.0
        %2768 = vmatprep.subr.mxu0 0.0
        %2769 = vmatpush1.msra.mxu0 0.0
        %2770 = vmatprep.subr.mxu0 0.0
        %2771 = vmatpush1.msra.mxu0 0.0
        %2772 = vmatprep.subr.mxu0 0.0
        %2773 = vmatpush1.msra.mxu0 0.0
        %2774 = vmatprep.subr.mxu0 0.0
        %2775 = vmatpush1.msra.mxu0 0.0
        %2776 = vmatprep.subr.mxu0 0.0
        %2777 = vmatpush1.msra.mxu0 0.0
        %2778 = vmatprep.subr.mxu0 0.0
        %2779 = vmatpush1.msra.mxu0 0.0
        %2780 = vmatprep.subr.mxu0 0.0
        %2781 = vmatpush1.msra.mxu0 0.0
        %2782 = vmatprep.subr.mxu0 0.0
        %2783 = vmatpush1.msra.mxu0 0.0
        %2784 = vmatprep.subr.mxu0 0.0
        %2785 = vmatpush1.msra.mxu0 %v2755
        %2786 = vmatprep.subr.mxu0 0.0
        %2787 = vmatpush1.msra.mxu0 %v2754
        %2788 = vmatprep.subr.mxu0 0.0
        %2789 = vmatpush2.msra.mxu0 0.0
        %2790 = vmatprep.subr.mxu0 0.0
        %2791 = vmatpush2.msra.mxu0 0.0
        %2792 = vmatprep.subr.mxu0 0.0
        %2793 = vmatpush2.msra.mxu0 0.0
        %2794 = vmatprep.subr.mxu0 0.0
        %2795 = vmatpush2.msra.mxu0 0.0
        %2796 = vmatprep.subr.mxu0 0.0
        %2797 = vmatpush2.msra.mxu0 0.0
        %2798 = vmatprep.subr.mxu0 0.0
        %2799 = vmatpush2.msra.mxu0 0.0
        %2800 = vmatprep.subr.mxu0 0.0
        %2801 = vmatpush2.msra.mxu0 0.0
        %2802 = vmatprep.subr.mxu0 0.0
        %2803 = vmatpush2.msra.mxu0 0.0
        %2804 = vmatprep.subr.mxu0 0.0
        %2805 = vmatpush2.msra.mxu0 0.0
        %2806 = vmatprep.subr.mxu0 0.0
        %2807 = vmatpush2.msra.mxu0 0.0
        %2808 = vmatprep.subr.mxu0 0.0
        %2809 = vmatpush2.msra.mxu0 0.0
        %2810 = vmatprep.subr.mxu0 0.0
        %2811 = vmatpush2.msra.mxu0 0.0
        %2812 = vmatprep.subr.mxu0 0.0
        %2813 = vmatpush2.msra.mxu0 0.0
        %2814 = vmatprep.subr.mxu0 0.0
        %2815 = vmatpush2.msra.mxu0 0.0
        %2816 = vmatprep.subr.mxu0 0.0
        %2817 = vmatpush2.msra.mxu0 0.0
        %2818 = vmatprep.subr.mxu0 0.0
        %2819 = vmatpush2.msra.mxu0 0.0
        %2820 = vmatprep.mubr.f32.mxu0 0.0
        %2821 = vmatmul.mubr.f32.gmra.mxu0 %v594
        %v2822 = vpop.f32.mrf.mxu0
        %v2823 = vadd.f32 0.0, %v2822
        %v2824 = vpop.f32.mrf.mxu0
        %2825 = vmatprep.mubr.f32.mxu0 0.0
        %2826 = vmatmul.mubr.f32.gmra.mxu0 %v597
        %v2827 = vpop.f32.mrf.mxu0
        %v2828 = vadd.f32 0.0, %v2827
        %v2829 = vpop.f32.mrf.mxu0
        %2830 = vmatprep.mubr.f32.mxu0 0.0
        %2831 = vmatmul.mubr.f32.gmra.mxu0 %v600
        %v2832 = vpop.f32.mrf.mxu0
        %v2833 = vadd.f32 0.0, %v2832
        %v2834 = vpop.f32.mrf.mxu0
        %2835 = vmatprep.mubr.f32.mxu0 0.0
        %2836 = vmatmul.mubr.f32.gmra.mxu0 %v603
        %v2837 = vpop.f32.mrf.mxu0
        %v2838 = vadd.f32 0.0, %v2837
        %v2839 = vpop.f32.mrf.mxu0
        %2840 = vmatprep.mubr.f32.mxu0 0.0
        %2841 = vmatmul.mubr.f32.gmra.mxu0 %v606
        %v2842 = vpop.f32.mrf.mxu0
        %v2843 = vadd.f32 0.0, %v2842
        %v2844 = vpop.f32.mrf.mxu0
        %2845 = vmatprep.mubr.f32.mxu0 0.0
        %2846 = vmatmul.mubr.f32.gmra.mxu0 %v609
        %v2847 = vpop.f32.mrf.mxu0
        %v2848 = vadd.f32 0.0, %v2847
        %v2849 = vpop.f32.mrf.mxu0
        %2850 = vmatprep.mubr.f32.mxu0 0.0
        %2851 = vmatmul.mubr.f32.gmra.mxu0 %v612
        %v2852 = vpop.f32.mrf.mxu0
        %v2853 = vadd.f32 0.0, %v2852
        %v2854 = vpop.f32.mrf.mxu0
        %2855 = vmatprep.mubr.f32.mxu0 0.0
        %2856 = vmatmul.mubr.f32.gmra.mxu0 %v615
        %v2857 = vpop.f32.mrf.mxu0
        %v2858 = vadd.f32 0.0, %v2857
        %v2859 = vpop.f32.mrf.mxu0
        %2860 = vmatprep.mubr.f32.mxu0 0.0
        %2861 = vmatmul.mubr.f32.gmra.mxu0 %v618
        %v2862 = vpop.f32.mrf.mxu0
        %v2863 = vadd.f32 0.0, %v2862
        %v2864 = vpop.f32.mrf.mxu0
        %2865 = vmatprep.mubr.f32.mxu0 0.0
        %2866 = vmatmul.mubr.f32.gmra.mxu0 %v621
        %v2867 = vpop.f32.mrf.mxu0
        %v2868 = vadd.f32 0.0, %v2867
        %v2869 = vpop.f32.mrf.mxu0
        %2870 = vmatprep.mubr.f32.mxu0 0.0
        %2871 = vmatmul.mubr.f32.gmra.mxu0 %v624
        %v2872 = vpop.f32.mrf.mxu0
        %v2873 = vadd.f32 0.0, %v2872
        %v2874 = vpop.f32.mrf.mxu0
        %2875 = vmatprep.mubr.f32.mxu0 0.0
        %2876 = vmatmul.mubr.f32.gmra.mxu0 %v627
        %v2877 = vpop.f32.mrf.mxu0
        %v2878 = vadd.f32 0.0, %v2877
        %v2879 = vpop.f32.mrf.mxu0
        %2880 = vmatprep.mubr.f32.mxu0 0.0
        %2881 = vmatmul.mubr.f32.gmra.mxu0 %v630
        %v2882 = vpop.f32.mrf.mxu0
        %v2883 = vadd.f32 0.0, %v2882
        %v2884 = vpop.f32.mrf.mxu0
        %2885 = vmatprep.mubr.f32.mxu0 0.0
        %2886 = vmatmul.mubr.f32.gmra.mxu0 %v633
        %v2887 = vpop.f32.mrf.mxu0
        %v2888 = vadd.f32 0.0, %v2887
        %v2889 = vpop.f32.mrf.mxu0
        %2890 = vmatprep.mubr.f32.mxu0 0.0
        %2891 = vmatmul.mubr.f32.gmra.mxu0 %v636
        %v2892 = vpop.f32.mrf.mxu0
        %v2893 = vadd.f32 0.0, %v2892
        %v2894 = vpop.f32.mrf.mxu0
        %2895 = vmatprep.mubr.f32.mxu0 0.0
        %2896 = vmatmul.mubr.f32.gmra.mxu0 %v639
        %v2897 = vpop.f32.mrf.mxu0
        %v2898 = vadd.f32 0.0, %v2897
        %v2899 = vpop.f32.mrf.mxu0
        %2900 = vdwg.mxu0
        %s2901 = scalar_lea.vmem [#allocation3], 128
        %2902 = vst [vmem:[%s2901] sm:$0xff] %v2823
        %2903 = vst [vmem:[%s2901 + $0x8] sm:$0xff] %v2828
        %2904 = vst [vmem:[%s2901 + $0x10] sm:$0xff] %v2833
        %2905 = vst [vmem:[%s2901 + $0x18] sm:$0xff] %v2838
        %2906 = vst [vmem:[%s2901 + $0x20] sm:$0xff] %v2843
        %2907 = vst [vmem:[%s2901 + $0x28] sm:$0xff] %v2848
        %2908 = vst [vmem:[%s2901 + $0x30] sm:$0xff] %v2853
        %2909 = vst [vmem:[%s2901 + $0x38] sm:$0xff] %v2858
        %2910 = vst [vmem:[%s2901 + $0x40] sm:$0xff] %v2863
        %2911 = vst [vmem:[%s2901 + $0x48] sm:$0xff] %v2868
        %2912 = vst [vmem:[%s2901 + $0x50] sm:$0xff] %v2873
        %2913 = vst [vmem:[%s2901 + $0x58] sm:$0xff] %v2878
        %2914 = vst [vmem:[%s2901 + $0x60] sm:$0xff] %v2883
        %2915 = vst [vmem:[%s2901 + $0x68] sm:$0xff] %v2888
        %2916 = vst [vmem:[%s2901 + $0x70] sm:$0xff] %v2893
        %2917 = vst [vmem:[%s2901 + $0x78] sm:$0xff] %v2898
        %v2918 = vmax.f32 %v2659, %v2823
        %v2919 = vmax.f32 %v2664, %v2828
        %v2920 = vmax.f32 %v2669, %v2833
        %v2921 = vmax.f32 %v2674, %v2838
        %v2922 = vmax.f32 %v2679, %v2843
        %v2923 = vmax.f32 %v2684, %v2848
        %v2924 = vmax.f32 %v2689, %v2853
        %v2925 = vmax.f32 %v2694, %v2858
        %v2926 = vmax.f32 %v2699, %v2863
        %v2927 = vmax.f32 %v2704, %v2868
        %v2928 = vmax.f32 %v2709, %v2873
        %v2929 = vmax.f32 %v2714, %v2878
        %v2930 = vmax.f32 %v2719, %v2883
        %v2931 = vmax.f32 %v2724, %v2888
        %v2932 = vmax.f32 %v2729, %v2893
        %v2933 = vmax.f32 %v2734, %v2898
        %v2934 = vsub.f32 %v2659, %v2918
        %v2935 = vsub.f32 %v2664, %v2919
        %v2936 = vsub.f32 %v2669, %v2920
        %v2937 = vsub.f32 %v2674, %v2921
        %v2938 = vsub.f32 %v2679, %v2922
        %v2939 = vsub.f32 %v2684, %v2923
        %v2940 = vsub.f32 %v2689, %v2924
        %v2941 = vsub.f32 %v2694, %v2925
        %v2942 = vsub.f32 %v2699, %v2926
        %v2943 = vsub.f32 %v2704, %v2927
        %v2944 = vsub.f32 %v2709, %v2928
        %v2945 = vsub.f32 %v2714, %v2929
        %v2946 = vsub.f32 %v2719, %v2930
        %v2947 = vsub.f32 %v2724, %v2931
        %v2948 = vsub.f32 %v2729, %v2932
        %v2949 = vsub.f32 %v2734, %v2933
        %v2950 = vmul.f32 %v2934, 1.442695
        %v2951 = vpow.pop %v2950
        %v2952 = vmul.f32 %v2935, 1.442695
        %v2953 = vpow.pop %v2952
        %v2954 = vmul.f32 %v2936, 1.442695
        %v2955 = vpow.pop %v2954
        %v2956 = vmul.f32 %v2937, 1.442695
        %v2957 = vpow.pop %v2956
        %v2958 = vmul.f32 %v2938, 1.442695
        %v2959 = vpow.pop %v2958
        %v2960 = vmul.f32 %v2939, 1.442695
        %v2961 = vpow.pop %v2960
        %v2962 = vmul.f32 %v2940, 1.442695
        %v2963 = vpow.pop %v2962
        %v2964 = vmul.f32 %v2941, 1.442695
        %v2965 = vpow.pop %v2964
        %v2966 = vmul.f32 %v2942, 1.442695
        %v2967 = vpow.pop %v2966
        %v2968 = vmul.f32 %v2943, 1.442695
        %v2969 = vpow.pop %v2968
        %v2970 = vmul.f32 %v2944, 1.442695
        %v2971 = vpow.pop %v2970
        %v2972 = vmul.f32 %v2945, 1.442695
        %v2973 = vpow.pop %v2972
        %v2974 = vmul.f32 %v2946, 1.442695
        %v2975 = vpow.pop %v2974
        %v2976 = vmul.f32 %v2947, 1.442695
        %v2977 = vpow.pop %v2976
        %v2978 = vmul.f32 %v2948, 1.442695
        %v2979 = vpow.pop %v2978
        %v2980 = vmul.f32 %v2949, 1.442695
        %v2981 = vpow.pop %v2980
        %v2982 = vsub.f32 %v2823, %v2918
        %v2983 = vsub.f32 %v2828, %v2919
        %v2984 = vsub.f32 %v2833, %v2920
        %v2985 = vsub.f32 %v2838, %v2921
        %v2986 = vsub.f32 %v2843, %v2922
        %v2987 = vsub.f32 %v2848, %v2923
        %v2988 = vsub.f32 %v2853, %v2924
        %v2989 = vsub.f32 %v2858, %v2925
        %v2990 = vsub.f32 %v2863, %v2926
        %v2991 = vsub.f32 %v2868, %v2927
        %v2992 = vsub.f32 %v2873, %v2928
        %v2993 = vsub.f32 %v2878, %v2929
        %v2994 = vsub.f32 %v2883, %v2930
        %v2995 = vsub.f32 %v2888, %v2931
        %v2996 = vsub.f32 %v2893, %v2932
        %v2997 = vsub.f32 %v2898, %v2933
        %v2998 = vmul.f32 %v2982, 1.442695
        %v2999 = vpow.pop %v2998
        %v3000 = vmul.f32 %v2983, 1.442695
        %v3001 = vpow.pop %v3000
        %v3002 = vmul.f32 %v2984, 1.442695
        %v3003 = vpow.pop %v3002
        %v3004 = vmul.f32 %v2985, 1.442695
        %v3005 = vpow.pop %v3004
        %v3006 = vmul.f32 %v2986, 1.442695
        %v3007 = vpow.pop %v3006
        %v3008 = vmul.f32 %v2987, 1.442695
        %v3009 = vpow.pop %v3008
        %v3010 = vmul.f32 %v2988, 1.442695
        %v3011 = vpow.pop %v3010
        %v3012 = vmul.f32 %v2989, 1.442695
        %v3013 = vpow.pop %v3012
        %v3014 = vmul.f32 %v2990, 1.442695
        %v3015 = vpow.pop %v3014
        %v3016 = vmul.f32 %v2991, 1.442695
        %v3017 = vpow.pop %v3016
        %v3018 = vmul.f32 %v2992, 1.442695
        %v3019 = vpow.pop %v3018
        %v3020 = vmul.f32 %v2993, 1.442695
        %v3021 = vpow.pop %v3020
        %v3022 = vmul.f32 %v2994, 1.442695
        %v3023 = vpow.pop %v3022
        %v3024 = vmul.f32 %v2995, 1.442695
        %v3025 = vpow.pop %v3024
        %v3026 = vmul.f32 %v2996, 1.442695
        %v3027 = vpow.pop %v3026
        %v3028 = vmul.f32 %v2997, 1.442695
        %v3029 = vpow.pop %v3028
        %v3030 = vadd.f32 %v2951, %v2999
        %v3031 = vadd.f32 %v2953, %v3001
        %v3032 = vadd.f32 %v2955, %v3003
        %v3033 = vadd.f32 %v2957, %v3005
        %v3034 = vadd.f32 %v2959, %v3007
        %v3035 = vadd.f32 %v2961, %v3009
        %v3036 = vadd.f32 %v2963, %v3011
        %v3037 = vadd.f32 %v2965, %v3013
        %v3038 = vadd.f32 %v2967, %v3015
        %v3039 = vadd.f32 %v2969, %v3017
        %v3040 = vadd.f32 %v2971, %v3019
        %v3041 = vadd.f32 %v2973, %v3021
        %v3042 = vadd.f32 %v2975, %v3023
        %v3043 = vadd.f32 %v2977, %v3025
        %v3044 = vadd.f32 %v2979, %v3027
        %v3045 = vadd.f32 %v2981, %v3029
        %s3046 = scalar_lea.vmem [#allocation2], 32
        %v3047 = vld [vmem:[%s3046] sm:$0xff]
        %v3048 = vld [vmem:[%s3046 + $0x8] sm:$0xff]
        %3049 = vmatprep.subr.mxu0 0.0
        %3050 = vmatpush1.msra.mxu0 0.0
        %3051 = vmatprep.subr.mxu0 0.0
        %3052 = vmatpush1.msra.mxu0 0.0
        %3053 = vmatprep.subr.mxu0 0.0
        %3054 = vmatpush1.msra.mxu0 0.0
        %3055 = vmatprep.subr.mxu0 0.0
        %3056 = vmatpush1.msra.mxu0 0.0
        %3057 = vmatprep.subr.mxu0 0.0
        %3058 = vmatpush1.msra.mxu0 0.0
        %3059 = vmatprep.subr.mxu0 0.0
        %3060 = vmatpush1.msra.mxu0 0.0
        %3061 = vmatprep.subr.mxu0 0.0
        %3062 = vmatpush1.msra.mxu0 0.0
        %3063 = vmatprep.subr.mxu0 0.0
        %3064 = vmatpush1.msra.mxu0 0.0
        %3065 = vmatprep.subr.mxu0 0.0
        %3066 = vmatpush1.msra.mxu0 0.0
        %3067 = vmatprep.subr.mxu0 0.0
        %3068 = vmatpush1.msra.mxu0 0.0
        %3069 = vmatprep.subr.mxu0 0.0
        %3070 = vmatpush1.msra.mxu0 0.0
        %3071 = vmatprep.subr.mxu0 0.0
        %3072 = vmatpush1.msra.mxu0 0.0
        %3073 = vmatprep.subr.mxu0 0.0
        %3074 = vmatpush1.msra.mxu0 0.0
        %3075 = vmatprep.subr.mxu0 0.0
        %3076 = vmatpush1.msra.mxu0 0.0
        %3077 = vmatprep.subr.mxu0 0.0
        %3078 = vmatpush1.msra.mxu0 %v3048
        %3079 = vmatprep.subr.mxu0 0.0
        %3080 = vmatpush1.msra.mxu0 %v3047
        %3081 = vmatprep.subr.mxu0 0.0
        %3082 = vmatpush2.msra.mxu0 0.0
        %3083 = vmatprep.subr.mxu0 0.0
        %3084 = vmatpush2.msra.mxu0 0.0
        %3085 = vmatprep.subr.mxu0 0.0
        %3086 = vmatpush2.msra.mxu0 0.0
        %3087 = vmatprep.subr.mxu0 0.0
        %3088 = vmatpush2.msra.mxu0 0.0
        %3089 = vmatprep.subr.mxu0 0.0
        %3090 = vmatpush2.msra.mxu0 0.0
        %3091 = vmatprep.subr.mxu0 0.0
        %3092 = vmatpush2.msra.mxu0 0.0
        %3093 = vmatprep.subr.mxu0 0.0
        %3094 = vmatpush2.msra.mxu0 0.0
        %3095 = vmatprep.subr.mxu0 0.0
        %3096 = vmatpush2.msra.mxu0 0.0
        %3097 = vmatprep.subr.mxu0 0.0
        %3098 = vmatpush2.msra.mxu0 0.0
        %3099 = vmatprep.subr.mxu0 0.0
        %3100 = vmatpush2.msra.mxu0 0.0
        %3101 = vmatprep.subr.mxu0 0.0
        %3102 = vmatpush2.msra.mxu0 0.0
        %3103 = vmatprep.subr.mxu0 0.0
        %3104 = vmatpush2.msra.mxu0 0.0
        %3105 = vmatprep.subr.mxu0 0.0
        %3106 = vmatpush2.msra.mxu0 0.0
        %3107 = vmatprep.subr.mxu0 0.0
        %3108 = vmatpush2.msra.mxu0 0.0
        %3109 = vmatprep.subr.mxu0 0.0
        %3110 = vmatpush2.msra.mxu0 0.0
        %3111 = vmatprep.subr.mxu0 0.0
        %3112 = vmatpush2.msra.mxu0 0.0
        %3113 = vmatprep.mubr.f32.mxu0 0.0
        %3114 = vmatmul.mubr.f32.gmra.mxu0 %v594
        %v3115 = vpop.f32.mrf.mxu0
        %v3116 = vadd.f32 0.0, %v3115
        %v3117 = vpop.f32.mrf.mxu0
        %3118 = vmatprep.mubr.f32.mxu0 0.0
        %3119 = vmatmul.mubr.f32.gmra.mxu0 %v597
        %v3120 = vpop.f32.mrf.mxu0
        %v3121 = vadd.f32 0.0, %v3120
        %v3122 = vpop.f32.mrf.mxu0
        %3123 = vmatprep.mubr.f32.mxu0 0.0
        %3124 = vmatmul.mubr.f32.gmra.mxu0 %v600
        %v3125 = vpop.f32.mrf.mxu0
        %v3126 = vadd.f32 0.0, %v3125
        %v3127 = vpop.f32.mrf.mxu0
        %3128 = vmatprep.mubr.f32.mxu0 0.0
        %3129 = vmatmul.mubr.f32.gmra.mxu0 %v603
        %v3130 = vpop.f32.mrf.mxu0
        %v3131 = vadd.f32 0.0, %v3130
        %v3132 = vpop.f32.mrf.mxu0
        %3133 = vmatprep.mubr.f32.mxu0 0.0
        %3134 = vmatmul.mubr.f32.gmra.mxu0 %v606
        %v3135 = vpop.f32.mrf.mxu0
        %v3136 = vadd.f32 0.0, %v3135
        %v3137 = vpop.f32.mrf.mxu0
        %3138 = vmatprep.mubr.f32.mxu0 0.0
        %3139 = vmatmul.mubr.f32.gmra.mxu0 %v609
        %v3140 = vpop.f32.mrf.mxu0
        %v3141 = vadd.f32 0.0, %v3140
        %v3142 = vpop.f32.mrf.mxu0
        %3143 = vmatprep.mubr.f32.mxu0 0.0
        %3144 = vmatmul.mubr.f32.gmra.mxu0 %v612
        %v3145 = vpop.f32.mrf.mxu0
        %v3146 = vadd.f32 0.0, %v3145
        %v3147 = vpop.f32.mrf.mxu0
        %3148 = vmatprep.mubr.f32.mxu0 0.0
        %3149 = vmatmul.mubr.f32.gmra.mxu0 %v615
        %v3150 = vpop.f32.mrf.mxu0
        %v3151 = vadd.f32 0.0, %v3150
        %v3152 = vpop.f32.mrf.mxu0
        %3153 = vmatprep.mubr.f32.mxu0 0.0
        %3154 = vmatmul.mubr.f32.gmra.mxu0 %v618
        %v3155 = vpop.f32.mrf.mxu0
        %v3156 = vadd.f32 0.0, %v3155
        %v3157 = vpop.f32.mrf.mxu0
        %3158 = vmatprep.mubr.f32.mxu0 0.0
        %3159 = vmatmul.mubr.f32.gmra.mxu0 %v621
        %v3160 = vpop.f32.mrf.mxu0
        %v3161 = vadd.f32 0.0, %v3160
        %v3162 = vpop.f32.mrf.mxu0
        %3163 = vmatprep.mubr.f32.mxu0 0.0
        %3164 = vmatmul.mubr.f32.gmra.mxu0 %v624
        %v3165 = vpop.f32.mrf.mxu0
        %v3166 = vadd.f32 0.0, %v3165
        %v3167 = vpop.f32.mrf.mxu0
        %3168 = vmatprep.mubr.f32.mxu0 0.0
        %3169 = vmatmul.mubr.f32.gmra.mxu0 %v627
        %v3170 = vpop.f32.mrf.mxu0
        %v3171 = vadd.f32 0.0, %v3170
        %v3172 = vpop.f32.mrf.mxu0
        %3173 = vmatprep.mubr.f32.mxu0 0.0
        %3174 = vmatmul.mubr.f32.gmra.mxu0 %v630
        %v3175 = vpop.f32.mrf.mxu0
        %v3176 = vadd.f32 0.0, %v3175
        %v3177 = vpop.f32.mrf.mxu0
        %3178 = vmatprep.mubr.f32.mxu0 0.0
        %3179 = vmatmul.mubr.f32.gmra.mxu0 %v633
        %v3180 = vpop.f32.mrf.mxu0
        %v3181 = vadd.f32 0.0, %v3180
        %v3182 = vpop.f32.mrf.mxu0
        %3183 = vmatprep.mubr.f32.mxu0 0.0
        %3184 = vmatmul.mubr.f32.gmra.mxu0 %v636
        %v3185 = vpop.f32.mrf.mxu0
        %v3186 = vadd.f32 0.0, %v3185
        %v3187 = vpop.f32.mrf.mxu0
        %3188 = vmatprep.mubr.f32.mxu0 0.0
        %3189 = vmatmul.mubr.f32.gmra.mxu0 %v639
        %v3190 = vpop.f32.mrf.mxu0
        %v3191 = vadd.f32 0.0, %v3190
        %v3192 = vpop.f32.mrf.mxu0
        %3193 = vdwg.mxu0
        %s3194 = scalar_lea.vmem [#allocation3], 256
        %3195 = vst [vmem:[%s3194] sm:$0xff] %v3116
        %3196 = vst [vmem:[%s3194 + $0x8] sm:$0xff] %v3121
        %3197 = vst [vmem:[%s3194 + $0x10] sm:$0xff] %v3126
        %3198 = vst [vmem:[%s3194 + $0x18] sm:$0xff] %v3131
        %3199 = vst [vmem:[%s3194 + $0x20] sm:$0xff] %v3136
        %3200 = vst [vmem:[%s3194 + $0x28] sm:$0xff] %v3141
        %3201 = vst [vmem:[%s3194 + $0x30] sm:$0xff] %v3146
        %3202 = vst [vmem:[%s3194 + $0x38] sm:$0xff] %v3151
        %3203 = vst [vmem:[%s3194 + $0x40] sm:$0xff] %v3156
        %3204 = vst [vmem:[%s3194 + $0x48] sm:$0xff] %v3161
        %3205 = vst [vmem:[%s3194 + $0x50] sm:$0xff] %v3166
        %3206 = vst [vmem:[%s3194 + $0x58] sm:$0xff] %v3171
        %3207 = vst [vmem:[%s3194 + $0x60] sm:$0xff] %v3176
        %3208 = vst [vmem:[%s3194 + $0x68] sm:$0xff] %v3181
        %3209 = vst [vmem:[%s3194 + $0x70] sm:$0xff] %v3186
        %3210 = vst [vmem:[%s3194 + $0x78] sm:$0xff] %v3191
        %v3211 = vmax.f32 %v2918, %v3116
        %v3212 = vmax.f32 %v2919, %v3121
        %v3213 = vmax.f32 %v2920, %v3126
        %v3214 = vmax.f32 %v2921, %v3131
        %v3215 = vmax.f32 %v2922, %v3136
        %v3216 = vmax.f32 %v2923, %v3141
        %v3217 = vmax.f32 %v2924, %v3146
        %v3218 = vmax.f32 %v2925, %v3151
        %v3219 = vmax.f32 %v2926, %v3156
        %v3220 = vmax.f32 %v2927, %v3161
        %v3221 = vmax.f32 %v2928, %v3166
        %v3222 = vmax.f32 %v2929, %v3171
        %v3223 = vmax.f32 %v2930, %v3176
        %v3224 = vmax.f32 %v2931, %v3181
        %v3225 = vmax.f32 %v2932, %v3186
        %v3226 = vmax.f32 %v2933, %v3191
        %v3227 = vsub.f32 %v2918, %v3211
        %v3228 = vsub.f32 %v2919, %v3212
        %v3229 = vsub.f32 %v2920, %v3213
        %v3230 = vsub.f32 %v2921, %v3214
        %v3231 = vsub.f32 %v2922, %v3215
        %v3232 = vsub.f32 %v2923, %v3216
        %v3233 = vsub.f32 %v2924, %v3217
        %v3234 = vsub.f32 %v2925, %v3218
        %v3235 = vsub.f32 %v2926, %v3219
        %v3236 = vsub.f32 %v2927, %v3220
        %v3237 = vsub.f32 %v2928, %v3221
        %v3238 = vsub.f32 %v2929, %v3222
        %v3239 = vsub.f32 %v2930, %v3223
        %v3240 = vsub.f32 %v2931, %v3224
        %v3241 = vsub.f32 %v2932, %v3225
        %v3242 = vsub.f32 %v2933, %v3226
        %v3243 = vmul.f32 %v3227, 1.442695
        %v3244 = vpow.pop %v3243
        %v3245 = vmul.f32 %v3228, 1.442695
        %v3246 = vpow.pop %v3245
        %v3247 = vmul.f32 %v3229, 1.442695
        %v3248 = vpow.pop %v3247
        %v3249 = vmul.f32 %v3230, 1.442695
        %v3250 = vpow.pop %v3249
        %v3251 = vmul.f32 %v3231, 1.442695
        %v3252 = vpow.pop %v3251
        %v3253 = vmul.f32 %v3232, 1.442695
        %v3254 = vpow.pop %v3253
        %v3255 = vmul.f32 %v3233, 1.442695
        %v3256 = vpow.pop %v3255
        %v3257 = vmul.f32 %v3234, 1.442695
        %v3258 = vpow.pop %v3257
        %v3259 = vmul.f32 %v3235, 1.442695
        %v3260 = vpow.pop %v3259
        %v3261 = vmul.f32 %v3236, 1.442695
        %v3262 = vpow.pop %v3261
        %v3263 = vmul.f32 %v3237, 1.442695
        %v3264 = vpow.pop %v3263
        %v3265 = vmul.f32 %v3238, 1.442695
        %v3266 = vpow.pop %v3265
        %v3267 = vmul.f32 %v3239, 1.442695
        %v3268 = vpow.pop %v3267
        %v3269 = vmul.f32 %v3240, 1.442695
        %v3270 = vpow.pop %v3269
        %v3271 = vmul.f32 %v3241, 1.442695
        %v3272 = vpow.pop %v3271
        %v3273 = vmul.f32 %v3242, 1.442695
        %v3274 = vpow.pop %v3273
        %v3275 = vmul.f32 %v3030, %v3244
        %v3276 = vmul.f32 %v3031, %v3246
        %v3277 = vmul.f32 %v3032, %v3248
        %v3278 = vmul.f32 %v3033, %v3250
        %v3279 = vmul.f32 %v3034, %v3252
        %v3280 = vmul.f32 %v3035, %v3254
        %v3281 = vmul.f32 %v3036, %v3256
        %v3282 = vmul.f32 %v3037, %v3258
        %v3283 = vmul.f32 %v3038, %v3260
        %v3284 = vmul.f32 %v3039, %v3262
        %v3285 = vmul.f32 %v3040, %v3264
        %v3286 = vmul.f32 %v3041, %v3266
        %v3287 = vmul.f32 %v3042, %v3268
        %v3288 = vmul.f32 %v3043, %v3270
        %v3289 = vmul.f32 %v3044, %v3272
        %v3290 = vmul.f32 %v3045, %v3274
        %v3291 = vsub.f32 %v3116, %v3211
        %v3292 = vsub.f32 %v3121, %v3212
        %v3293 = vsub.f32 %v3126, %v3213
        %v3294 = vsub.f32 %v3131, %v3214
        %v3295 = vsub.f32 %v3136, %v3215
        %v3296 = vsub.f32 %v3141, %v3216
        %v3297 = vsub.f32 %v3146, %v3217
        %v3298 = vsub.f32 %v3151, %v3218
        %v3299 = vsub.f32 %v3156, %v3219
        %v3300 = vsub.f32 %v3161, %v3220
        %v3301 = vsub.f32 %v3166, %v3221
        %v3302 = vsub.f32 %v3171, %v3222
        %v3303 = vsub.f32 %v3176, %v3223
        %v3304 = vsub.f32 %v3181, %v3224
        %v3305 = vsub.f32 %v3186, %v3225
        %v3306 = vsub.f32 %v3191, %v3226
        %v3307 = vmul.f32 %v3291, 1.442695
        %v3308 = vpow.pop %v3307
        %v3309 = vmul.f32 %v3292, 1.442695
        %v3310 = vpow.pop %v3309
        %v3311 = vmul.f32 %v3293, 1.442695
        %v3312 = vpow.pop %v3311
        %v3313 = vmul.f32 %v3294, 1.442695
        %v3314 = vpow.pop %v3313
        %v3315 = vmul.f32 %v3295, 1.442695
        %v3316 = vpow.pop %v3315
        %v3317 = vmul.f32 %v3296, 1.442695
        %v3318 = vpow.pop %v3317
        %v3319 = vmul.f32 %v3297, 1.442695
        %v3320 = vpow.pop %v3319
        %v3321 = vmul.f32 %v3298, 1.442695
        %v3322 = vpow.pop %v3321
        %v3323 = vmul.f32 %v3299, 1.442695
        %v3324 = vpow.pop %v3323
        %v3325 = vmul.f32 %v3300, 1.442695
        %v3326 = vpow.pop %v3325
        %v3327 = vmul.f32 %v3301, 1.442695
        %v3328 = vpow.pop %v3327
        %v3329 = vmul.f32 %v3302, 1.442695
        %v3330 = vpow.pop %v3329
        %v3331 = vmul.f32 %v3303, 1.442695
        %v3332 = vpow.pop %v3331
        %v3333 = vmul.f32 %v3304, 1.442695
        %v3334 = vpow.pop %v3333
        %v3335 = vmul.f32 %v3305, 1.442695
        %v3336 = vpow.pop %v3335
        %v3337 = vmul.f32 %v3306, 1.442695
        %v3338 = vpow.pop %v3337
        %v3339 = vadd.f32 %v3275, %v3308
        %v3340 = vadd.f32 %v3276, %v3310
        %v3341 = vadd.f32 %v3277, %v3312
        %v3342 = vadd.f32 %v3278, %v3314
        %v3343 = vadd.f32 %v3279, %v3316
        %v3344 = vadd.f32 %v3280, %v3318
        %v3345 = vadd.f32 %v3281, %v3320
        %v3346 = vadd.f32 %v3282, %v3322
        %v3347 = vadd.f32 %v3283, %v3324
        %v3348 = vadd.f32 %v3284, %v3326
        %v3349 = vadd.f32 %v3285, %v3328
        %v3350 = vadd.f32 %v3286, %v3330
        %v3351 = vadd.f32 %v3287, %v3332
        %v3352 = vadd.f32 %v3288, %v3334
        %v3353 = vadd.f32 %v3289, %v3336
        %v3354 = vadd.f32 %v3290, %v3338
        %s3355 = scalar_lea.vmem [#allocation2], 48
        %v3356 = vld [vmem:[%s3355] sm:$0xff]
        %v3357 = vld [vmem:[%s3355 + $0x8] sm:$0xff]
        %3358 = vmatprep.subr.mxu0 0.0
        %3359 = vmatpush1.msra.mxu0 0.0
        %3360 = vmatprep.subr.mxu0 0.0
        %3361 = vmatpush1.msra.mxu0 0.0
        %3362 = vmatprep.subr.mxu0 0.0
        %3363 = vmatpush1.msra.mxu0 0.0
        %3364 = vmatprep.subr.mxu0 0.0
        %3365 = vmatpush1.msra.mxu0 0.0
        %3366 = vmatprep.subr.mxu0 0.0
        %3367 = vmatpush1.msra.mxu0 0.0
        %3368 = vmatprep.subr.mxu0 0.0
        %3369 = vmatpush1.msra.mxu0 0.0
        %3370 = vmatprep.subr.mxu0 0.0
        %3371 = vmatpush1.msra.mxu0 0.0
        %3372 = vmatprep.subr.mxu0 0.0
        %3373 = vmatpush1.msra.mxu0 0.0
        %3374 = vmatprep.subr.mxu0 0.0
        %3375 = vmatpush1.msra.mxu0 0.0
        %3376 = vmatprep.subr.mxu0 0.0
        %3377 = vmatpush1.msra.mxu0 0.0
        %3378 = vmatprep.subr.mxu0 0.0
        %3379 = vmatpush1.msra.mxu0 0.0
        %3380 = vmatprep.subr.mxu0 0.0
        %3381 = vmatpush1.msra.mxu0 0.0
        %3382 = vmatprep.subr.mxu0 0.0
        %3383 = vmatpush1.msra.mxu0 0.0
        %3384 = vmatprep.subr.mxu0 0.0
        %3385 = vmatpush1.msra.mxu0 0.0
        %3386 = vmatprep.subr.mxu0 0.0
        %3387 = vmatpush1.msra.mxu0 %v3357
        %3388 = vmatprep.subr.mxu0 0.0
        %3389 = vmatpush1.msra.mxu0 %v3356
        %3390 = vmatprep.subr.mxu0 0.0
        %3391 = vmatpush2.msra.mxu0 0.0
        %3392 = vmatprep.subr.mxu0 0.0
        %3393 = vmatpush2.msra.mxu0 0.0
        %3394 = vmatprep.subr.mxu0 0.0
        %3395 = vmatpush2.msra.mxu0 0.0
        %3396 = vmatprep.subr.mxu0 0.0
        %3397 = vmatpush2.msra.mxu0 0.0
        %3398 = vmatprep.subr.mxu0 0.0
        %3399 = vmatpush2.msra.mxu0 0.0
        %3400 = vmatprep.subr.mxu0 0.0
        %3401 = vmatpush2.msra.mxu0 0.0
        %3402 = vmatprep.subr.mxu0 0.0
        %3403 = vmatpush2.msra.mxu0 0.0
        %3404 = vmatprep.subr.mxu0 0.0
        %3405 = vmatpush2.msra.mxu0 0.0
        %3406 = vmatprep.subr.mxu0 0.0
        %3407 = vmatpush2.msra.mxu0 0.0
        %3408 = vmatprep.subr.mxu0 0.0
        %3409 = vmatpush2.msra.mxu0 0.0
        %3410 = vmatprep.subr.mxu0 0.0
        %3411 = vmatpush2.msra.mxu0 0.0
        %3412 = vmatprep.subr.mxu0 0.0
        %3413 = vmatpush2.msra.mxu0 0.0
        %3414 = vmatprep.subr.mxu0 0.0
        %3415 = vmatpush2.msra.mxu0 0.0
        %3416 = vmatprep.subr.mxu0 0.0
        %3417 = vmatpush2.msra.mxu0 0.0
        %3418 = vmatprep.subr.mxu0 0.0
        %3419 = vmatpush2.msra.mxu0 0.0
        %3420 = vmatprep.subr.mxu0 0.0
        %3421 = vmatpush2.msra.mxu0 0.0
        %3422 = vmatprep.mubr.f32.mxu0 0.0
        %3423 = vmatmul.mubr.f32.gmra.mxu0 %v594
        %v3424 = vpop.f32.mrf.mxu0
        %v3425 = vadd.f32 0.0, %v3424
        %v3426 = vpop.f32.mrf.mxu0
        %3427 = vmatprep.mubr.f32.mxu0 0.0
        %3428 = vmatmul.mubr.f32.gmra.mxu0 %v597
        %v3429 = vpop.f32.mrf.mxu0
        %v3430 = vadd.f32 0.0, %v3429
        %v3431 = vpop.f32.mrf.mxu0
        %3432 = vmatprep.mubr.f32.mxu0 0.0
        %3433 = vmatmul.mubr.f32.gmra.mxu0 %v600
        %v3434 = vpop.f32.mrf.mxu0
        %v3435 = vadd.f32 0.0, %v3434
        %v3436 = vpop.f32.mrf.mxu0
        %3437 = vmatprep.mubr.f32.mxu0 0.0
        %3438 = vmatmul.mubr.f32.gmra.mxu0 %v603
        %v3439 = vpop.f32.mrf.mxu0
        %v3440 = vadd.f32 0.0, %v3439
        %v3441 = vpop.f32.mrf.mxu0
        %3442 = vmatprep.mubr.f32.mxu0 0.0
        %3443 = vmatmul.mubr.f32.gmra.mxu0 %v606
        %v3444 = vpop.f32.mrf.mxu0
        %v3445 = vadd.f32 0.0, %v3444
        %v3446 = vpop.f32.mrf.mxu0
        %3447 = vmatprep.mubr.f32.mxu0 0.0
        %3448 = vmatmul.mubr.f32.gmra.mxu0 %v609
        %v3449 = vpop.f32.mrf.mxu0
        %v3450 = vadd.f32 0.0, %v3449
        %v3451 = vpop.f32.mrf.mxu0
        %3452 = vmatprep.mubr.f32.mxu0 0.0
        %3453 = vmatmul.mubr.f32.gmra.mxu0 %v612
        %v3454 = vpop.f32.mrf.mxu0
        %v3455 = vadd.f32 0.0, %v3454
        %v3456 = vpop.f32.mrf.mxu0
        %3457 = vmatprep.mubr.f32.mxu0 0.0
        %3458 = vmatmul.mubr.f32.gmra.mxu0 %v615
        %v3459 = vpop.f32.mrf.mxu0
        %v3460 = vadd.f32 0.0, %v3459
        %v3461 = vpop.f32.mrf.mxu0
        %3462 = vmatprep.mubr.f32.mxu0 0.0
        %3463 = vmatmul.mubr.f32.gmra.mxu0 %v618
        %v3464 = vpop.f32.mrf.mxu0
        %v3465 = vadd.f32 0.0, %v3464
        %v3466 = vpop.f32.mrf.mxu0
        %3467 = vmatprep.mubr.f32.mxu0 0.0
        %3468 = vmatmul.mubr.f32.gmra.mxu0 %v621
        %v3469 = vpop.f32.mrf.mxu0
        %v3470 = vadd.f32 0.0, %v3469
        %v3471 = vpop.f32.mrf.mxu0
        %3472 = vmatprep.mubr.f32.mxu0 0.0
        %3473 = vmatmul.mubr.f32.gmra.mxu0 %v624
        %v3474 = vpop.f32.mrf.mxu0
        %v3475 = vadd.f32 0.0, %v3474
        %v3476 = vpop.f32.mrf.mxu0
        %3477 = vmatprep.mubr.f32.mxu0 0.0
        %3478 = vmatmul.mubr.f32.gmra.mxu0 %v627
        %v3479 = vpop.f32.mrf.mxu0
        %v3480 = vadd.f32 0.0, %v3479
        %v3481 = vpop.f32.mrf.mxu0
        %3482 = vmatprep.mubr.f32.mxu0 0.0
        %3483 = vmatmul.mubr.f32.gmra.mxu0 %v630
        %v3484 = vpop.f32.mrf.mxu0
        %v3485 = vadd.f32 0.0, %v3484
        %v3486 = vpop.f32.mrf.mxu0
        %3487 = vmatprep.mubr.f32.mxu0 0.0
        %3488 = vmatmul.mubr.f32.gmra.mxu0 %v633
        %v3489 = vpop.f32.mrf.mxu0
        %v3490 = vadd.f32 0.0, %v3489
        %v3491 = vpop.f32.mrf.mxu0
        %3492 = vmatprep.mubr.f32.mxu0 0.0
        %3493 = vmatmul.mubr.f32.gmra.mxu0 %v636
        %v3494 = vpop.f32.mrf.mxu0
        %v3495 = vadd.f32 0.0, %v3494
        %v3496 = vpop.f32.mrf.mxu0
        %3497 = vmatprep.mubr.f32.mxu0 0.0
        %3498 = vmatmul.mubr.f32.gmra.mxu0 %v639
        %v3499 = vpop.f32.mrf.mxu0
        %v3500 = vadd.f32 0.0, %v3499
        %v3501 = vpop.f32.mrf.mxu0
        %3502 = vdwg.mxu0
        %s3503 = scalar_lea.vmem [#allocation3], 384
        %3504 = vst [vmem:[%s3503] sm:$0xff] %v3425
        %3505 = vst [vmem:[%s3503 + $0x8] sm:$0xff] %v3430
        %3506 = vst [vmem:[%s3503 + $0x10] sm:$0xff] %v3435
        %3507 = vst [vmem:[%s3503 + $0x18] sm:$0xff] %v3440
        %3508 = vst [vmem:[%s3503 + $0x20] sm:$0xff] %v3445
        %3509 = vst [vmem:[%s3503 + $0x28] sm:$0xff] %v3450
        %3510 = vst [vmem:[%s3503 + $0x30] sm:$0xff] %v3455
        %3511 = vst [vmem:[%s3503 + $0x38] sm:$0xff] %v3460
        %3512 = vst [vmem:[%s3503 + $0x40] sm:$0xff] %v3465
        %3513 = vst [vmem:[%s3503 + $0x48] sm:$0xff] %v3470
        %3514 = vst [vmem:[%s3503 + $0x50] sm:$0xff] %v3475
        %3515 = vst [vmem:[%s3503 + $0x58] sm:$0xff] %v3480
        %3516 = vst [vmem:[%s3503 + $0x60] sm:$0xff] %v3485
        %3517 = vst [vmem:[%s3503 + $0x68] sm:$0xff] %v3490
        %3518 = vst [vmem:[%s3503 + $0x70] sm:$0xff] %v3495
        %3519 = vst [vmem:[%s3503 + $0x78] sm:$0xff] %v3500
        %v3520 = vmax.f32 %v3211, %v3425
        %v3521 = vmax.f32 %v3212, %v3430
        %v3522 = vmax.f32 %v3213, %v3435
        %v3523 = vmax.f32 %v3214, %v3440
        %v3524 = vmax.f32 %v3215, %v3445
        %v3525 = vmax.f32 %v3216, %v3450
        %v3526 = vmax.f32 %v3217, %v3455
        %v3527 = vmax.f32 %v3218, %v3460
        %v3528 = vmax.f32 %v3219, %v3465
        %v3529 = vmax.f32 %v3220, %v3470
        %v3530 = vmax.f32 %v3221, %v3475
        %v3531 = vmax.f32 %v3222, %v3480
        %v3532 = vmax.f32 %v3223, %v3485
        %v3533 = vmax.f32 %v3224, %v3490
        %v3534 = vmax.f32 %v3225, %v3495
        %v3535 = vmax.f32 %v3226, %v3500
        %v3536 = vsub.f32 %v3211, %v3520
        %v3537 = vsub.f32 %v3212, %v3521
        %v3538 = vsub.f32 %v3213, %v3522
        %v3539 = vsub.f32 %v3214, %v3523
        %v3540 = vsub.f32 %v3215, %v3524
        %v3541 = vsub.f32 %v3216, %v3525
        %v3542 = vsub.f32 %v3217, %v3526
        %v3543 = vsub.f32 %v3218, %v3527
        %v3544 = vsub.f32 %v3219, %v3528
        %v3545 = vsub.f32 %v3220, %v3529
        %v3546 = vsub.f32 %v3221, %v3530
        %v3547 = vsub.f32 %v3222, %v3531
        %v3548 = vsub.f32 %v3223, %v3532
        %v3549 = vsub.f32 %v3224, %v3533
        %v3550 = vsub.f32 %v3225, %v3534
        %v3551 = vsub.f32 %v3226, %v3535
        %v3552 = vmul.f32 %v3536, 1.442695
        %v3553 = vpow.pop %v3552
        %v3554 = vmul.f32 %v3537, 1.442695
        %v3555 = vpow.pop %v3554
        %v3556 = vmul.f32 %v3538, 1.442695
        %v3557 = vpow.pop %v3556
        %v3558 = vmul.f32 %v3539, 1.442695
        %v3559 = vpow.pop %v3558
        %v3560 = vmul.f32 %v3540, 1.442695
        %v3561 = vpow.pop %v3560
        %v3562 = vmul.f32 %v3541, 1.442695
        %v3563 = vpow.pop %v3562
        %v3564 = vmul.f32 %v3542, 1.442695
        %v3565 = vpow.pop %v3564
        %v3566 = vmul.f32 %v3543, 1.442695
        %v3567 = vpow.pop %v3566
        %v3568 = vmul.f32 %v3544, 1.442695
        %v3569 = vpow.pop %v3568
        %v3570 = vmul.f32 %v3545, 1.442695
        %v3571 = vpow.pop %v3570
        %v3572 = vmul.f32 %v3546, 1.442695
        %v3573 = vpow.pop %v3572
        %v3574 = vmul.f32 %v3547, 1.442695
        %v3575 = vpow.pop %v3574
        %v3576 = vmul.f32 %v3548, 1.442695
        %v3577 = vpow.pop %v3576
        %v3578 = vmul.f32 %v3549, 1.442695
        %v3579 = vpow.pop %v3578
        %v3580 = vmul.f32 %v3550, 1.442695
        %v3581 = vpow.pop %v3580
        %v3582 = vmul.f32 %v3551, 1.442695
        %v3583 = vpow.pop %v3582
        %v3584 = vmul.f32 %v3339, %v3553
        %v3585 = vmul.f32 %v3340, %v3555
        %v3586 = vmul.f32 %v3341, %v3557
        %v3587 = vmul.f32 %v3342, %v3559
        %v3588 = vmul.f32 %v3343, %v3561
        %v3589 = vmul.f32 %v3344, %v3563
        %v3590 = vmul.f32 %v3345, %v3565
        %v3591 = vmul.f32 %v3346, %v3567
        %v3592 = vmul.f32 %v3347, %v3569
        %v3593 = vmul.f32 %v3348, %v3571
        %v3594 = vmul.f32 %v3349, %v3573
        %v3595 = vmul.f32 %v3350, %v3575
        %v3596 = vmul.f32 %v3351, %v3577
        %v3597 = vmul.f32 %v3352, %v3579
        %v3598 = vmul.f32 %v3353, %v3581
        %v3599 = vmul.f32 %v3354, %v3583
        %v3600 = vsub.f32 %v3425, %v3520
        %v3601 = vsub.f32 %v3430, %v3521
        %v3602 = vsub.f32 %v3435, %v3522
        %v3603 = vsub.f32 %v3440, %v3523
        %v3604 = vsub.f32 %v3445, %v3524
        %v3605 = vsub.f32 %v3450, %v3525
        %v3606 = vsub.f32 %v3455, %v3526
        %v3607 = vsub.f32 %v3460, %v3527
        %v3608 = vsub.f32 %v3465, %v3528
        %v3609 = vsub.f32 %v3470, %v3529
        %v3610 = vsub.f32 %v3475, %v3530
        %v3611 = vsub.f32 %v3480, %v3531
        %v3612 = vsub.f32 %v3485, %v3532
        %v3613 = vsub.f32 %v3490, %v3533
        %v3614 = vsub.f32 %v3495, %v3534
        %v3615 = vsub.f32 %v3500, %v3535
        %v3616 = vmul.f32 %v3600, 1.442695
        %v3617 = vpow.pop %v3616
        %v3618 = vmul.f32 %v3601, 1.442695
        %v3619 = vpow.pop %v3618
        %v3620 = vmul.f32 %v3602, 1.442695
        %v3621 = vpow.pop %v3620
        %v3622 = vmul.f32 %v3603, 1.442695
        %v3623 = vpow.pop %v3622
        %v3624 = vmul.f32 %v3604, 1.442695
        %v3625 = vpow.pop %v3624
        %v3626 = vmul.f32 %v3605, 1.442695
        %v3627 = vpow.pop %v3626
        %v3628 = vmul.f32 %v3606, 1.442695
        %v3629 = vpow.pop %v3628
        %v3630 = vmul.f32 %v3607, 1.442695
        %v3631 = vpow.pop %v3630
        %v3632 = vmul.f32 %v3608, 1.442695
        %v3633 = vpow.pop %v3632
        %v3634 = vmul.f32 %v3609, 1.442695
        %v3635 = vpow.pop %v3634
        %v3636 = vmul.f32 %v3610, 1.442695
        %v3637 = vpow.pop %v3636
        %v3638 = vmul.f32 %v3611, 1.442695
        %v3639 = vpow.pop %v3638
        %v3640 = vmul.f32 %v3612, 1.442695
        %v3641 = vpow.pop %v3640
        %v3642 = vmul.f32 %v3613, 1.442695
        %v3643 = vpow.pop %v3642
        %v3644 = vmul.f32 %v3614, 1.442695
        %v3645 = vpow.pop %v3644
        %v3646 = vmul.f32 %v3615, 1.442695
        %v3647 = vpow.pop %v3646
        %v3648 = vadd.f32 %v3584, %v3617
        %v3649 = vadd.f32 %v3585, %v3619
        %v3650 = vadd.f32 %v3586, %v3621
        %v3651 = vadd.f32 %v3587, %v3623
        %v3652 = vadd.f32 %v3588, %v3625
        %v3653 = vadd.f32 %v3589, %v3627
        %v3654 = vadd.f32 %v3590, %v3629
        %v3655 = vadd.f32 %v3591, %v3631
        %v3656 = vadd.f32 %v3592, %v3633
        %v3657 = vadd.f32 %v3593, %v3635
        %v3658 = vadd.f32 %v3594, %v3637
        %v3659 = vadd.f32 %v3595, %v3639
        %v3660 = vadd.f32 %v3596, %v3641
        %v3661 = vadd.f32 %v3597, %v3643
        %v3662 = vadd.f32 %v3598, %v3645
        %v3663 = vadd.f32 %v3599, %v3647
        %v3664 = vlog2.pop %v3648
        %v3665 = vmul.f32 %v3664, 0.6931472
        %v3666 = vlog2.pop %v3649
        %v3667 = vmul.f32 %v3666, 0.6931472
        %v3668 = vlog2.pop %v3650
        %v3669 = vmul.f32 %v3668, 0.6931472
        %v3670 = vlog2.pop %v3651
        %v3671 = vmul.f32 %v3670, 0.6931472
        %v3672 = vlog2.pop %v3652
        %v3673 = vmul.f32 %v3672, 0.6931472
        %v3674 = vlog2.pop %v3653
        %v3675 = vmul.f32 %v3674, 0.6931472
        %v3676 = vlog2.pop %v3654
        %v3677 = vmul.f32 %v3676, 0.6931472
        %v3678 = vlog2.pop %v3655
        %v3679 = vmul.f32 %v3678, 0.6931472
        %v3680 = vlog2.pop %v3656
        %v3681 = vmul.f32 %v3680, 0.6931472
        %v3682 = vlog2.pop %v3657
        %v3683 = vmul.f32 %v3682, 0.6931472
        %v3684 = vlog2.pop %v3658
        %v3685 = vmul.f32 %v3684, 0.6931472
        %v3686 = vlog2.pop %v3659
        %v3687 = vmul.f32 %v3686, 0.6931472
        %v3688 = vlog2.pop %v3660
        %v3689 = vmul.f32 %v3688, 0.6931472
        %v3690 = vlog2.pop %v3661
        %v3691 = vmul.f32 %v3690, 0.6931472
        %v3692 = vlog2.pop %v3662
        %v3693 = vmul.f32 %v3692, 0.6931472
        %v3694 = vlog2.pop %v3663
        %v3695 = vmul.f32 %v3694, 0.6931472
        %v3696 = vadd.f32 %v3520, %v3665
        %v3697 = vadd.f32 %v3521, %v3667
        %v3698 = vadd.f32 %v3522, %v3669
        %v3699 = vadd.f32 %v3523, %v3671
        %v3700 = vadd.f32 %v3524, %v3673
        %v3701 = vadd.f32 %v3525, %v3675
        %v3702 = vadd.f32 %v3526, %v3677
        %v3703 = vadd.f32 %v3527, %v3679
        %v3704 = vadd.f32 %v3528, %v3681
        %v3705 = vadd.f32 %v3529, %v3683
        %v3706 = vadd.f32 %v3530, %v3685
        %v3707 = vadd.f32 %v3531, %v3687
        %v3708 = vadd.f32 %v3532, %v3689
        %v3709 = vadd.f32 %v3533, %v3691
        %v3710 = vadd.f32 %v3534, %v3693
        %v3711 = vadd.f32 %v3535, %v3695
        %v3712 = vld [vmem:[#allocation3] sm:$0xff]
        %v3713 = vld [vmem:[#allocation3 + $0x8] sm:$0xff]
        %v3714 = vld [vmem:[#allocation3 + $0x10] sm:$0xff]
        %v3715 = vld [vmem:[#allocation3 + $0x18] sm:$0xff]
        %v3716 = vld [vmem:[#allocation3 + $0x20] sm:$0xff]
        %v3717 = vld [vmem:[#allocation3 + $0x28] sm:$0xff]
        %v3718 = vld [vmem:[#allocation3 + $0x30] sm:$0xff]
        %v3719 = vld [vmem:[#allocation3 + $0x38] sm:$0xff]
        %v3720 = vld [vmem:[#allocation3 + $0x40] sm:$0xff]
        %v3721 = vld [vmem:[#allocation3 + $0x48] sm:$0xff]
        %v3722 = vld [vmem:[#allocation3 + $0x50] sm:$0xff]
        %v3723 = vld [vmem:[#allocation3 + $0x58] sm:$0xff]
        %v3724 = vld [vmem:[#allocation3 + $0x60] sm:$0xff]
        %v3725 = vld [vmem:[#allocation3 + $0x68] sm:$0xff]
        %v3726 = vld [vmem:[#allocation3 + $0x70] sm:$0xff]
        %v3727 = vld [vmem:[#allocation3 + $0x78] sm:$0xff]
        %v3728 = vsub.f32 %v3712, %v3696
        %v3729 = vsub.f32 %v3713, %v3697
        %v3730 = vsub.f32 %v3714, %v3698
        %v3731 = vsub.f32 %v3715, %v3699
        %v3732 = vsub.f32 %v3716, %v3700
        %v3733 = vsub.f32 %v3717, %v3701
        %v3734 = vsub.f32 %v3718, %v3702
        %v3735 = vsub.f32 %v3719, %v3703
        %v3736 = vsub.f32 %v3720, %v3704
        %v3737 = vsub.f32 %v3721, %v3705
        %v3738 = vsub.f32 %v3722, %v3706
        %v3739 = vsub.f32 %v3723, %v3707
        %v3740 = vsub.f32 %v3724, %v3708
        %v3741 = vsub.f32 %v3725, %v3709
        %v3742 = vsub.f32 %v3726, %v3710
        %v3743 = vsub.f32 %v3727, %v3711
        %3744 = vst [vmem:[%s193] sm:$0xff] %v3728
        %3745 = vst [vmem:[%s193 + $0x8] sm:$0xff] %v3729
        %3746 = vst [vmem:[%s193 + $0x10] sm:$0xff] %v3730
        %3747 = vst [vmem:[%s193 + $0x18] sm:$0xff] %v3731
        %3748 = vst [vmem:[%s193 + $0x20] sm:$0xff] %v3732
        %3749 = vst [vmem:[%s193 + $0x28] sm:$0xff] %v3733
        %3750 = vst [vmem:[%s193 + $0x30] sm:$0xff] %v3734
        %3751 = vst [vmem:[%s193 + $0x38] sm:$0xff] %v3735
        %3752 = vst [vmem:[%s193 + $0x40] sm:$0xff] %v3736
        %3753 = vst [vmem:[%s193 + $0x48] sm:$0xff] %v3737
        %3754 = vst [vmem:[%s193 + $0x50] sm:$0xff] %v3738
        %3755 = vst [vmem:[%s193 + $0x58] sm:$0xff] %v3739
        %3756 = vst [vmem:[%s193 + $0x60] sm:$0xff] %v3740
        %3757 = vst [vmem:[%s193 + $0x68] sm:$0xff] %v3741
        %3758 = vst [vmem:[%s193 + $0x70] sm:$0xff] %v3742
        %3759 = vst [vmem:[%s193 + $0x78] sm:$0xff] %v3743
        %v3760 = vld [vmem:[%s2901] sm:$0xff]
        %v3761 = vld [vmem:[%s2901 + $0x8] sm:$0xff]
        %v3762 = vld [vmem:[%s2901 + $0x10] sm:$0xff]
        %v3763 = vld [vmem:[%s2901 + $0x18] sm:$0xff]
        %v3764 = vld [vmem:[%s2901 + $0x20] sm:$0xff]
        %v3765 = vld [vmem:[%s2901 + $0x28] sm:$0xff]
        %v3766 = vld [vmem:[%s2901 + $0x30] sm:$0xff]
        %v3767 = vld [vmem:[%s2901 + $0x38] sm:$0xff]
        %v3768 = vld [vmem:[%s2901 + $0x40] sm:$0xff]
        %v3769 = vld [vmem:[%s2901 + $0x48] sm:$0xff]
        %v3770 = vld [vmem:[%s2901 + $0x50] sm:$0xff]
        %v3771 = vld [vmem:[%s2901 + $0x58] sm:$0xff]
        %v3772 = vld [vmem:[%s2901 + $0x60] sm:$0xff]
        %v3773 = vld [vmem:[%s2901 + $0x68] sm:$0xff]
        %v3774 = vld [vmem:[%s2901 + $0x70] sm:$0xff]
        %v3775 = vld [vmem:[%s2901 + $0x78] sm:$0xff]
        %v3776 = vsub.f32 %v3760, %v3696
        %v3777 = vsub.f32 %v3761, %v3697
        %v3778 = vsub.f32 %v3762, %v3698
        %v3779 = vsub.f32 %v3763, %v3699
        %v3780 = vsub.f32 %v3764, %v3700
        %v3781 = vsub.f32 %v3765, %v3701
        %v3782 = vsub.f32 %v3766, %v3702
        %v3783 = vsub.f32 %v3767, %v3703
        %v3784 = vsub.f32 %v3768, %v3704
        %v3785 = vsub.f32 %v3769, %v3705
        %v3786 = vsub.f32 %v3770, %v3706
        %v3787 = vsub.f32 %v3771, %v3707
        %v3788 = vsub.f32 %v3772, %v3708
        %v3789 = vsub.f32 %v3773, %v3709
        %v3790 = vsub.f32 %v3774, %v3710
        %v3791 = vsub.f32 %v3775, %v3711
        %s3792 = scalar_lea.vmem %s193, 128 [#allocation4]
        %3793 = vst [vmem:[%s3792] sm:$0xff] %v3776
        %3794 = vst [vmem:[%s3792 + $0x8] sm:$0xff] %v3777
        %3795 = vst [vmem:[%s3792 + $0x10] sm:$0xff] %v3778
        %3796 = vst [vmem:[%s3792 + $0x18] sm:$0xff] %v3779
        %3797 = vst [vmem:[%s3792 + $0x20] sm:$0xff] %v3780
        %3798 = vst [vmem:[%s3792 + $0x28] sm:$0xff] %v3781
        %3799 = vst [vmem:[%s3792 + $0x30] sm:$0xff] %v3782
        %3800 = vst [vmem:[%s3792 + $0x38] sm:$0xff] %v3783
        %3801 = vst [vmem:[%s3792 + $0x40] sm:$0xff] %v3784
        %3802 = vst [vmem:[%s3792 + $0x48] sm:$0xff] %v3785
        %3803 = vst [vmem:[%s3792 + $0x50] sm:$0xff] %v3786
        %3804 = vst [vmem:[%s3792 + $0x58] sm:$0xff] %v3787
        %3805 = vst [vmem:[%s3792 + $0x60] sm:$0xff] %v3788
        %3806 = vst [vmem:[%s3792 + $0x68] sm:$0xff] %v3789
        %3807 = vst [vmem:[%s3792 + $0x70] sm:$0xff] %v3790
        %3808 = vst [vmem:[%s3792 + $0x78] sm:$0xff] %v3791
        %v3809 = vld [vmem:[%s3194] sm:$0xff]
        %v3810 = vld [vmem:[%s3194 + $0x8] sm:$0xff]
        %v3811 = vld [vmem:[%s3194 + $0x10] sm:$0xff]
        %v3812 = vld [vmem:[%s3194 + $0x18] sm:$0xff]
        %v3813 = vld [vmem:[%s3194 + $0x20] sm:$0xff]
        %v3814 = vld [vmem:[%s3194 + $0x28] sm:$0xff]
        %v3815 = vld [vmem:[%s3194 + $0x30] sm:$0xff]
        %v3816 = vld [vmem:[%s3194 + $0x38] sm:$0xff]
        %v3817 = vld [vmem:[%s3194 + $0x40] sm:$0xff]
        %v3818 = vld [vmem:[%s3194 + $0x48] sm:$0xff]
        %v3819 = vld [vmem:[%s3194 + $0x50] sm:$0xff]
        %v3820 = vld [vmem:[%s3194 + $0x58] sm:$0xff]
        %v3821 = vld [vmem:[%s3194 + $0x60] sm:$0xff]
        %v3822 = vld [vmem:[%s3194 + $0x68] sm:$0xff]
        %v3823 = vld [vmem:[%s3194 + $0x70] sm:$0xff]
        %v3824 = vld [vmem:[%s3194 + $0x78] sm:$0xff]
        %v3825 = vsub.f32 %v3809, %v3696
        %v3826 = vsub.f32 %v3810, %v3697
        %v3827 = vsub.f32 %v3811, %v3698
        %v3828 = vsub.f32 %v3812, %v3699
        %v3829 = vsub.f32 %v3813, %v3700
        %v3830 = vsub.f32 %v3814, %v3701
        %v3831 = vsub.f32 %v3815, %v3702
        %v3832 = vsub.f32 %v3816, %v3703
        %v3833 = vsub.f32 %v3817, %v3704
        %v3834 = vsub.f32 %v3818, %v3705
        %v3835 = vsub.f32 %v3819, %v3706
        %v3836 = vsub.f32 %v3820, %v3707
        %v3837 = vsub.f32 %v3821, %v3708
        %v3838 = vsub.f32 %v3822, %v3709
        %v3839 = vsub.f32 %v3823, %v3710
        %v3840 = vsub.f32 %v3824, %v3711
        %s3841 = scalar_lea.vmem %s193, 256 [#allocation4]
        %3842 = vst [vmem:[%s3841] sm:$0xff] %v3825
        %3843 = vst [vmem:[%s3841 + $0x8] sm:$0xff] %v3826
        %3844 = vst [vmem:[%s3841 + $0x10] sm:$0xff] %v3827
        %3845 = vst [vmem:[%s3841 + $0x18] sm:$0xff] %v3828
        %3846 = vst [vmem:[%s3841 + $0x20] sm:$0xff] %v3829
        %3847 = vst [vmem:[%s3841 + $0x28] sm:$0xff] %v3830
        %3848 = vst [vmem:[%s3841 + $0x30] sm:$0xff] %v3831
        %3849 = vst [vmem:[%s3841 + $0x38] sm:$0xff] %v3832
        %3850 = vst [vmem:[%s3841 + $0x40] sm:$0xff] %v3833
        %3851 = vst [vmem:[%s3841 + $0x48] sm:$0xff] %v3834
        %3852 = vst [vmem:[%s3841 + $0x50] sm:$0xff] %v3835
        %3853 = vst [vmem:[%s3841 + $0x58] sm:$0xff] %v3836
        %3854 = vst [vmem:[%s3841 + $0x60] sm:$0xff] %v3837
        %3855 = vst [vmem:[%s3841 + $0x68] sm:$0xff] %v3838
        %3856 = vst [vmem:[%s3841 + $0x70] sm:$0xff] %v3839
        %3857 = vst [vmem:[%s3841 + $0x78] sm:$0xff] %v3840
        %v3858 = vld [vmem:[%s3503] sm:$0xff]
        %v3859 = vld [vmem:[%s3503 + $0x8] sm:$0xff]
        %v3860 = vld [vmem:[%s3503 + $0x10] sm:$0xff]
        %v3861 = vld [vmem:[%s3503 + $0x18] sm:$0xff]
        %v3862 = vld [vmem:[%s3503 + $0x20] sm:$0xff]
        %v3863 = vld [vmem:[%s3503 + $0x28] sm:$0xff]
        %v3864 = vld [vmem:[%s3503 + $0x30] sm:$0xff]
        %v3865 = vld [vmem:[%s3503 + $0x38] sm:$0xff]
        %v3866 = vld [vmem:[%s3503 + $0x40] sm:$0xff]
        %v3867 = vld [vmem:[%s3503 + $0x48] sm:$0xff]
        %v3868 = vld [vmem:[%s3503 + $0x50] sm:$0xff]
        %v3869 = vld [vmem:[%s3503 + $0x58] sm:$0xff]
        %v3870 = vld [vmem:[%s3503 + $0x60] sm:$0xff]
        %v3871 = vld [vmem:[%s3503 + $0x68] sm:$0xff]
        %v3872 = vld [vmem:[%s3503 + $0x70] sm:$0xff]
        %v3873 = vld [vmem:[%s3503 + $0x78] sm:$0xff]
        %v3874 = vsub.f32 %v3858, %v3696
        %v3875 = vsub.f32 %v3859, %v3697
        %v3876 = vsub.f32 %v3860, %v3698
        %v3877 = vsub.f32 %v3861, %v3699
        %v3878 = vsub.f32 %v3862, %v3700
        %v3879 = vsub.f32 %v3863, %v3701
        %v3880 = vsub.f32 %v3864, %v3702
        %v3881 = vsub.f32 %v3865, %v3703
        %v3882 = vsub.f32 %v3866, %v3704
        %v3883 = vsub.f32 %v3867, %v3705
        %v3884 = vsub.f32 %v3868, %v3706
        %v3885 = vsub.f32 %v3869, %v3707
        %v3886 = vsub.f32 %v3870, %v3708
        %v3887 = vsub.f32 %v3871, %v3709
        %v3888 = vsub.f32 %v3872, %v3710
        %v3889 = vsub.f32 %v3873, %v3711
        %s3890 = scalar_lea.vmem %s193, 384 [#allocation4]
        %3891 = vst [vmem:[%s3890] sm:$0xff] %v3874
        %3892 = vst [vmem:[%s3890 + $0x8] sm:$0xff] %v3875
        %3893 = vst [vmem:[%s3890 + $0x10] sm:$0xff] %v3876
        %3894 = vst [vmem:[%s3890 + $0x18] sm:$0xff] %v3877
        %3895 = vst [vmem:[%s3890 + $0x20] sm:$0xff] %v3878
        %3896 = vst [vmem:[%s3890 + $0x28] sm:$0xff] %v3879
        %3897 = vst [vmem:[%s3890 + $0x30] sm:$0xff] %v3880
        %3898 = vst [vmem:[%s3890 + $0x38] sm:$0xff] %v3881
        %3899 = vst [vmem:[%s3890 + $0x40] sm:$0xff] %v3882
        %3900 = vst [vmem:[%s3890 + $0x48] sm:$0xff] %v3883
        %3901 = vst [vmem:[%s3890 + $0x50] sm:$0xff] %v3884
        %3902 = vst [vmem:[%s3890 + $0x58] sm:$0xff] %v3885
        %3903 = vst [vmem:[%s3890 + $0x60] sm:$0xff] %v3886
        %3904 = vst [vmem:[%s3890 + $0x68] sm:$0xff] %v3887
        %3905 = vst [vmem:[%s3890 + $0x70] sm:$0xff] %v3888
        %3906 = vst [vmem:[%s3890 + $0x78] sm:$0xff] %v3889
        %s3907 = scalar_lea.vmem %s193, 512 [#allocation4]
        %3908 = vst [vmem:[%s3907] sm:$0xff] %v2574
        %3909 = vst [vmem:[%s3907 + $0x8] sm:$0xff] %v2575
        %3910 = vst [vmem:[%s3907 + $0x10] sm:$0xff] %v2576
        %3911 = vst [vmem:[%s3907 + $0x18] sm:$0xff] %v2577
        %3912 = vst [vmem:[%s3907 + $0x20] sm:$0xff] %v2578
        %3913 = vst [vmem:[%s3907 + $0x28] sm:$0xff] %v2579
        %3914 = vst [vmem:[%s3907 + $0x30] sm:$0xff] %v2580
        %3915 = vst [vmem:[%s3907 + $0x38] sm:$0xff] %v2581
        %3916 = vst [vmem:[%s3907 + $0x40] sm:$0xff] %v2582
        %3917 = vst [vmem:[%s3907 + $0x48] sm:$0xff] %v2583
        %3918 = vst [vmem:[%s3907 + $0x50] sm:$0xff] %v2584
        %3919 = vst [vmem:[%s3907 + $0x58] sm:$0xff] %v2585
        %3920 = vst [vmem:[%s3907 + $0x60] sm:$0xff] %v2586
        %3921 = vst [vmem:[%s3907 + $0x68] sm:$0xff] %v2587
        %3922 = vst [vmem:[%s3907 + $0x70] sm:$0xff] %v2588
        %3923 = vst [vmem:[%s3907 + $0x78] sm:$0xff] %v2589
        %s3924 = scalar_lea.vmem %s193, 640 [#allocation4]
        %3925 = vst [vmem:[%s3924] sm:$0xff] %v2410
        %3926 = vst [vmem:[%s3924 + $0x8] sm:$0xff] %v2411
        %3927 = vst [vmem:[%s3924 + $0x10] sm:$0xff] %v2412
        %3928 = vst [vmem:[%s3924 + $0x18] sm:$0xff] %v2413
        %3929 = vst [vmem:[%s3924 + $0x20] sm:$0xff] %v2414
        %3930 = vst [vmem:[%s3924 + $0x28] sm:$0xff] %v2415
        %3931 = vst [vmem:[%s3924 + $0x30] sm:$0xff] %v2416
        %3932 = vst [vmem:[%s3924 + $0x38] sm:$0xff] %v2417
        %3933 = vst [vmem:[%s3924 + $0x40] sm:$0xff] %v2418
        %3934 = vst [vmem:[%s3924 + $0x48] sm:$0xff] %v2419
        %3935 = vst [vmem:[%s3924 + $0x50] sm:$0xff] %v2420
        %3936 = vst [vmem:[%s3924 + $0x58] sm:$0xff] %v2421
        %3937 = vst [vmem:[%s3924 + $0x60] sm:$0xff] %v2422
        %3938 = vst [vmem:[%s3924 + $0x68] sm:$0xff] %v2423
        %3939 = vst [vmem:[%s3924 + $0x70] sm:$0xff] %v2424
        %3940 = vst [vmem:[%s3924 + $0x78] sm:$0xff] %v2425
        %s3941 = sand.u32 %s112, 1
        %s3942 = scalar_lea.sflag [#allocation5], %s3941
        %s3943 = sand.u32 %s112, 1
        %s3944 = smul.addr %s3943, 768
        %s3945 = scalar_lea.vmem [#allocation4], %s3944
        // Predicated region
        $region37: #{drn_multifield_max_forward.3} parent=31 // pred_check
          %p3946 = pneg %p122
        $region38: #{drn_multifield_max_forward.3} parent=31 // pred_check_branch
          %3948 = sbr.rel (%p3946) target = $region40
        $region39: #{drn_multifield_max_forward.3} parent=31 // pred_region
          %s3949 = smul.u32 16, %s22
          %s3951 = ssub.s32 12288, 12288
          %3952 = vsyncadd %s3942, %s3951
          %s3953 = smul.addr %s21, 96
          %s3954 = sadd.s32 %s3949, %s3953
          %s3955 = smul.addr %s3954, 128
          %s3956 = scalar_lea.hbm %s3, %s3955
          %s3957 = sshll.u32 %s3945, 4
          %s3958 = int_to_ptr.vmem [resolvable:$true] %s3957
          %3963 = dma.vmem_to_hbm [thread:$0]  %s3958, 12288, %s3956, %s3942, 128, 128, 8
        $region40: #{drn_multifield_max_forward.3} parent=31 // pred_fallthru
          _
      $region32: #{drn_multifield_max_forward.3} parent=5 // pred_fallthru
        _
      %p3964 = scmp.le.s32.totalorder 2, %s12
      // Predicated region
      $region41: #{drn_multifield_max_forward.3} parent=5 // pred_check
        %p3965 = pneg %p3964
      $region42: #{drn_multifield_max_forward.3} parent=5 // pred_check_branch
        %3967 = sbr.rel (%p3965) target = $region44
      $region43: #{drn_multifield_max_forward.3} parent=5 // pred_region
        %s3968 = ssub.s32 %s12, 2
        // Predicated region
        $region45: #{drn_multifield_max_forward.3} parent=43 // pred_check
          %p3969 = pneg %p128
        $region46: #{drn_multifield_max_forward.3} parent=43 // pred_check_branch
          %3971 = sbr.rel (%p3969) target = $region48
        $region47: #{drn_multifield_max_forward.3} parent=43 // pred_region
          %s3972 = sand.u32 %s113, 1
          %s3973 = scalar_lea.sflag [#allocation5], %s3972
          %s3974 = sand.u32 %s113, 1
          %s3975 = smul.addr %s3974, 768
          %s3976 = scalar_lea.vmem [#allocation4], %s3975
          %3977 = dma.done %s3973, 12288
        $region48: #{drn_multifield_max_forward.3} parent=43 // pred_fallthru
          _
      $region44: #{drn_multifield_max_forward.3} parent=5 // pred_fallthru
        _
    $region6: #{drn_multifield_max_forward.3} parent=1 // loop_footer
      %s16 = sadd.s32 1, %s12
    $region7: #{drn_multifield_max_forward.3} parent=1 // loop_footer_branch
      %11 = sbr.rel target = $region3
    $region8: #{drn_multifield_max_forward.3} parent=1 // loop_exit
      _
    %3978 = vsyncpa [#allocation5], 1
    %s3979 = scalar_lea.sflag [#allocation5], 1
    %3980 = vsyncpa %s3979, 1

</llo_original>
